<compile_context>
chip_gen: v7x
topology: tpu7x:2x2x1
jax: 0.10.0
libtpu: 0.0.40
codegen_flags: <defaults>
</compile_context>

<pallas_src>
import functools

import jax
import jax.numpy as jnp
from jax.experimental import pallas as pl
from jax.experimental.pallas import tpu as pltpu


# ------------------------------- kernel ---------------------------------------

def evcf_kernel(x_ref,
                xin_w, xin_b,          # (D, 4H) bf16, (1, 4H) f32
                qz2h_w, qz2h_b,        # (H, 2Z2) bf16, (1, 2Z2) f32
                z2_w, pz1_b,           # (2Z2, 6H) bf16 (rows Z2: zero), (1, 2H) f32
                z1h_w, z1h_b,          # (2H, 4Z1) bf16 block-diag, (1, 4Z1) f32
                z1_w, px_b,            # (4Z1, 2H) bf16 (rows Z1: zero), (1, 2H) f32
                pxm_w, pxm_b,          # (H, D) bf16, (1, D) f32
                xmean_ref, packed_ref,
                *, H, Z1, Z2, pad):
    dot = functools.partial(jnp.dot, preferred_element_type=jnp.float32)
    bf16 = jnp.bfloat16

    x = x_ref[...].astype(jnp.float32)
    bt = x.shape[0]

    # --- encode: F.normalize(x, dim=1) via rsqrt (EUP slot) -------------------
    sumsq = jnp.sum(x * x, axis=1, keepdims=True)
    inv = jax.lax.rsqrt(jnp.maximum(sumsq, 1e-24))  # == 1/max(||x||, 1e-12)
    xn_bf = (x * inv).astype(bf16)

    # --- fused q_z2 gated layer + q_z1 x-part: xn @ (D, 4H) -------------------
    # layout: [qz2 tanh | qz2 gate | qz1_x tanh | qz1_x gate]
    big = dot(xn_bf, xin_w[...]) + xin_b[...]                       # (bt, 4H) f32
    h2 = jnp.tanh(big[:, :H]) * jax.nn.sigmoid(big[:, H:2 * H])     # (bt, H)
    qz1x_pre = big[:, 2 * H:4 * H]                                  # 128-aligned

    # --- q_z2 mean/logvar head (fused [mean | logvar]) ------------------------
    z2_head = dot(h2.astype(bf16), qz2h_w[...]) + qz2h_b[...]       # (bt, 2Z2)
    # reparam (eval) -> mean; downstream matmul uses the full head with zero
    # weight rows on the logvar lanes (no 32-lane slice on the critical chain)
    z2_bf = z2_head.astype(bf16)

    # --- fused z2 consumers: [q_z1 z2 t|g | p_z1 t|g | p_x z2 t|g] ------------
    z2_big = dot(z2_bf, z2_w[...])                                  # (bt, 6H) f32

    qz1_pre = qz1x_pre + z2_big[:, :2 * H]                          # (bt, 2H)
    pz1_pre = z2_big[:, 2 * H:4 * H] + pz1_b[...]                   # (bt, 2H)
    h1 = jnp.tanh(qz1_pre[:, :H]) * jax.nn.sigmoid(qz1_pre[:, H:2 * H])
    hp = jnp.tanh(pz1_pre[:, :H]) * jax.nn.sigmoid(pz1_pre[:, H:2 * H])
    h1hp = jnp.concatenate([h1, hp], axis=1)                        # (bt, 2H)

    # --- fused block-diagonal Z1 heads: [z1m | z1lv | z1pm | z1plv] -----------
    z1_heads = dot(h1hp.astype(bf16), z1h_w[...]) + z1h_b[...]      # (bt, 4Z1)

    # --- p_x joint gated layer on cat(z1, z2) ----------------------------------
    # z1_w has zero rows everywhere except the z1_mean lanes -> feed full head.
    px_pre = dot(z1_heads.astype(bf16), z1_w[...]) + px_b[...] + z2_big[:, 4 * H:6 * H]
    hx = jnp.tanh(px_pre[:, :H]) * jax.nn.sigmoid(px_pre[:, H:2 * H])
    x_mean = dot(hx.astype(bf16), pxm_w[...]) + pxm_b[...]          # (bt, D)

    # --- outputs ---------------------------------------------------------------
    xmean_ref[...] = x_mean

    # Masked Hardtanh on the logvar lanes (no slice + re-concat per head).
    lane2 = jax.lax.broadcasted_iota(jnp.int32, z2_head.shape, 1)
    z2_out = jnp.where(lane2 < Z2, z2_head, jnp.clip(z2_head, -12.0, 4.0))
    lane1 = jax.lax.broadcasted_iota(jnp.int32, z1_heads.shape, 1)
    is_lv = ((lane1 >= Z1) & (lane1 < 2 * Z1)) | (lane1 >= 3 * Z1)
    z1_out = jnp.where(is_lv, jnp.clip(z1_heads, -12.0, 4.0), z1_heads)

    pieces = [z2_out, z1_out]
    if pad > 0:
        pieces.append(jnp.zeros((bt, pad), jnp.float32))
    packed_ref[...] = jnp.concatenate(pieces, axis=1)               # lane-dense


# --------------------------- weight fusion (host) ------------------------------

FUSED_ORDER = [
    "xin_w", "xin_b",
    "qz2h_w", "qz2h_b",
    "z2_w", "pz1_b",
    "z1h_w", "z1h_b",
    "z1_w", "px_b",
    "pxm_w", "pxm_b",
]


def prepare_fused_params(p):
    """Concatenate gate/value and mean/logvar weights into lane-dense fused
    weights, build the block-diagonal Z1-head weight and zero-row-padded
    consumer weights; cast matmul operands to bf16, keep biases f32."""
    bf = jnp.bfloat16
    cat = lambda xs: jnp.concatenate(xs, axis=1)
    H = p["qz2_b1"].shape[1]
    Z2 = p["qz2m_b"].shape[1]
    Z1 = p["qz1m_b"].shape[1]
    f = {}
    # xn consumers: [qz2 tanh | qz2 gate | qz1_x tanh | qz1_x gate]   (D, 4H)
    f["xin_w"] = cat([p["qz2_w1"], p["qz2_wg"], p["qz1_wx1"], p["qz1_wxg"]]).astype(bf)
    f["xin_b"] = cat([p["qz2_b1"], p["qz2_bg"], p["qz1_b1"], p["qz1_bg"]])
    # q_z2 head: [mean | logvar]
    f["qz2h_w"] = cat([p["qz2m_w"], p["qz2l_w"]]).astype(bf)
    f["qz2h_b"] = cat([p["qz2m_b"], p["qz2l_b"]])
    # z2 consumers, rows padded to 2*Z2 (zero rows under the z2 logvar lanes):
    # columns [qz1_z2 t | qz1_z2 g | pz1 t | pz1 g | px_z2 t | px_z2 g]
    z2w_top = cat([p["qz1_wz1"], p["qz1_wzg"],
                   p["pz1_w1"], p["pz1_wg"],
                   p["px_w1b"], p["px_wgb"]])                      # (Z2, 6H)
    f["z2_w"] = jnp.concatenate(
        [z2w_top, jnp.zeros((Z2, 6 * H), z2w_top.dtype)], axis=0).astype(bf)
    f["pz1_b"] = cat([p["pz1_b1"], p["pz1_bg"]])
    # fused block-diagonal Z1 heads: [h1 | hp] (2H) -> [z1m | z1lv | z1pm | z1plv]
    qhead = cat([p["qz1m_w"], p["qz1l_w"]])                        # (H, 2Z1)
    phead = cat([p["pz1m_w"], p["pz1l_w"]])                        # (H, 2Z1)
    zblk = jnp.zeros_like(qhead)
    f["z1h_w"] = jnp.concatenate(
        [jnp.concatenate([qhead, zblk], axis=1),
         jnp.concatenate([zblk, phead], axis=1)], axis=0).astype(bf)  # (2H, 4Z1)
    f["z1h_b"] = cat([p["qz1m_b"], p["qz1l_b"], p["pz1m_b"], p["pz1l_b"]])
    # z1 consumer (p_x), rows padded to 4*Z1 (only z1_mean lanes contribute)
    z1w_top = cat([p["px_w1a"], p["px_wga"]])                      # (Z1, 2H)
    f["z1_w"] = jnp.concatenate(
        [z1w_top, jnp.zeros((3 * Z1, 2 * H), z1w_top.dtype)], axis=0).astype(bf)
    f["px_b"] = cat([p["px_b1"], p["px_bg"]])
    # p_x_mean (activation=None -> plain Linear)
    f["pxm_w"] = p["pxm_w"].astype(bf)
    f["pxm_b"] = p["pxm_b"]
    return f


# -------------------------------- wrapper --------------------------------------

def evcf_forward(x, params, *, batch_tile=None):
    """Fused EVCF forward.  Returns the same 10-tuple as the PyTorch forward()."""
    B, D = x.shape
    H = params["qz2_b1"].shape[1]
    Z2 = params["qz2m_b"].shape[1]
    Z1 = params["qz1m_b"].shape[1]

    fused = prepare_fused_params(params)
    weights = [fused[k] for k in FUSED_ORDER]

    S = 2 * Z2 + 4 * Z1                       # packed small-output width (192)
    S_pad = pl.cdiv(S, 128) * 128             # lane-dense slab
    pad = S_pad - S

    if batch_tile is None:
        if B <= 8:
            batch_tile = B                    # full-dim block (sublane rule ok)
        else:
            # At most 2 grid steps: one max tile per v7x TensorCore; on
            # single-TC v5e/v6e the second step is ~0.35us of overhead.
            batch_tile = min(B, ((pl.cdiv(B, 2) + 7) // 8) * 8)
            batch_tile = min(batch_tile, 1024)   # keep activation tiles VMEM-safe
    grid = (pl.cdiv(B, batch_tile),)

    def batch_spec(dim):
        return pl.BlockSpec((batch_tile, dim), lambda i: (i, 0))

    def weight_spec(w):
        # whole (fused) weight resident in VMEM, constant index -> loaded once
        return pl.BlockSpec(w.shape, lambda i: (0, 0))

    kernel = functools.partial(evcf_kernel, H=H, Z1=Z1, Z2=Z2, pad=pad)

    # VMEM budget from the actual working set (weights + double-buffered tiles),
    # capped at v7x's 64 MiB physical VMEM.
    weight_bytes = int(sum(int(w.size) * w.dtype.itemsize for w in weights))
    tile_bytes = batch_tile * (2 * D + S_pad) * 4
    vmem_limit = int(min(max(2 * (weight_bytes + tile_bytes) + (8 << 20),
                             16 << 20), 64 << 20))

    flops = 2 * B * (D * 4 * H + H * 2 * Z2 + 2 * Z2 * 6 * H
                     + 2 * H * 4 * Z1 + 4 * Z1 * 2 * H + H * D)
    cost = pl.CostEstimate(
        flops=int(flops),
        transcendentals=int(B * (8 * H + 1)),
        bytes_accessed=int(B * (2 * D + S_pad) * 4 + weight_bytes))

    x_mean, packed = pl.pallas_call(
        kernel,
        grid=grid,
        in_specs=[batch_spec(D)] + [weight_spec(w) for w in weights],
        out_specs=(batch_spec(D), batch_spec(S_pad)),
        out_shape=(jax.ShapeDtypeStruct((B, D), jnp.float32),
                   jax.ShapeDtypeStruct((B, S_pad), jnp.float32)),
        compiler_params=pltpu.CompilerParams(
            dimension_semantics=("parallel",),
            vmem_limit_bytes=vmem_limit),
        cost_estimate=cost,
    )(x, *weights)

    # unpack the lane-dense slab (cheap XLA slices outside the kernel)
    z2_q_mean = packed[:, 0:Z2]
    z2_q_logvar = packed[:, Z2:2 * Z2]
    off = 2 * Z2
    z1_q_mean = packed[:, off:off + Z1]
    z1_q_logvar = packed[:, off + Z1:off + 2 * Z1]
    z1_p_mean = packed[:, off + 2 * Z1:off + 3 * Z1]
    z1_p_logvar = packed[:, off + 3 * Z1:off + 4 * Z1]

    x_logvar = 0.0
    z1_q = z1_q_mean   # eval-mode reparameterize -> mu
    z2_q = z2_q_mean
    return (x_mean, x_logvar, z1_q, z1_q_mean, z1_q_logvar,
            z2_q, z2_q_mean, z2_q_logvar, z1_p_mean, z1_p_logvar)


# ----------------------------- parameter init ----------------------------------

def _he_w(key, fan_in, fan_out):
    return (jax.random.normal(key, (fan_in, fan_out), jnp.float32)
            * jnp.sqrt(2.0 / fan_in))


def _b(key, fan_out):
    return 0.01 * jax.random.normal(key, (1, fan_out), jnp.float32)


def init_params(key, D, H, Z1, Z2):
    ks = iter(jax.random.split(key, 64))
    p = {}
    # q_z2 gated layer (D -> H)
    p["qz2_w1"], p["qz2_b1"] = _he_w(next(ks), D, H), _b(next(ks), H)
    p["qz2_wg"], p["qz2_bg"] = _he_w(next(ks), D, H), _b(next(ks), H)
    # q_z2_mean / q_z2_logvar (H -> Z2)
    p["qz2m_w"], p["qz2m_b"] = _he_w(next(ks), H, Z2), _b(next(ks), Z2)
    p["qz2l_w"], p["qz2l_b"] = _he_w(next(ks), H, Z2), _b(next(ks), Z2)
    # q_z1 joint gated layer (D+Z2 -> H), stored split
    p["qz1_wx1"], p["qz1_wz1"] = _he_w(next(ks), D, H), _he_w(next(ks), Z2, H)
    p["qz1_b1"] = _b(next(ks), H)
    p["qz1_wxg"], p["qz1_wzg"] = _he_w(next(ks), D, H), _he_w(next(ks), Z2, H)
    p["qz1_bg"] = _b(next(ks), H)
    # q_z1_mean / q_z1_logvar (H -> Z1)
    p["qz1m_w"], p["qz1m_b"] = _he_w(next(ks), H, Z1), _b(next(ks), Z1)
    p["qz1l_w"], p["qz1l_b"] = _he_w(next(ks), H, Z1), _b(next(ks), Z1)
    # p_z1 gated layer (Z2 -> H)
    p["pz1_w1"], p["pz1_b1"] = _he_w(next(ks), Z2, H), _b(next(ks), H)
    p["pz1_wg"], p["pz1_bg"] = _he_w(next(ks), Z2, H), _b(next(ks), H)
    # p_z1_mean / p_z1_logvar (H -> Z1)
    p["pz1m_w"], p["pz1m_b"] = _he_w(next(ks), H, Z1), _b(next(ks), Z1)
    p["pz1l_w"], p["pz1l_b"] = _he_w(next(ks), H, Z1), _b(next(ks), Z1)
    # p_x joint gated layer (Z1+Z2 -> H), stored split
    p["px_w1a"], p["px_w1b"] = _he_w(next(ks), Z1, H), _he_w(next(ks), Z2, H)
    p["px_b1"] = _b(next(ks), H)
    p["px_wga"], p["px_wgb"] = _he_w(next(ks), Z1, H), _he_w(next(ks), Z2, H)
    p["px_bg"] = _b(next(ks), H)
    # p_x_mean (H -> D, activation None)
    p["pxm_w"], p["pxm_b"] = _he_w(next(ks), H, D), _b(next(ks), D)
    return p


# ------------------------------ JAX reference -----------------------------------

def evcf_forward_ref(x, p):
    """Pure-f32 reference matching the PyTorch module exactly."""
    norm = jnp.sqrt(jnp.sum(x * x, axis=1, keepdims=True))
    xn = x / jnp.maximum(norm, 1e-12)

    def gated(a_parts, w1s, b1, wgs, bg):
        h, g = b1, bg
        for a, w1, wg in zip(a_parts, w1s, wgs):
            h = h + a @ w1
            g = g + a @ wg
        return jnp.tanh(h) * jax.nn.sigmoid(g)

    h2 = gated([xn], [p["qz2_w1"]], p["qz2_b1"], [p["qz2_wg"]], p["qz2_bg"])
    z2m = h2 @ p["qz2m_w"] + p["qz2m_b"]
    z2lv = jnp.clip(h2 @ p["qz2l_w"] + p["qz2l_b"], -12.0, 4.0)
    z2 = z2m
    h1 = gated([xn, z2], [p["qz1_wx1"], p["qz1_wz1"]], p["qz1_b1"],
               [p["qz1_wxg"], p["qz1_wzg"]], p["qz1_bg"])
    z1m = h1 @ p["qz1m_w"] + p["qz1m_b"]
    z1lv = jnp.clip(h1 @ p["qz1l_w"] + p["qz1l_b"], -12.0, 4.0)
    z1 = z1m
    hp = gated([z2], [p["pz1_w1"]], p["pz1_b1"], [p["pz1_wg"]], p["pz1_bg"])
    z1pm = hp @ p["pz1m_w"] + p["pz1m_b"]
    z1plv = jnp.clip(hp @ p["pz1l_w"] + p["pz1l_b"], -12.0, 4.0)
    hx = gated([z1, z2], [p["px_w1a"], p["px_w1b"]], p["px_b1"],
               [p["px_wga"], p["px_wgb"]], p["px_bg"])
    xm = hx @ p["pxm_w"] + p["pxm_b"]
    return (xm, 0.0, z1, z1m, z1lv, z2, z2m, z2lv, z1pm, z1plv)


if __name__ == "__main__":
    # Shapes consistent with the module: prod(input_size)=256 items,
    # hidden=64, z1=32, z2=32.  Batch 256 with the default tiling -> 2 grid
    # steps of 128 rows (one full tile per v7x TensorCore).
    B, D, H, Z1, Z2 = 256, 256, 64, 32, 32

    key = jax.random.PRNGKey(0)
    kx, kp = jax.random.split(key)
    # Non-negative "user-item" style input
    x = jax.nn.relu(jax.random.normal(kx, (B, D), jnp.float32))
    params = init_params(kp, D, H, Z1, Z2)

    outs = evcf_forward(x, params)
    outs = jax.block_until_ready(outs)

    ref = evcf_forward_ref(x, params)
    # Kernel uses bf16 matmul operands with f32 accumulation (latent means are
    # rounded to bf16 before feeding downstream matmuls — deliberate divergence
    # from the f32 PyTorch module); compare with a bf16-rounding tolerance.
    for i, (o, r) in enumerate(zip(outs, ref)):
        if i == 1:  # x_logvar, plain scalar 0.0
            assert o == 0.0
            continue
        assert o.shape == r.shape, f"shape mismatch in output {i}"
        assert jnp.allclose(o, r, rtol=2e-2, atol=2e-2), f"mismatch in output {i}"

    print("KERNEL_OK")
</pallas_src>

<mosaic_0001>
module attributes {stable_mosaic.version = 11 : i64} {
  func.func @evcf_kernel(%arg0: i32, %arg1: memref<128x256xf32, #tpu.memory_space<vmem>>, %arg2: memref<256x256xbf16, #tpu.memory_space<vmem>>, %arg3: memref<1x256xf32, #tpu.memory_space<vmem>>, %arg4: memref<64x64xbf16, #tpu.memory_space<vmem>>, %arg5: memref<1x64xf32, #tpu.memory_space<vmem>>, %arg6: memref<64x384xbf16, #tpu.memory_space<vmem>>, %arg7: memref<1x128xf32, #tpu.memory_space<vmem>>, %arg8: memref<128x128xbf16, #tpu.memory_space<vmem>>, %arg9: memref<1x128xf32, #tpu.memory_space<vmem>>, %arg10: memref<128x128xbf16, #tpu.memory_space<vmem>>, %arg11: memref<1x128xf32, #tpu.memory_space<vmem>>, %arg12: memref<64x256xbf16, #tpu.memory_space<vmem>>, %arg13: memref<1x256xf32, #tpu.memory_space<vmem>>, %arg14: memref<128x256xf32, #tpu.memory_space<vmem>>, %arg15: memref<128x256xf32, #tpu.memory_space<vmem>>) attributes {dimension_semantics = [#tpu.dimension_semantics<parallel>], iteration_bounds = array<i64: 2>, scalar_prefetch = 0 : i64, scratch_operands = 0 : i64, tpu.core_type = #tpu.core_type<tc>, window_params = [{transform_indices = @transform_0, window_bounds = array<i64: 128, 256>}, {pipeline_mode = #tpu.pipeline_mode<synchronous>, transform_indices = @transform_1, window_bounds = array<i64: 256, 256>}, {pipeline_mode = #tpu.pipeline_mode<synchronous>, transform_indices = @transform_2, window_bounds = array<i64: 1, 256>}, {pipeline_mode = #tpu.pipeline_mode<synchronous>, transform_indices = @transform_3, window_bounds = array<i64: 64, 64>}, {pipeline_mode = #tpu.pipeline_mode<synchronous>, transform_indices = @transform_4, window_bounds = array<i64: 1, 64>}, {pipeline_mode = #tpu.pipeline_mode<synchronous>, transform_indices = @transform_5, window_bounds = array<i64: 64, 384>}, {pipeline_mode = #tpu.pipeline_mode<synchronous>, transform_indices = @transform_6, window_bounds = array<i64: 1, 128>}, {pipeline_mode = #tpu.pipeline_mode<synchronous>, transform_indices = @transform_7, window_bounds = array<i64: 128, 128>}, {pipeline_mode = #tpu.pipeline_mode<synchronous>, transform_indices = @transform_8, window_bounds = array<i64: 1, 128>}, {pipeline_mode = #tpu.pipeline_mode<synchronous>, transform_indices = @transform_9, window_bounds = array<i64: 128, 128>}, {pipeline_mode = #tpu.pipeline_mode<synchronous>, transform_indices = @transform_10, window_bounds = array<i64: 1, 128>}, {pipeline_mode = #tpu.pipeline_mode<synchronous>, transform_indices = @transform_11, window_bounds = array<i64: 64, 256>}, {pipeline_mode = #tpu.pipeline_mode<synchronous>, transform_indices = @transform_12, window_bounds = array<i64: 1, 256>}, {transform_indices = @transform_13, window_bounds = array<i64: 128, 256>}, {transform_indices = @transform_14, window_bounds = array<i64: 128, 256>}]} {
    %c0 = arith.constant 0 : index
    %c0_0 = arith.constant 0 : index
    %0 = vector.load %arg1[%c0, %c0_0] : memref<128x256xf32, #tpu.memory_space<vmem>>, vector<128x256xf32>
    %1 = arith.mulf %0, %0 : vector<128x256xf32>
    %cst = arith.constant dense<0.000000e+00> : vector<128xf32>
    %2 = vector.multi_reduction <add>, %1, %cst [1] : vector<128x256xf32> to vector<128xf32>
    %3 = vector.shape_cast %2 : vector<128xf32> to vector<128x1xf32>
    %cst_1 = arith.constant 1.000000e-24 : f32
    %4 = vector.broadcast %cst_1 : f32 to vector<128x1xf32>
    %5 = arith.maximumf %3, %4 : vector<128x1xf32>
    %6 = math.rsqrt %5 : vector<128x1xf32>
    %7 = vector.broadcast %6 : vector<128x1xf32> to vector<128x256xf32>
    %8 = arith.mulf %0, %7 : vector<128x256xf32>
    %9 = arith.truncf %8 : vector<128x256xf32> to vector<128x256xbf16>
    %c0_2 = arith.constant 0 : index
    %c0_3 = arith.constant 0 : index
    %10 = vector.load %arg2[%c0_2, %c0_3] : memref<256x256xbf16, #tpu.memory_space<vmem>>, vector<256x256xbf16>
    %cst_4 = arith.constant dense<0.000000e+00> : vector<128x256xf32>
    %11 = tpu.matmul %9, %10, %cst_4 {dimension_numbers = #tpu.dot_dimension_numbers<[1], [0], [0], [1], [0, 0, 1, 1], [], []>} : vector<128x256xbf16>, vector<256x256xbf16>, vector<128x256xf32> -> vector<128x256xf32>
    %c0_5 = arith.constant 0 : index
    %c0_6 = arith.constant 0 : index
    %12 = vector.load %arg3[%c0_5, %c0_6] : memref<1x256xf32, #tpu.memory_space<vmem>>, vector<1x256xf32>
    %13 = vector.broadcast %12 : vector<1x256xf32> to vector<128x256xf32>
    %14 = arith.addf %11, %13 : vector<128x256xf32>
    %15 = vector.extract_strided_slice %14 {offsets = [0, 0], sizes = [128, 64], strides = [1, 1]} : vector<128x256xf32> to vector<128x64xf32>
    %16 = math.tanh %15 : vector<128x64xf32>
    %17 = vector.extract_strided_slice %14 {offsets = [0, 64], sizes = [128, 64], strides = [1, 1]} : vector<128x256xf32> to vector<128x64xf32>
    %18 = arith.negf %17 : vector<128x64xf32>
    %19 = math.exp %18 : vector<128x64xf32>
    %cst_7 = arith.constant 1.000000e+00 : f32
    %20 = vector.broadcast %cst_7 : f32 to vector<128x64xf32>
    %21 = arith.addf %20, %19 : vector<128x64xf32>
    %22 = arith.divf %20, %21 : vector<128x64xf32>
    %23 = arith.mulf %16, %22 : vector<128x64xf32>
    %24 = vector.extract_strided_slice %14 {offsets = [0, 128], sizes = [128, 128], strides = [1, 1]} : vector<128x256xf32> to vector<128x128xf32>
    %25 = arith.truncf %23 : vector<128x64xf32> to vector<128x64xbf16>
    %c0_8 = arith.constant 0 : index
    %c0_9 = arith.constant 0 : index
    %26 = vector.load %arg4[%c0_8, %c0_9] : memref<64x64xbf16, #tpu.memory_space<vmem>>, vector<64x64xbf16>
    %cst_10 = arith.constant dense<0.000000e+00> : vector<128x64xf32>
    %27 = tpu.matmul %25, %26, %cst_10 {dimension_numbers = #tpu.dot_dimension_numbers<[1], [0], [0], [1], [0, 0, 1, 1], [], []>} : vector<128x64xbf16>, vector<64x64xbf16>, vector<128x64xf32> -> vector<128x64xf32>
    %c0_11 = arith.constant 0 : index
    %c0_12 = arith.constant 0 : index
    %28 = vector.load %arg5[%c0_11, %c0_12] : memref<1x64xf32, #tpu.memory_space<vmem>>, vector<1x64xf32>
    %29 = vector.broadcast %28 : vector<1x64xf32> to vector<128x64xf32>
    %30 = arith.addf %27, %29 : vector<128x64xf32>
    %31 = arith.truncf %30 : vector<128x64xf32> to vector<128x64xbf16>
    %c0_13 = arith.constant 0 : index
    %c0_14 = arith.constant 0 : index
    %32 = vector.load %arg6[%c0_13, %c0_14] : memref<64x384xbf16, #tpu.memory_space<vmem>>, vector<64x384xbf16>
    %cst_15 = arith.constant dense<0.000000e+00> : vector<128x384xf32>
    %33 = tpu.matmul %31, %32, %cst_15 {dimension_numbers = #tpu.dot_dimension_numbers<[1], [0], [0], [1], [0, 0, 1, 1], [], []>} : vector<128x64xbf16>, vector<64x384xbf16>, vector<128x384xf32> -> vector<128x384xf32>
    %34 = vector.extract_strided_slice %33 {offsets = [0, 0], sizes = [128, 128], strides = [1, 1]} : vector<128x384xf32> to vector<128x128xf32>
    %35 = arith.addf %24, %34 : vector<128x128xf32>
    %36 = vector.extract_strided_slice %33 {offsets = [0, 128], sizes = [128, 128], strides = [1, 1]} : vector<128x384xf32> to vector<128x128xf32>
    %c0_16 = arith.constant 0 : index
    %c0_17 = arith.constant 0 : index
    %37 = vector.load %arg7[%c0_16, %c0_17] : memref<1x128xf32, #tpu.memory_space<vmem>>, vector<1x128xf32>
    %38 = vector.broadcast %37 : vector<1x128xf32> to vector<128x128xf32>
    %39 = arith.addf %36, %38 : vector<128x128xf32>
    %40 = vector.extract_strided_slice %35 {offsets = [0, 0], sizes = [128, 64], strides = [1, 1]} : vector<128x128xf32> to vector<128x64xf32>
    %41 = math.tanh %40 : vector<128x64xf32>
    %42 = vector.extract_strided_slice %35 {offsets = [0, 64], sizes = [128, 64], strides = [1, 1]} : vector<128x128xf32> to vector<128x64xf32>
    %43 = arith.negf %42 : vector<128x64xf32>
    %44 = math.exp %43 : vector<128x64xf32>
    %cst_18 = arith.constant 1.000000e+00 : f32
    %45 = vector.broadcast %cst_18 : f32 to vector<128x64xf32>
    %46 = arith.addf %45, %44 : vector<128x64xf32>
    %47 = arith.divf %45, %46 : vector<128x64xf32>
    %48 = arith.mulf %41, %47 : vector<128x64xf32>
    %49 = vector.extract_strided_slice %39 {offsets = [0, 0], sizes = [128, 64], strides = [1, 1]} : vector<128x128xf32> to vector<128x64xf32>
    %50 = math.tanh %49 : vector<128x64xf32>
    %51 = vector.extract_strided_slice %39 {offsets = [0, 64], sizes = [128, 64], strides = [1, 1]} : vector<128x128xf32> to vector<128x64xf32>
    %52 = arith.negf %51 : vector<128x64xf32>
    %53 = math.exp %52 : vector<128x64xf32>
    %cst_19 = arith.constant 1.000000e+00 : f32
    %54 = vector.broadcast %cst_19 : f32 to vector<128x64xf32>
    %55 = arith.addf %54, %53 : vector<128x64xf32>
    %56 = arith.divf %54, %55 : vector<128x64xf32>
    %57 = arith.mulf %50, %56 : vector<128x64xf32>
    %58 = tpu.concatenate %48, %57 in 1 : vector<128x64xf32>, vector<128x64xf32> -> vector<128x128xf32>
    %59 = arith.truncf %58 : vector<128x128xf32> to vector<128x128xbf16>
    %c0_20 = arith.constant 0 : index
    %c0_21 = arith.constant 0 : index
    %60 = vector.load %arg8[%c0_20, %c0_21] : memref<128x128xbf16, #tpu.memory_space<vmem>>, vector<128x128xbf16>
    %cst_22 = arith.constant dense<0.000000e+00> : vector<128x128xf32>
    %61 = tpu.matmul %59, %60, %cst_22 {dimension_numbers = #tpu.dot_dimension_numbers<[1], [0], [0], [1], [0, 0, 1, 1], [], []>} : vector<128x128xbf16>, vector<128x128xbf16>, vector<128x128xf32> -> vector<128x128xf32>
    %c0_23 = arith.constant 0 : index
    %c0_24 = arith.constant 0 : index
    %62 = vector.load %arg9[%c0_23, %c0_24] : memref<1x128xf32, #tpu.memory_space<vmem>>, vector<1x128xf32>
    %63 = vector.broadcast %62 : vector<1x128xf32> to vector<128x128xf32>
    %64 = arith.addf %61, %63 : vector<128x128xf32>
    %65 = arith.truncf %64 : vector<128x128xf32> to vector<128x128xbf16>
    %c0_25 = arith.constant 0 : index
    %c0_26 = arith.constant 0 : index
    %66 = vector.load %arg10[%c0_25, %c0_26] : memref<128x128xbf16, #tpu.memory_space<vmem>>, vector<128x128xbf16>
    %cst_27 = arith.constant dense<0.000000e+00> : vector<128x128xf32>
    %67 = tpu.matmul %65, %66, %cst_27 {dimension_numbers = #tpu.dot_dimension_numbers<[1], [0], [0], [1], [0, 0, 1, 1], [], []>} : vector<128x128xbf16>, vector<128x128xbf16>, vector<128x128xf32> -> vector<128x128xf32>
    %c0_28 = arith.constant 0 : index
    %c0_29 = arith.constant 0 : index
    %68 = vector.load %arg11[%c0_28, %c0_29] : memref<1x128xf32, #tpu.memory_space<vmem>>, vector<1x128xf32>
    %69 = vector.broadcast %68 : vector<1x128xf32> to vector<128x128xf32>
    %70 = arith.addf %67, %69 : vector<128x128xf32>
    %71 = vector.extract_strided_slice %33 {offsets = [0, 256], sizes = [128, 128], strides = [1, 1]} : vector<128x384xf32> to vector<128x128xf32>
    %72 = arith.addf %70, %71 : vector<128x128xf32>
    %73 = vector.extract_strided_slice %72 {offsets = [0, 0], sizes = [128, 64], strides = [1, 1]} : vector<128x128xf32> to vector<128x64xf32>
    %74 = math.tanh %73 : vector<128x64xf32>
    %75 = vector.extract_strided_slice %72 {offsets = [0, 64], sizes = [128, 64], strides = [1, 1]} : vector<128x128xf32> to vector<128x64xf32>
    %76 = arith.negf %75 : vector<128x64xf32>
    %77 = math.exp %76 : vector<128x64xf32>
    %cst_30 = arith.constant 1.000000e+00 : f32
    %78 = vector.broadcast %cst_30 : f32 to vector<128x64xf32>
    %79 = arith.addf %78, %77 : vector<128x64xf32>
    %80 = arith.divf %78, %79 : vector<128x64xf32>
    %81 = arith.mulf %74, %80 : vector<128x64xf32>
    %82 = arith.truncf %81 : vector<128x64xf32> to vector<128x64xbf16>
    %c0_31 = arith.constant 0 : index
    %c0_32 = arith.constant 0 : index
    %83 = vector.load %arg12[%c0_31, %c0_32] : memref<64x256xbf16, #tpu.memory_space<vmem>>, vector<64x256xbf16>
    %cst_33 = arith.constant dense<0.000000e+00> : vector<128x256xf32>
    %84 = tpu.matmul %82, %83, %cst_33 {dimension_numbers = #tpu.dot_dimension_numbers<[1], [0], [0], [1], [0, 0, 1, 1], [], []>} : vector<128x64xbf16>, vector<64x256xbf16>, vector<128x256xf32> -> vector<128x256xf32>
    %c0_34 = arith.constant 0 : index
    %c0_35 = arith.constant 0 : index
    %85 = vector.load %arg13[%c0_34, %c0_35] : memref<1x256xf32, #tpu.memory_space<vmem>>, vector<1x256xf32>
    %86 = vector.broadcast %85 : vector<1x256xf32> to vector<128x256xf32>
    %87 = arith.addf %84, %86 : vector<128x256xf32>
    %c0_36 = arith.constant 0 : index
    %c0_37 = arith.constant 0 : index
    %88 = vector.load %arg14[%c0_36, %c0_37] : memref<128x256xf32, #tpu.memory_space<vmem>>, vector<128x256xf32>
    tpu.vector_store %arg14[%c0_36, %c0_37], %87 {strides = array<i32>} : memref<128x256xf32, #tpu.memory_space<vmem>>, vector<128x256xf32>,
    %89 = tpu.iota {dimensions = array<i32: 1>} : vector<128x64xi32>
    %c32_i32 = arith.constant 32 : i32
    %90 = vector.broadcast %c32_i32 : i32 to vector<128x64xi32>
    %91 = arith.cmpi slt, %89, %90 : vector<128x64xi32>
    %cst_38 = arith.constant -1.200000e+01 : f32
    %cst_39 = arith.constant 4.000000e+00 : f32
    %92 = vector.broadcast %cst_38 : f32 to vector<128x64xf32>
    %93 = arith.maximumf %92, %30 : vector<128x64xf32>
    %94 = vector.broadcast %cst_39 : f32 to vector<128x64xf32>
    %95 = arith.minimumf %94, %93 : vector<128x64xf32>
    %96 = arith.select %91, %30, %95 : vector<128x64xi1>, vector<128x64xf32>
    %97 = tpu.iota {dimensions = array<i32: 1>} : vector<128x128xi32>
    %c32_i32_40 = arith.constant 32 : i32
    %98 = vector.broadcast %c32_i32_40 : i32 to vector<128x128xi32>
    %99 = arith.cmpi sge, %97, %98 : vector<128x128xi32>
    %c64_i32 = arith.constant 64 : i32
    %100 = vector.broadcast %c64_i32 : i32 to vector<128x128xi32>
    %101 = arith.cmpi slt, %97, %100 : vector<128x128xi32>
    %102 = arith.andi %99, %101 : vector<128x128xi1>
    %c96_i32 = arith.constant 96 : i32
    %103 = vector.broadcast %c96_i32 : i32 to vector<128x128xi32>
    %104 = arith.cmpi sge, %97, %103 : vector<128x128xi32>
    %105 = arith.ori %102, %104 : vector<128x128xi1>
    %cst_41 = arith.constant -1.200000e+01 : f32
    %cst_42 = arith.constant 4.000000e+00 : f32
    %106 = vector.broadcast %cst_41 : f32 to vector<128x128xf32>
    %107 = arith.maximumf %106, %64 : vector<128x128xf32>
    %108 = vector.broadcast %cst_42 : f32 to vector<128x128xf32>
    %109 = arith.minimumf %108, %107 : vector<128x128xf32>
    %110 = arith.select %105, %109, %64 : vector<128x128xi1>, vector<128x128xf32>
    %cst_43 = arith.constant 0.000000e+00 : f32
    %111 = vector.broadcast %cst_43 : f32 to vector<128x64xf32>
    %112 = tpu.concatenate %96, %110, %111 in 1 : vector<128x64xf32>, vector<128x128xf32>, vector<128x64xf32> -> vector<128x256xf32>
    %c0_44 = arith.constant 0 : index
    %c0_45 = arith.constant 0 : index
    %113 = vector.load %arg15[%c0_44, %c0_45] : memref<128x256xf32, #tpu.memory_space<vmem>>, vector<128x256xf32>
    tpu.vector_store %arg15[%c0_44, %c0_45], %112 {strides = array<i32>} : memref<128x256xf32, #tpu.memory_space<vmem>>, vector<128x256xf32>,
    return
  }
  func.func @transform_0(%arg0: i32) -> (i32, i32) {
    %c0_i32 = arith.constant 0 : i32
    %c0_i32_0 = arith.constant 0 : i32
    return %arg0, %c0_i32 : i32, i32
  }
  func.func @transform_1(%arg0: i32) -> (i32, i32) {
    %c0_i32 = arith.constant 0 : i32
    %c0_i32_0 = arith.constant 0 : i32
    %c0_i32_1 = arith.constant 0 : i32
    return %c0_i32, %c0_i32_0 : i32, i32
  }
  func.func @transform_2(%arg0: i32) -> (i32, i32) {
    %c0_i32 = arith.constant 0 : i32
    %c0_i32_0 = arith.constant 0 : i32
    %c0_i32_1 = arith.constant 0 : i32
    return %c0_i32, %c0_i32_0 : i32, i32
  }
  func.func @transform_3(%arg0: i32) -> (i32, i32) {
    %c0_i32 = arith.constant 0 : i32
    %c0_i32_0 = arith.constant 0 : i32
    %c0_i32_1 = arith.constant 0 : i32
    return %c0_i32, %c0_i32_0 : i32, i32
  }
  func.func @transform_4(%arg0: i32) -> (i32, i32) {
    %c0_i32 = arith.constant 0 : i32
    %c0_i32_0 = arith.constant 0 : i32
    %c0_i32_1 = arith.constant 0 : i32
    return %c0_i32, %c0_i32_0 : i32, i32
  }
  func.func @transform_5(%arg0: i32) -> (i32, i32) {
    %c0_i32 = arith.constant 0 : i32
    %c0_i32_0 = arith.constant 0 : i32
    %c0_i32_1 = arith.constant 0 : i32
    return %c0_i32, %c0_i32_0 : i32, i32
  }
  func.func @transform_6(%arg0: i32) -> (i32, i32) {
    %c0_i32 = arith.constant 0 : i32
    %c0_i32_0 = arith.constant 0 : i32
    %c0_i32_1 = arith.constant 0 : i32
    return %c0_i32, %c0_i32_0 : i32, i32
  }
  func.func @transform_7(%arg0: i32) -> (i32, i32) {
    %c0_i32 = arith.constant 0 : i32
    %c0_i32_0 = arith.constant 0 : i32
    %c0_i32_1 = arith.constant 0 : i32
    return %c0_i32, %c0_i32_0 : i32, i32
  }
  func.func @transform_8(%arg0: i32) -> (i32, i32) {
    %c0_i32 = arith.constant 0 : i32
    %c0_i32_0 = arith.constant 0 : i32
    %c0_i32_1 = arith.constant 0 : i32
    return %c0_i32, %c0_i32_0 : i32, i32
  }
  func.func @transform_9(%arg0: i32) -> (i32, i32) {
    %c0_i32 = arith.constant 0 : i32
    %c0_i32_0 = arith.constant 0 : i32
    %c0_i32_1 = arith.constant 0 : i32
    return %c0_i32, %c0_i32_0 : i32, i32
  }
  func.func @transform_10(%arg0: i32) -> (i32, i32) {
    %c0_i32 = arith.constant 0 : i32
    %c0_i32_0 = arith.constant 0 : i32
    %c0_i32_1 = arith.constant 0 : i32
    return %c0_i32, %c0_i32_0 : i32, i32
  }
  func.func @transform_11(%arg0: i32) -> (i32, i32) {
    %c0_i32 = arith.constant 0 : i32
    %c0_i32_0 = arith.constant 0 : i32
    %c0_i32_1 = arith.constant 0 : i32
    return %c0_i32, %c0_i32_0 : i32, i32
  }
  func.func @transform_12(%arg0: i32) -> (i32, i32) {
    %c0_i32 = arith.constant 0 : i32
    %c0_i32_0 = arith.constant 0 : i32
    %c0_i32_1 = arith.constant 0 : i32
    return %c0_i32, %c0_i32_0 : i32, i32
  }
  func.func @transform_13(%arg0: i32) -> (i32, i32) {
    %c0_i32 = arith.constant 0 : i32
    %c0_i32_0 = arith.constant 0 : i32
    return %arg0, %c0_i32 : i32, i32
  }
  func.func @transform_14(%arg0: i32) -> (i32, i32) {
    %c0_i32 = arith.constant 0 : i32
    %c0_i32_0 = arith.constant 0 : i32
    return %arg0, %c0_i32 : i32, i32
  }
}

</mosaic_0001>

<llo_original>
// kernel: tpu_custom_call.1
$region0: #{tpu_custom_call.1}
  #allocation0 [shape = 'u32[]', space=smem, size = 0x4, offset = 0x4, fixed_abs, tag = 'smem constant byte address 0x4 - core index']
  #allocation1 [shape = 'u32[144,128]{1,0:T(1,128)}', space=vmem, size = 0x12000, scoped, tag = 'internal scratch']
  %s0 = inlined_call_operand.hbm [shape: f32[256,256], index: 0, kind: input, shape index: {}]
  %s1 = inlined_call_operand.hbm [shape: bf16[256,256], index: 1, kind: input, shape index: {}]
  %s2 = inlined_call_operand.vmem [shape: f32[1,256], index: 2, kind: input, shape index: {}]
  %s3 = inlined_call_operand.hbm [shape: bf16[64,64], index: 3, kind: input, shape index: {}]
  %s4 = inlined_call_operand.vmem [shape: f32[1,64], index: 4, kind: input, shape index: {}]
  %s5 = inlined_call_operand.hbm [shape: bf16[64,384], index: 5, kind: input, shape index: {}]
  %s6 = inlined_call_operand.vmem [shape: f32[1,128], index: 6, kind: input, shape index: {}]
  %s7 = inlined_call_operand.hbm [shape: bf16[128,128], index: 7, kind: input, shape index: {}]
  %s8 = inlined_call_operand.vmem [shape: f32[1,128], index: 8, kind: input, shape index: {}]
  %s9 = inlined_call_operand.hbm [shape: bf16[128,128], index: 9, kind: input, shape index: {}]
  %s10 = inlined_call_operand.vmem [shape: f32[1,128], index: 10, kind: input, shape index: {}]
  %s11 = inlined_call_operand.hbm [shape: bf16[64,256], index: 11, kind: input, shape index: {}]
  %s12 = inlined_call_operand.vmem [shape: f32[1,256], index: 12, kind: input, shape index: {}]
  %s13 = inlined_call_operand.hbm [shape: f32[256,256], index: 13, kind: output, shape index: {0}]
  %s14 = inlined_call_operand.hbm [shape: f32[256,256], index: 14, kind: output, shape index: {1}]
  %15 = xla_tuple %s13, %s14
  %s16 = sld [smem:[#allocation0]]
  $region121: #{tpu_custom_call.1} parent=0
    _
  %s18 = ssub.s32 1, %s16
  %s19 = scalar_select 0, %s18, %s16
  $region1: #{tpu_custom_call.1} parent=0
    #allocation2 [shape = 'u8[262144]{0}', space=vmem, size = 0x40000, scoped, tag = 'input window, operand 0']
    #allocation3 [shape = 's32[2]{0}', space=sflag, size = 0x8, scoped, tag = 'scoped memory for tpu_custom_call.1']
    #allocation4 [shape = 's32[2]{0}', space=sflag, size = 0x8, scoped, tag = 'scoped memory for tpu_custom_call.1']
    #allocation5 [shape = 'u8[131072]{0}', space=vmem, size = 0x20000, scoped, tag = 'input window, operand 1, single buffered']
    #allocation6 [shape = 's32[1]{0}', space=sflag, size = 0x4, scoped, tag = 'scoped memory for tpu_custom_call.1']
    #allocation7 [shape = 'u8[16384]{0}', space=vmem, size = 0x4000, scoped, tag = 'input window, operand 3, single buffered']
    #allocation8 [shape = 'u8[49152]{0}', space=vmem, size = 0xc000, scoped, tag = 'input window, operand 5, single buffered']
    #allocation9 [shape = 's32[1]{0}', space=sflag, size = 0x4, scoped, tag = 'scoped memory for tpu_custom_call.1']
    #allocation10 [shape = 'u8[32768]{0}', space=vmem, size = 0x8000, scoped, tag = 'input window, operand 7, single buffered']
    #allocation11 [shape = 'u8[32768]{0}', space=vmem, size = 0x8000, scoped, tag = 'input window, operand 9, single buffered']
    #allocation12 [shape = 's32[1]{0}', space=sflag, size = 0x4, scoped, tag = 'scoped memory for tpu_custom_call.1']
    #allocation13 [shape = 'u8[32768]{0}', space=vmem, size = 0x8000, scoped, tag = 'input window, operand 11, single buffered']
    #allocation14 [shape = 'u8[262144]{0}', space=vmem, size = 0x40000, scoped, tag = 'output window, operand 0']
    #allocation15 [shape = 'u8[262144]{0}', space=vmem, size = 0x40000, scoped, tag = 'output window, operand 1']
    #allocation16 [shape = 's32[2]{0}', space=sflag, size = 0x8, scoped, tag = 'scoped memory for tpu_custom_call.1']
    %20 = vsyncpa [#allocation3], 0
    %s21 = scalar_lea.sflag [#allocation3], 1
    %22 = vsyncpa %s21, 0
    %23 = vsyncpa [#allocation6], 0
    %24 = vsyncpa [#allocation9], 0
    %25 = vsyncpa [#allocation12], 0
    %26 = vsyncpa [#allocation4], 0
    %s27 = scalar_lea.sflag [#allocation4], 1
    %28 = vsyncpa %s27, 0
    %29 = vsyncpa [#allocation16], 0
    %s30 = scalar_lea.sflag [#allocation16], 1
    %31 = vsyncpa %s30, 0
    loop: start=0, step=1, limit=4
    $region2: #{tpu_custom_call.1} parent=1 // loop_pre_header
      _
    $region3: #{tpu_custom_call.1} parent=1 // loop_header
      %s33 = sphi 0, %s37
      %p34 = scmp.ge.s32.totalorder %s33, 4
      %s43 = sphi 0, %s45
      %s46 = sphi 0, %s43
      %s47 = sphi 0, %s46
      %s63 = sphi 0, %s47
      %s67 = sphi 0, %s67
      %s69 = sphi 0, %s67
      %s70 = sphi 0, %s69
      %s84 = sphi 0, %s70
      %s88 = sphi 0, %s88
      %s90 = sphi 0, %s88
      %s91 = sphi 0, %s90
      %s105 = sphi 0, %s91
      %s109 = sphi 0, %s109
      %s111 = sphi 0, %s109
      %s112 = sphi 0, %s111
      %s126 = sphi 0, %s112
      %s130 = sphi 0, %s130
      %s132 = sphi 0, %s130
      %s133 = sphi 0, %s132
      %s147 = sphi 0, %s133
      %s151 = sphi 0, %s151
      %s153 = sphi 0, %s151
      %s154 = sphi 0, %s153
      %s168 = sphi 0, %s154
      %s172 = sphi 0, %s172
      %s174 = sphi 0, %s172
      %s175 = sphi 0, %s174
      %s189 = sphi 0, %s175
      %s193 = sphi 0, %s193
      %s195 = sphi 0, %s193
      %s196 = sphi 0, %s195
      %s210 = sphi 0, %s196
      %s214 = sphi 0, %s214
      %s216 = sphi 0, %s214
      %s217 = sphi 0, %s216
      %s231 = sphi 0, %s217
      %s235 = sphi 0, %s235
      %s237 = sphi 0, %s235
      %s238 = sphi 0, %s237
      %s252 = sphi 0, %s238
      %s256 = sphi 0, %s256
      %s258 = sphi 0, %s256
      %s259 = sphi 0, %s258
      %s273 = sphi 0, %s259
      %s277 = sphi 0, %s277
      %s279 = sphi 0, %s277
      %s280 = sphi 0, %s279
      %s294 = sphi 0, %s280
      %s298 = sphi 0, %s298
      %s300 = sphi 0, %s298
      %s301 = sphi 0, %s300
      %s315 = sphi 0, %s301
      %s321 = sphi 0, %s323
      %s324 = sphi 0, %s321
      %s325 = sphi 0, %s324
      %s341 = sphi 0, %s325
      %s347 = sphi 0, %s349
      %s350 = sphi 0, %s347
      %s351 = sphi 0, %s350
      %s367 = sphi 0, %s351
    $region4: #{tpu_custom_call.1} parent=1 // loop_header_branch
      %36 = sbr.rel (%p34) target = $region8
    $region5: #{tpu_custom_call.1} parent=1 // loop_body
      %s38 = ssub.s32 %s33, 1
      %s39 = ssub.s32 %s33, 2
      %s40 = sadd.s32 %s33, 1
      %s41 = ssub.s32 %s33, %s40
      %p42 = scmp.eq.s32.totalorder %s41, 0
      %s44 = sadd.s32 %s43, 1
      %s45 = scalar_select %p42, %s43, %s44
      %p48 = pneg %p42
      %p49 = scmp.eq.s32.totalorder %s33, 1
      %p50 = por %p48, %p49
      %p51 = scmp.ne.s32.totalorder %s43, %s46
      %p52 = scmp.eq.s32.totalorder %s33, 0
      %p53 = por %p51, %p52
      %p54 = scmp.ne.s32.totalorder %s43, %s46
      %p55 = scmp.eq.s32.totalorder %s38, 1
      %p56 = por %p54, %p55
      %p57 = scmp.ne.s32.totalorder %s46, %s47
      %p58 = scmp.eq.s32.totalorder %s38, 0
      %p59 = por %p57, %p58
      %p60 = scmp.ne.s32.totalorder %s46, %s47
      %p61 = scmp.eq.s32.totalorder %s39, 1
      %p62 = por %p60, %p61
      %p64 = scmp.ne.s32.totalorder %s47, %s63
      %p65 = scmp.eq.s32.totalorder %s39, 0
      %p66 = por %p64, %p65
      %s68 = sadd.s32 %s67, 1
      %p71 = scmp.eq.s32.totalorder %s33, 1
      %p72 = scmp.ne.s32.totalorder %s67, %s69
      %p73 = scmp.eq.s32.totalorder %s33, 0
      %p74 = por %p72, %p73
      %p75 = scmp.ne.s32.totalorder %s67, %s69
      %p76 = scmp.eq.s32.totalorder %s38, 1
      %p77 = por %p75, %p76
      %p78 = scmp.ne.s32.totalorder %s69, %s70
      %p79 = scmp.eq.s32.totalorder %s38, 0
      %p80 = por %p78, %p79
      %p81 = scmp.ne.s32.totalorder %s69, %s70
      %p82 = scmp.eq.s32.totalorder %s39, 1
      %p83 = por %p81, %p82
      %p85 = scmp.ne.s32.totalorder %s70, %s84
      %p86 = scmp.eq.s32.totalorder %s39, 0
      %p87 = por %p85, %p86
      %s89 = sadd.s32 %s88, 1
      %p92 = scmp.eq.s32.totalorder %s33, 1
      %p93 = scmp.ne.s32.totalorder %s88, %s90
      %p94 = scmp.eq.s32.totalorder %s33, 0
      %p95 = por %p93, %p94
      %p96 = scmp.ne.s32.totalorder %s88, %s90
      %p97 = scmp.eq.s32.totalorder %s38, 1
      %p98 = por %p96, %p97
      %p99 = scmp.ne.s32.totalorder %s90, %s91
      %p100 = scmp.eq.s32.totalorder %s38, 0
      %p101 = por %p99, %p100
      %p102 = scmp.ne.s32.totalorder %s90, %s91
      %p103 = scmp.eq.s32.totalorder %s39, 1
      %p104 = por %p102, %p103
      %p106 = scmp.ne.s32.totalorder %s91, %s105
      %p107 = scmp.eq.s32.totalorder %s39, 0
      %p108 = por %p106, %p107
      %s110 = sadd.s32 %s109, 1
      %p113 = scmp.eq.s32.totalorder %s33, 1
      %p114 = scmp.ne.s32.totalorder %s109, %s111
      %p115 = scmp.eq.s32.totalorder %s33, 0
      %p116 = por %p114, %p115
      %p117 = scmp.ne.s32.totalorder %s109, %s111
      %p118 = scmp.eq.s32.totalorder %s38, 1
      %p119 = por %p117, %p118
      %p120 = scmp.ne.s32.totalorder %s111, %s112
      %p121 = scmp.eq.s32.totalorder %s38, 0
      %p122 = por %p120, %p121
      %p123 = scmp.ne.s32.totalorder %s111, %s112
      %p124 = scmp.eq.s32.totalorder %s39, 1
      %p125 = por %p123, %p124
      %p127 = scmp.ne.s32.totalorder %s112, %s126
      %p128 = scmp.eq.s32.totalorder %s39, 0
      %p129 = por %p127, %p128
      %s131 = sadd.s32 %s130, 1
      %p134 = scmp.eq.s32.totalorder %s33, 1
      %p135 = scmp.ne.s32.totalorder %s130, %s132
      %p136 = scmp.eq.s32.totalorder %s33, 0
      %p137 = por %p135, %p136
      %p138 = scmp.ne.s32.totalorder %s130, %s132
      %p139 = scmp.eq.s32.totalorder %s38, 1
      %p140 = por %p138, %p139
      %p141 = scmp.ne.s32.totalorder %s132, %s133
      %p142 = scmp.eq.s32.totalorder %s38, 0
      %p143 = por %p141, %p142
      %p144 = scmp.ne.s32.totalorder %s132, %s133
      %p145 = scmp.eq.s32.totalorder %s39, 1
      %p146 = por %p144, %p145
      %p148 = scmp.ne.s32.totalorder %s133, %s147
      %p149 = scmp.eq.s32.totalorder %s39, 0
      %p150 = por %p148, %p149
      %s152 = sadd.s32 %s151, 1
      %p155 = scmp.eq.s32.totalorder %s33, 1
      %p156 = scmp.ne.s32.totalorder %s151, %s153
      %p157 = scmp.eq.s32.totalorder %s33, 0
      %p158 = por %p156, %p157
      %p159 = scmp.ne.s32.totalorder %s151, %s153
      %p160 = scmp.eq.s32.totalorder %s38, 1
      %p161 = por %p159, %p160
      %p162 = scmp.ne.s32.totalorder %s153, %s154
      %p163 = scmp.eq.s32.totalorder %s38, 0
      %p164 = por %p162, %p163
      %p165 = scmp.ne.s32.totalorder %s153, %s154
      %p166 = scmp.eq.s32.totalorder %s39, 1
      %p167 = por %p165, %p166
      %p169 = scmp.ne.s32.totalorder %s154, %s168
      %p170 = scmp.eq.s32.totalorder %s39, 0
      %p171 = por %p169, %p170
      %s173 = sadd.s32 %s172, 1
      %p176 = scmp.eq.s32.totalorder %s33, 1
      %p177 = scmp.ne.s32.totalorder %s172, %s174
      %p178 = scmp.eq.s32.totalorder %s33, 0
      %p179 = por %p177, %p178
      %p180 = scmp.ne.s32.totalorder %s172, %s174
      %p181 = scmp.eq.s32.totalorder %s38, 1
      %p182 = por %p180, %p181
      %p183 = scmp.ne.s32.totalorder %s174, %s175
      %p184 = scmp.eq.s32.totalorder %s38, 0
      %p185 = por %p183, %p184
      %p186 = scmp.ne.s32.totalorder %s174, %s175
      %p187 = scmp.eq.s32.totalorder %s39, 1
      %p188 = por %p186, %p187
      %p190 = scmp.ne.s32.totalorder %s175, %s189
      %p191 = scmp.eq.s32.totalorder %s39, 0
      %p192 = por %p190, %p191
      %s194 = sadd.s32 %s193, 1
      %p197 = scmp.eq.s32.totalorder %s33, 1
      %p198 = scmp.ne.s32.totalorder %s193, %s195
      %p199 = scmp.eq.s32.totalorder %s33, 0
      %p200 = por %p198, %p199
      %p201 = scmp.ne.s32.totalorder %s193, %s195
      %p202 = scmp.eq.s32.totalorder %s38, 1
      %p203 = por %p201, %p202
      %p204 = scmp.ne.s32.totalorder %s195, %s196
      %p205 = scmp.eq.s32.totalorder %s38, 0
      %p206 = por %p204, %p205
      %p207 = scmp.ne.s32.totalorder %s195, %s196
      %p208 = scmp.eq.s32.totalorder %s39, 1
      %p209 = por %p207, %p208
      %p211 = scmp.ne.s32.totalorder %s196, %s210
      %p212 = scmp.eq.s32.totalorder %s39, 0
      %p213 = por %p211, %p212
      %s215 = sadd.s32 %s214, 1
      %p218 = scmp.eq.s32.totalorder %s33, 1
      %p219 = scmp.ne.s32.totalorder %s214, %s216
      %p220 = scmp.eq.s32.totalorder %s33, 0
      %p221 = por %p219, %p220
      %p222 = scmp.ne.s32.totalorder %s214, %s216
      %p223 = scmp.eq.s32.totalorder %s38, 1
      %p224 = por %p222, %p223
      %p225 = scmp.ne.s32.totalorder %s216, %s217
      %p226 = scmp.eq.s32.totalorder %s38, 0
      %p227 = por %p225, %p226
      %p228 = scmp.ne.s32.totalorder %s216, %s217
      %p229 = scmp.eq.s32.totalorder %s39, 1
      %p230 = por %p228, %p229
      %p232 = scmp.ne.s32.totalorder %s217, %s231
      %p233 = scmp.eq.s32.totalorder %s39, 0
      %p234 = por %p232, %p233
      %s236 = sadd.s32 %s235, 1
      %p239 = scmp.eq.s32.totalorder %s33, 1
      %p240 = scmp.ne.s32.totalorder %s235, %s237
      %p241 = scmp.eq.s32.totalorder %s33, 0
      %p242 = por %p240, %p241
      %p243 = scmp.ne.s32.totalorder %s235, %s237
      %p244 = scmp.eq.s32.totalorder %s38, 1
      %p245 = por %p243, %p244
      %p246 = scmp.ne.s32.totalorder %s237, %s238
      %p247 = scmp.eq.s32.totalorder %s38, 0
      %p248 = por %p246, %p247
      %p249 = scmp.ne.s32.totalorder %s237, %s238
      %p250 = scmp.eq.s32.totalorder %s39, 1
      %p251 = por %p249, %p250
      %p253 = scmp.ne.s32.totalorder %s238, %s252
      %p254 = scmp.eq.s32.totalorder %s39, 0
      %p255 = por %p253, %p254
      %s257 = sadd.s32 %s256, 1
      %p260 = scmp.eq.s32.totalorder %s33, 1
      %p261 = scmp.ne.s32.totalorder %s256, %s258
      %p262 = scmp.eq.s32.totalorder %s33, 0
      %p263 = por %p261, %p262
      %p264 = scmp.ne.s32.totalorder %s256, %s258
      %p265 = scmp.eq.s32.totalorder %s38, 1
      %p266 = por %p264, %p265
      %p267 = scmp.ne.s32.totalorder %s258, %s259
      %p268 = scmp.eq.s32.totalorder %s38, 0
      %p269 = por %p267, %p268
      %p270 = scmp.ne.s32.totalorder %s258, %s259
      %p271 = scmp.eq.s32.totalorder %s39, 1
      %p272 = por %p270, %p271
      %p274 = scmp.ne.s32.totalorder %s259, %s273
      %p275 = scmp.eq.s32.totalorder %s39, 0
      %p276 = por %p274, %p275
      %s278 = sadd.s32 %s277, 1
      %p281 = scmp.eq.s32.totalorder %s33, 1
      %p282 = scmp.ne.s32.totalorder %s277, %s279
      %p283 = scmp.eq.s32.totalorder %s33, 0
      %p284 = por %p282, %p283
      %p285 = scmp.ne.s32.totalorder %s277, %s279
      %p286 = scmp.eq.s32.totalorder %s38, 1
      %p287 = por %p285, %p286
      %p288 = scmp.ne.s32.totalorder %s279, %s280
      %p289 = scmp.eq.s32.totalorder %s38, 0
      %p290 = por %p288, %p289
      %p291 = scmp.ne.s32.totalorder %s279, %s280
      %p292 = scmp.eq.s32.totalorder %s39, 1
      %p293 = por %p291, %p292
      %p295 = scmp.ne.s32.totalorder %s280, %s294
      %p296 = scmp.eq.s32.totalorder %s39, 0
      %p297 = por %p295, %p296
      %s299 = sadd.s32 %s298, 1
      %p302 = scmp.eq.s32.totalorder %s33, 1
      %p303 = scmp.ne.s32.totalorder %s298, %s300
      %p304 = scmp.eq.s32.totalorder %s33, 0
      %p305 = por %p303, %p304
      %p306 = scmp.ne.s32.totalorder %s298, %s300
      %p307 = scmp.eq.s32.totalorder %s38, 1
      %p308 = por %p306, %p307
      %p309 = scmp.ne.s32.totalorder %s300, %s301
      %p310 = scmp.eq.s32.totalorder %s38, 0
      %p311 = por %p309, %p310
      %p312 = scmp.ne.s32.totalorder %s300, %s301
      %p313 = scmp.eq.s32.totalorder %s39, 1
      %p314 = por %p312, %p313
      %p316 = scmp.ne.s32.totalorder %s301, %s315
      %p317 = scmp.eq.s32.totalorder %s39, 0
      %p318 = por %p316, %p317
      %s319 = ssub.s32 %s33, %s40
      %p320 = scmp.eq.s32.totalorder %s319, 0
      %s322 = sadd.s32 %s321, 1
      %s323 = scalar_select %p320, %s321, %s322
      %p326 = pneg %p320
      %p327 = scmp.eq.s32.totalorder %s33, 1
      %p328 = por %p326, %p327
      %p329 = scmp.ne.s32.totalorder %s321, %s324
      %p330 = scmp.eq.s32.totalorder %s33, 0
      %p331 = por %p329, %p330
      %p332 = scmp.ne.s32.totalorder %s321, %s324
      %p333 = scmp.eq.s32.totalorder %s38, 1
      %p334 = por %p332, %p333
      %p335 = scmp.ne.s32.totalorder %s324, %s325
      %p336 = scmp.eq.s32.totalorder %s38, 0
      %p337 = por %p335, %p336
      %p338 = scmp.ne.s32.totalorder %s324, %s325
      %p339 = scmp.eq.s32.totalorder %s39, 1
      %p340 = por %p338, %p339
      %p342 = scmp.ne.s32.totalorder %s325, %s341
      %p343 = scmp.eq.s32.totalorder %s39, 0
      %p344 = por %p342, %p343
      %s345 = ssub.s32 %s33, %s40
      %p346 = scmp.eq.s32.totalorder %s345, 0
      %s348 = sadd.s32 %s347, 1
      %s349 = scalar_select %p346, %s347, %s348
      %p352 = pneg %p346
      %p353 = scmp.eq.s32.totalorder %s33, 1
      %p354 = por %p352, %p353
      %p355 = scmp.ne.s32.totalorder %s347, %s350
      %p356 = scmp.eq.s32.totalorder %s33, 0
      %p357 = por %p355, %p356
      %p358 = scmp.ne.s32.totalorder %s347, %s350
      %p359 = scmp.eq.s32.totalorder %s38, 1
      %p360 = por %p358, %p359
      %p361 = scmp.ne.s32.totalorder %s350, %s351
      %p362 = scmp.eq.s32.totalorder %s38, 0
      %p363 = por %p361, %p362
      %p364 = scmp.ne.s32.totalorder %s350, %s351
      %p365 = scmp.eq.s32.totalorder %s39, 1
      %p366 = por %p364, %p365
      %p368 = scmp.ne.s32.totalorder %s351, %s367
      %p369 = scmp.eq.s32.totalorder %s39, 0
      %p370 = por %p368, %p369
      %p371 = scmp.le.s32.totalorder 1, %s33
      %p372 = scmp.lt.s32.totalorder %s33, 3
      %p373 = pnand %p371, %p372
      %p374 = pneg %p373
      // Predicated region
      $region9: #{tpu_custom_call.1} parent=5 // pred_check
        _
      $region10: #{tpu_custom_call.1} parent=5 // pred_check_branch
        %376 = sbr.rel (%p373) target = $region12
      $region11: #{tpu_custom_call.1} parent=5 // pred_region
        %s377 = ssub.s32 %s33, 1
        // Predicated region
        $region13: #{tpu_custom_call.1} parent=11 // pred_check
          %p378 = pneg %p80
        $region14: #{tpu_custom_call.1} parent=11 // pred_check_branch
          %380 = sbr.rel (%p378) target = $region16
        $region15: #{tpu_custom_call.1} parent=11 // pred_region
          %s382 = ssub.s32 4096, 4096
          %383 = vsyncadd [#allocation6], %s382
          %s384 = sshll.u32 [#allocation5], 4
          %s385 = int_to_ptr.vmem [resolvable:$true] %s384
          %390 = dma.hbm_to_vmem [thread:$0]  %s1, 4096, %s385, [#allocation6], 128, 128, 8
        $region16: #{tpu_custom_call.1} parent=11 // pred_fallthru
          _
        // Predicated region
        $region17: #{tpu_custom_call.1} parent=11 // pred_check
          %p391 = pneg %p101
        $region18: #{tpu_custom_call.1} parent=11 // pred_check_branch
          %393 = sbr.rel (%p391) target = $region20
        $region19: #{tpu_custom_call.1} parent=11 // pred_region
          _
        $region20: #{tpu_custom_call.1} parent=11 // pred_fallthru
          _
        // Predicated region
        $region21: #{tpu_custom_call.1} parent=11 // pred_check
          %p394 = pneg %p122
        $region22: #{tpu_custom_call.1} parent=11 // pred_check_branch
          %396 = sbr.rel (%p394) target = $region24
        $region23: #{tpu_custom_call.1} parent=11 // pred_region
          %s398 = ssub.s32 512, 512
          %399 = vsyncadd [#allocation6], %s398
          %s400 = sshll.u32 [#allocation7], 4
          %s401 = int_to_ptr.vmem [resolvable:$true] %s400
          %406 = dma.hbm_to_vmem [thread:$0]  %s3, 512, %s401, [#allocation6], 64, 64, 4
        $region24: #{tpu_custom_call.1} parent=11 // pred_fallthru
          _
        // Predicated region
        $region25: #{tpu_custom_call.1} parent=11 // pred_check
          %p407 = pneg %p143
        $region26: #{tpu_custom_call.1} parent=11 // pred_check_branch
          %409 = sbr.rel (%p407) target = $region28
        $region27: #{tpu_custom_call.1} parent=11 // pred_region
          _
        $region28: #{tpu_custom_call.1} parent=11 // pred_fallthru
          _
        // Predicated region
        $region29: #{tpu_custom_call.1} parent=11 // pred_check
          %p410 = pneg %p164
        $region30: #{tpu_custom_call.1} parent=11 // pred_check_branch
          %412 = sbr.rel (%p410) target = $region32
        $region31: #{tpu_custom_call.1} parent=11 // pred_region
          %s414 = ssub.s32 1536, 1536
          %415 = vsyncadd [#allocation9], %s414
          %s416 = sshll.u32 [#allocation8], 4
          %s417 = int_to_ptr.vmem [resolvable:$true] %s416
          %422 = dma.hbm_to_vmem [thread:$0]  %s5, 1536, %s417, [#allocation9], 192, 192, 12
        $region32: #{tpu_custom_call.1} parent=11 // pred_fallthru
          _
        // Predicated region
        $region33: #{tpu_custom_call.1} parent=11 // pred_check
          %p423 = pneg %p185
        $region34: #{tpu_custom_call.1} parent=11 // pred_check_branch
          %425 = sbr.rel (%p423) target = $region36
        $region35: #{tpu_custom_call.1} parent=11 // pred_region
          _
        $region36: #{tpu_custom_call.1} parent=11 // pred_fallthru
          _
        // Predicated region
        $region37: #{tpu_custom_call.1} parent=11 // pred_check
          %p426 = pneg %p206
        $region38: #{tpu_custom_call.1} parent=11 // pred_check_branch
          %428 = sbr.rel (%p426) target = $region40
        $region39: #{tpu_custom_call.1} parent=11 // pred_region
          %s430 = ssub.s32 1024, 1024
          %431 = vsyncadd [#allocation9], %s430
          %s432 = sshll.u32 [#allocation10], 4
          %s433 = int_to_ptr.vmem [resolvable:$true] %s432
          %438 = dma.hbm_to_vmem [thread:$0]  %s7, 1024, %s433, [#allocation9], 64, 64, 4
        $region40: #{tpu_custom_call.1} parent=11 // pred_fallthru
          _
        // Predicated region
        $region41: #{tpu_custom_call.1} parent=11 // pred_check
          %p439 = pneg %p227
        $region42: #{tpu_custom_call.1} parent=11 // pred_check_branch
          %441 = sbr.rel (%p439) target = $region44
        $region43: #{tpu_custom_call.1} parent=11 // pred_region
          _
        $region44: #{tpu_custom_call.1} parent=11 // pred_fallthru
          _
        // Predicated region
        $region45: #{tpu_custom_call.1} parent=11 // pred_check
          %p442 = pneg %p248
        $region46: #{tpu_custom_call.1} parent=11 // pred_check_branch
          %444 = sbr.rel (%p442) target = $region48
        $region47: #{tpu_custom_call.1} parent=11 // pred_region
          %s446 = ssub.s32 1024, 1024
          %447 = vsyncadd [#allocation12], %s446
          %s448 = sshll.u32 [#allocation11], 4
          %s449 = int_to_ptr.vmem [resolvable:$true] %s448
          %454 = dma.hbm_to_vmem [thread:$0]  %s9, 1024, %s449, [#allocation12], 64, 64, 4
        $region48: #{tpu_custom_call.1} parent=11 // pred_fallthru
          _
        // Predicated region
        $region49: #{tpu_custom_call.1} parent=11 // pred_check
          %p455 = pneg %p269
        $region50: #{tpu_custom_call.1} parent=11 // pred_check_branch
          %457 = sbr.rel (%p455) target = $region52
        $region51: #{tpu_custom_call.1} parent=11 // pred_region
          _
        $region52: #{tpu_custom_call.1} parent=11 // pred_fallthru
          _
        // Predicated region
        $region53: #{tpu_custom_call.1} parent=11 // pred_check
          %p458 = pneg %p290
        $region54: #{tpu_custom_call.1} parent=11 // pred_check_branch
          %460 = sbr.rel (%p458) target = $region56
        $region55: #{tpu_custom_call.1} parent=11 // pred_region
          %s462 = ssub.s32 1024, 1024
          %463 = vsyncadd [#allocation12], %s462
          %s464 = sshll.u32 [#allocation13], 4
          %s465 = int_to_ptr.vmem [resolvable:$true] %s464
          %470 = dma.hbm_to_vmem [thread:$0]  %s11, 1024, %s465, [#allocation12], 128, 128, 8
        $region56: #{tpu_custom_call.1} parent=11 // pred_fallthru
          _
        // Predicated region
        $region57: #{tpu_custom_call.1} parent=11 // pred_check
          %p471 = pneg %p311
        $region58: #{tpu_custom_call.1} parent=11 // pred_check_branch
          %473 = sbr.rel (%p471) target = $region60
        $region59: #{tpu_custom_call.1} parent=11 // pred_region
          _
        $region60: #{tpu_custom_call.1} parent=11 // pred_fallthru
          _
      $region12: #{tpu_custom_call.1} parent=5 // pred_fallthru
        _
      %p474 = scmp.lt.s32.totalorder %s33, 2
      // Predicated region
      $region61: #{tpu_custom_call.1} parent=5 // pred_check
        %p475 = pneg %p474
      $region62: #{tpu_custom_call.1} parent=5 // pred_check_branch
        %477 = sbr.rel (%p475) target = $region64
      $region63: #{tpu_custom_call.1} parent=5 // pred_region
        // Predicated region
        $region65: #{tpu_custom_call.1} parent=63 // pred_check
          %p478 = pneg %p53
        $region66: #{tpu_custom_call.1} parent=63 // pred_check_branch
          %480 = sbr.rel (%p478) target = $region68
        $region67: #{tpu_custom_call.1} parent=63 // pred_region
          %s481 = sand.u32 %s43, 1
          %s482 = scalar_lea.sflag [#allocation3], %s481
          %s483 = sand.u32 %s43, 1
          %s484 = smul.addr %s483, 256
          %s485 = scalar_lea.vmem [#allocation2], %s484
          %s486 = smul.u32 16, %s33
          %s488 = ssub.s32 4096, 4096
          %489 = vsyncadd %s482, %s488
          %s490 = smul.addr %s486, 2
          %s491 = smul.addr %s490, 128
          %s492 = scalar_lea.hbm %s0, %s491
          %s493 = sshll.u32 %s485, 4
          %s494 = int_to_ptr.vmem [resolvable:$true] %s493
          %499 = dma.hbm_to_vmem [thread:$0]  %s492, 4096, %s494, %s482, 256, 256, 16
        $region68: #{tpu_custom_call.1} parent=63 // pred_fallthru
          _
      $region64: #{tpu_custom_call.1} parent=5 // pred_fallthru
        _
      %p500 = scmp.le.s32.totalorder 1, %s33
      %p501 = scmp.lt.s32.totalorder %s33, 3
      %p502 = pnand %p500, %p501
      %p503 = pneg %p502
      // Predicated region
      $region69: #{tpu_custom_call.1} parent=5 // pred_check
        _
      $region70: #{tpu_custom_call.1} parent=5 // pred_check_branch
        %505 = sbr.rel (%p502) target = $region72
      $region71: #{tpu_custom_call.1} parent=5 // pred_region
        %s506 = ssub.s32 %s33, 1
        %s507 = sand.u32 %s46, 1
        %s508 = scalar_lea.sflag [#allocation3], %s507
        %s509 = sand.u32 %s46, 1
        %s510 = smul.addr %s509, 256
        %s511 = scalar_lea.vmem [#allocation2], %s510
        // Predicated region
        $region73: #{tpu_custom_call.1} parent=71 // pred_check
          %p512 = pneg %p59
        $region74: #{tpu_custom_call.1} parent=71 // pred_check_branch
          %514 = sbr.rel (%p512) target = $region76
        $region75: #{tpu_custom_call.1} parent=71 // pred_region
          %515 = dma.done %s508, 4096
        $region76: #{tpu_custom_call.1} parent=71 // pred_fallthru
          _
        // Predicated region
        $region77: #{tpu_custom_call.1} parent=71 // pred_check
          %p516 = pneg %p80
        $region78: #{tpu_custom_call.1} parent=71 // pred_check_branch
          %518 = sbr.rel (%p516) target = $region80
        $region79: #{tpu_custom_call.1} parent=71 // pred_region
          %519 = dma.done [#allocation6], 4096
        $region80: #{tpu_custom_call.1} parent=71 // pred_fallthru
          _
        // Predicated region
        $region81: #{tpu_custom_call.1} parent=71 // pred_check
          %p520 = pneg %p122
        $region82: #{tpu_custom_call.1} parent=71 // pred_check_branch
          %522 = sbr.rel (%p520) target = $region84
        $region83: #{tpu_custom_call.1} parent=71 // pred_region
          %523 = dma.done [#allocation6], 512
        $region84: #{tpu_custom_call.1} parent=71 // pred_fallthru
          _
        // Predicated region
        $region85: #{tpu_custom_call.1} parent=71 // pred_check
          %p524 = pneg %p164
        $region86: #{tpu_custom_call.1} parent=71 // pred_check_branch
          %526 = sbr.rel (%p524) target = $region88
        $region87: #{tpu_custom_call.1} parent=71 // pred_region
          %527 = dma.done [#allocation9], 1536
        $region88: #{tpu_custom_call.1} parent=71 // pred_fallthru
          _
        // Predicated region
        $region89: #{tpu_custom_call.1} parent=71 // pred_check
          %p528 = pneg %p206
        $region90: #{tpu_custom_call.1} parent=71 // pred_check_branch
          %530 = sbr.rel (%p528) target = $region92
        $region91: #{tpu_custom_call.1} parent=71 // pred_region
          %531 = dma.done [#allocation9], 1024
        $region92: #{tpu_custom_call.1} parent=71 // pred_fallthru
          _
        // Predicated region
        $region93: #{tpu_custom_call.1} parent=71 // pred_check
          %p532 = pneg %p248
        $region94: #{tpu_custom_call.1} parent=71 // pred_check_branch
          %534 = sbr.rel (%p532) target = $region96
        $region95: #{tpu_custom_call.1} parent=71 // pred_region
          %535 = dma.done [#allocation12], 1024
        $region96: #{tpu_custom_call.1} parent=71 // pred_fallthru
          _
        // Predicated region
        $region97: #{tpu_custom_call.1} parent=71 // pred_check
          %p536 = pneg %p290
        $region98: #{tpu_custom_call.1} parent=71 // pred_check_branch
          %538 = sbr.rel (%p536) target = $region100
        $region99: #{tpu_custom_call.1} parent=71 // pred_region
          %539 = dma.done [#allocation12], 1024
        $region100: #{tpu_custom_call.1} parent=71 // pred_fallthru
          _
        %s540 = sand.u32 %s46, 1
        %s541 = scalar_lea.sflag [#allocation3], %s540
        %s542 = sand.u32 %s46, 1
        %s543 = smul.addr %s542, 256
        %s544 = scalar_lea.vmem [#allocation2], %s543
        %p545 = pneg %p59
        %p546 = pneg %p56
        %p547 = pneg %p80
        %p548 = pneg %p77
        %p549 = pneg %p101
        %p550 = pneg %p98
        %p551 = pneg %p122
        %p552 = pneg %p119
        %p553 = pneg %p143
        %p554 = pneg %p140
        %p555 = pneg %p164
        %p556 = pneg %p161
        %p557 = pneg %p185
        %p558 = pneg %p182
        %p559 = pneg %p206
        %p560 = pneg %p203
        %p561 = pneg %p227
        %p562 = pneg %p224
        %p563 = pneg %p248
        %p564 = pneg %p245
        %p565 = pneg %p269
        %p566 = pneg %p266
        %p567 = pneg %p290
        %p568 = pneg %p287
        %p569 = pneg %p311
        %p570 = pneg %p308
        %p571 = pneg %p337
        %p572 = pneg %p334
        %s573 = sand.u32 %s324, 1
        %s574 = scalar_lea.sflag [#allocation4], %s573
        %s575 = sand.u32 %s324, 1
        %s576 = smul.addr %s575, 256
        %s577 = scalar_lea.vmem [#allocation14], %s576
        %p578 = pneg %p363
        %p579 = pneg %p360
        %s580 = sand.u32 %s350, 1
        %s581 = scalar_lea.sflag [#allocation16], %s580
        %s582 = sand.u32 %s350, 1
        %s583 = smul.addr %s582, 256
        %s584 = scalar_lea.vmem [#allocation15], %s583
        %s585 = smul.u32 16, %s38
        %s586 = smul.u32 16, %s38
        %s587 = smul.u32 16, %s38
        %v589 = vld [vmem:[%s511] sm:$0xff]
        %v590 = vld [vmem:[%s511 + $0x8] sm:$0xff]
        %v591 = vld [vmem:[%s511 + $0x10] sm:$0xff]
        %v592 = vld [vmem:[%s511 + $0x18] sm:$0xff]
        %v593 = vld [vmem:[%s511 + $0x20] sm:$0xff]
        %v594 = vld [vmem:[%s511 + $0x28] sm:$0xff]
        %v595 = vld [vmem:[%s511 + $0x30] sm:$0xff]
        %v596 = vld [vmem:[%s511 + $0x38] sm:$0xff]
        %v597 = vld [vmem:[%s511 + $0x40] sm:$0xff]
        %v598 = vld [vmem:[%s511 + $0x48] sm:$0xff]
        %v599 = vld [vmem:[%s511 + $0x50] sm:$0xff]
        %v600 = vld [vmem:[%s511 + $0x58] sm:$0xff]
        %v601 = vld [vmem:[%s511 + $0x60] sm:$0xff]
        %v602 = vld [vmem:[%s511 + $0x68] sm:$0xff]
        %v603 = vld [vmem:[%s511 + $0x70] sm:$0xff]
        %v604 = vld [vmem:[%s511 + $0x78] sm:$0xff]
        %v605 = vld [vmem:[%s511 + $0x80] sm:$0xff]
        %v606 = vld [vmem:[%s511 + $0x88] sm:$0xff]
        %v607 = vld [vmem:[%s511 + $0x90] sm:$0xff]
        %v608 = vld [vmem:[%s511 + $0x98] sm:$0xff]
        %v609 = vld [vmem:[%s511 + $0xa0] sm:$0xff]
        %v610 = vld [vmem:[%s511 + $0xa8] sm:$0xff]
        %v611 = vld [vmem:[%s511 + $0xb0] sm:$0xff]
        %v612 = vld [vmem:[%s511 + $0xb8] sm:$0xff]
        %v613 = vld [vmem:[%s511 + $0xc0] sm:$0xff]
        %v614 = vld [vmem:[%s511 + $0xc8] sm:$0xff]
        %v615 = vld [vmem:[%s511 + $0xd0] sm:$0xff]
        %v616 = vld [vmem:[%s511 + $0xd8] sm:$0xff]
        %v617 = vld [vmem:[%s511 + $0xe0] sm:$0xff]
        %v618 = vld [vmem:[%s511 + $0xe8] sm:$0xff]
        %v619 = vld [vmem:[%s511 + $0xf0] sm:$0xff]
        %v620 = vld [vmem:[%s511 + $0xf8] sm:$0xff]
        %v621 = vmul.f32 %v589, %v589
        %v622 = vmul.f32 %v590, %v590
        %v623 = vmul.f32 %v591, %v591
        %v624 = vmul.f32 %v592, %v592
        %v625 = vmul.f32 %v593, %v593
        %v626 = vmul.f32 %v594, %v594
        %v627 = vmul.f32 %v595, %v595
        %v628 = vmul.f32 %v596, %v596
        %v629 = vmul.f32 %v597, %v597
        %v630 = vmul.f32 %v598, %v598
        %v631 = vmul.f32 %v599, %v599
        %v632 = vmul.f32 %v600, %v600
        %v633 = vmul.f32 %v601, %v601
        %v634 = vmul.f32 %v602, %v602
        %v635 = vmul.f32 %v603, %v603
        %v636 = vmul.f32 %v604, %v604
        %v637 = vmul.f32 %v605, %v605
        %v638 = vmul.f32 %v606, %v606
        %v639 = vmul.f32 %v607, %v607
        %v640 = vmul.f32 %v608, %v608
        %v641 = vmul.f32 %v609, %v609
        %v642 = vmul.f32 %v610, %v610
        %v643 = vmul.f32 %v611, %v611
        %v644 = vmul.f32 %v612, %v612
        %v645 = vmul.f32 %v613, %v613
        %v646 = vmul.f32 %v614, %v614
        %v647 = vmul.f32 %v615, %v615
        %v648 = vmul.f32 %v616, %v616
        %v649 = vmul.f32 %v617, %v617
        %v650 = vmul.f32 %v618, %v618
        %v651 = vmul.f32 %v619, %v619
        %v652 = vmul.f32 %v620, %v620
        %v653 = vadd.f32 %v621, %v622
        %654 = vadd.xlane.f32.xlu0 %v653
        %v655 = vpop.xlane.xlu0 %654
        %v656 = vadd.f32 %v623, %v624
        %657 = vadd.xlane.f32.xlu0 %v656
        %v658 = vpop.xlane.xlu0 %657
        %v659 = vadd.f32 %v625, %v626
        %660 = vadd.xlane.f32.xlu0 %v659
        %v661 = vpop.xlane.xlu0 %660
        %v662 = vadd.f32 %v627, %v628
        %663 = vadd.xlane.f32.xlu0 %v662
        %v664 = vpop.xlane.xlu0 %663
        %v665 = vadd.f32 %v629, %v630
        %666 = vadd.xlane.f32.xlu0 %v665
        %v667 = vpop.xlane.xlu0 %666
        %v668 = vadd.f32 %v631, %v632
        %669 = vadd.xlane.f32.xlu0 %v668
        %v670 = vpop.xlane.xlu0 %669
        %v671 = vadd.f32 %v633, %v634
        %672 = vadd.xlane.f32.xlu0 %v671
        %v673 = vpop.xlane.xlu0 %672
        %v674 = vadd.f32 %v635, %v636
        %675 = vadd.xlane.f32.xlu0 %v674
        %v676 = vpop.xlane.xlu0 %675
        %v677 = vadd.f32 %v637, %v638
        %678 = vadd.xlane.f32.xlu0 %v677
        %v679 = vpop.xlane.xlu0 %678
        %v680 = vadd.f32 %v639, %v640
        %681 = vadd.xlane.f32.xlu0 %v680
        %v682 = vpop.xlane.xlu0 %681
        %v683 = vadd.f32 %v641, %v642
        %684 = vadd.xlane.f32.xlu0 %v683
        %v685 = vpop.xlane.xlu0 %684
        %v686 = vadd.f32 %v643, %v644
        %687 = vadd.xlane.f32.xlu0 %v686
        %v688 = vpop.xlane.xlu0 %687
        %v689 = vadd.f32 %v645, %v646
        %690 = vadd.xlane.f32.xlu0 %v689
        %v691 = vpop.xlane.xlu0 %690
        %v692 = vadd.f32 %v647, %v648
        %693 = vadd.xlane.f32.xlu0 %v692
        %v694 = vpop.xlane.xlu0 %693
        %v695 = vadd.f32 %v649, %v650
        %696 = vadd.xlane.f32.xlu0 %v695
        %v697 = vpop.xlane.xlu0 %696
        %v698 = vadd.f32 %v651, %v652
        %699 = vadd.xlane.f32.xlu0 %v698
        %v700 = vpop.xlane.xlu0 %699
        %v701 = vmax.f32 %v655, 1e-24
        %v702 = vmax.f32 %v658, 1e-24
        %v703 = vmax.f32 %v661, 1e-24
        %v704 = vmax.f32 %v664, 1e-24
        %v705 = vmax.f32 %v667, 1e-24
        %v706 = vmax.f32 %v670, 1e-24
        %v707 = vmax.f32 %v673, 1e-24
        %v708 = vmax.f32 %v676, 1e-24
        %v709 = vmax.f32 %v679, 1e-24
        %v710 = vmax.f32 %v682, 1e-24
        %v711 = vmax.f32 %v685, 1e-24
        %v712 = vmax.f32 %v688, 1e-24
        %v713 = vmax.f32 %v691, 1e-24
        %v714 = vmax.f32 %v694, 1e-24
        %v715 = vmax.f32 %v697, 1e-24
        %v716 = vmax.f32 %v700, 1e-24
        %v717 = vrsqrt.pop %v701
        %v718 = vrsqrt.pop %v702
        %v719 = vrsqrt.pop %v703
        %v720 = vrsqrt.pop %v704
        %v721 = vrsqrt.pop %v705
        %v722 = vrsqrt.pop %v706
        %v723 = vrsqrt.pop %v707
        %v724 = vrsqrt.pop %v708
        %v725 = vrsqrt.pop %v709
        %v726 = vrsqrt.pop %v710
        %v727 = vrsqrt.pop %v711
        %v728 = vrsqrt.pop %v712
        %v729 = vrsqrt.pop %v713
        %v730 = vrsqrt.pop %v714
        %v731 = vrsqrt.pop %v715
        %v732 = vrsqrt.pop %v716
        %v733 = vmul.f32 %v589, %v717
        %v734 = vmul.f32 %v590, %v717
        %v735 = vmul.f32 %v591, %v718
        %v736 = vmul.f32 %v592, %v718
        %v737 = vmul.f32 %v593, %v719
        %v738 = vmul.f32 %v594, %v719
        %v739 = vmul.f32 %v595, %v720
        %v740 = vmul.f32 %v596, %v720
        %v741 = vmul.f32 %v597, %v721
        %v742 = vmul.f32 %v598, %v721
        %v743 = vmul.f32 %v599, %v722
        %v744 = vmul.f32 %v600, %v722
        %v745 = vmul.f32 %v601, %v723
        %v746 = vmul.f32 %v602, %v723
        %v747 = vmul.f32 %v603, %v724
        %v748 = vmul.f32 %v604, %v724
        %v749 = vmul.f32 %v605, %v725
        %v750 = vmul.f32 %v606, %v725
        %v751 = vmul.f32 %v607, %v726
        %v752 = vmul.f32 %v608, %v726
        %v753 = vmul.f32 %v609, %v727
        %v754 = vmul.f32 %v610, %v727
        %v755 = vmul.f32 %v611, %v728
        %v756 = vmul.f32 %v612, %v728
        %v757 = vmul.f32 %v613, %v729
        %v758 = vmul.f32 %v614, %v729
        %v759 = vmul.f32 %v615, %v730
        %v760 = vmul.f32 %v616, %v730
        %v761 = vmul.f32 %v617, %v731
        %v762 = vmul.f32 %v618, %v731
        %v763 = vmul.f32 %v619, %v732
        %v764 = vmul.f32 %v620, %v732
        %v765 = vpack.c.bf16 %v735, %v733
        %v766 = vpack.c.bf16 %v736, %v734
        %v767 = vpack.c.bf16 %v739, %v737
        %v768 = vpack.c.bf16 %v740, %v738
        %v769 = vpack.c.bf16 %v743, %v741
        %v770 = vpack.c.bf16 %v744, %v742
        %v771 = vpack.c.bf16 %v747, %v745
        %v772 = vpack.c.bf16 %v748, %v746
        %v773 = vpack.c.bf16 %v751, %v749
        %v774 = vpack.c.bf16 %v752, %v750
        %v775 = vpack.c.bf16 %v755, %v753
        %v776 = vpack.c.bf16 %v756, %v754
        %v777 = vpack.c.bf16 %v759, %v757
        %v778 = vpack.c.bf16 %v760, %v758
        %v779 = vpack.c.bf16 %v763, %v761
        %v780 = vpack.c.bf16 %v764, %v762
        %v781 = vld [vmem:[#allocation5] sm:$0xff]
        %v782 = vld [vmem:[#allocation5 + $0x8] sm:$0xff]
        %v783 = vld [vmem:[#allocation5 + $0x10] sm:$0xff]
        %v784 = vld [vmem:[#allocation5 + $0x18] sm:$0xff]
        %v785 = vld [vmem:[#allocation5 + $0x20] sm:$0xff]
        %v786 = vld [vmem:[#allocation5 + $0x28] sm:$0xff]
        %v787 = vld [vmem:[#allocation5 + $0x30] sm:$0xff]
        %v788 = vld [vmem:[#allocation5 + $0x38] sm:$0xff]
        %v789 = vld [vmem:[#allocation5 + $0x40] sm:$0xff]
        %v790 = vld [vmem:[#allocation5 + $0x48] sm:$0xff]
        %v791 = vld [vmem:[#allocation5 + $0x50] sm:$0xff]
        %v792 = vld [vmem:[#allocation5 + $0x58] sm:$0xff]
        %v793 = vld [vmem:[#allocation5 + $0x60] sm:$0xff]
        %v794 = vld [vmem:[#allocation5 + $0x68] sm:$0xff]
        %v795 = vld [vmem:[#allocation5 + $0x70] sm:$0xff]
        %v796 = vld [vmem:[#allocation5 + $0x78] sm:$0xff]
        %v797 = vld [vmem:[#allocation5 + $0x80] sm:$0xff]
        %v798 = vld [vmem:[#allocation5 + $0x88] sm:$0xff]
        %v799 = vld [vmem:[#allocation5 + $0x90] sm:$0xff]
        %v800 = vld [vmem:[#allocation5 + $0x98] sm:$0xff]
        %v801 = vld [vmem:[#allocation5 + $0xa0] sm:$0xff]
        %v802 = vld [vmem:[#allocation5 + $0xa8] sm:$0xff]
        %v803 = vld [vmem:[#allocation5 + $0xb0] sm:$0xff]
        %v804 = vld [vmem:[#allocation5 + $0xb8] sm:$0xff]
        %v805 = vld [vmem:[#allocation5 + $0xc0] sm:$0xff]
        %v806 = vld [vmem:[#allocation5 + $0xc8] sm:$0xff]
        %v807 = vld [vmem:[#allocation5 + $0xd0] sm:$0xff]
        %v808 = vld [vmem:[#allocation5 + $0xd8] sm:$0xff]
        %v809 = vld [vmem:[#allocation5 + $0xe0] sm:$0xff]
        %v810 = vld [vmem:[#allocation5 + $0xe8] sm:$0xff]
        %v811 = vld [vmem:[#allocation5 + $0xf0] sm:$0xff]
        %v812 = vld [vmem:[#allocation5 + $0xf8] sm:$0xff]
        %v813 = vld [vmem:[%s2] sm:$0x3]
        %v815 = vlaneseq
        %v816 = vshrl.u32 %v815, 7
        %v817 = vsub.s32 0, %v816
        %v818 = vrot.slane %v813, %v817
        %v819 = vlaneseq
        %v820 = vshrl.u32 %v819, 7
        %v821 = vsub.s32 1, %v820
        %v822 = vrot.slane %v813, %v821
        %v857 = vunpack.c.l.b16 %v781
        %v858 = vunpack.c.h.b16 %v781
        %v859 = vunpack.c.l.b16 %v782
        %v860 = vunpack.c.h.b16 %v782
        %v861 = vunpack.c.l.b16 %v783
        %v862 = vunpack.c.h.b16 %v783
        %v863 = vunpack.c.l.b16 %v784
        %v864 = vunpack.c.h.b16 %v784
        %v865 = vunpack.c.l.b16 %v785
        %v866 = vunpack.c.h.b16 %v785
        %v867 = vunpack.c.l.b16 %v786
        %v868 = vunpack.c.h.b16 %v786
        %v869 = vunpack.c.l.b16 %v787
        %v870 = vunpack.c.h.b16 %v787
        %v871 = vunpack.c.l.b16 %v788
        %v872 = vunpack.c.h.b16 %v788
        %v873 = vunpack.c.l.b16 %v789
        %v874 = vunpack.c.h.b16 %v789
        %v875 = vunpack.c.l.b16 %v790
        %v876 = vunpack.c.h.b16 %v790
        %v877 = vunpack.c.l.b16 %v791
        %v878 = vunpack.c.h.b16 %v791
        %v879 = vunpack.c.l.b16 %v792
        %v880 = vunpack.c.h.b16 %v792
        %v881 = vunpack.c.l.b16 %v793
        %v882 = vunpack.c.h.b16 %v793
        %v883 = vunpack.c.l.b16 %v794
        %v884 = vunpack.c.h.b16 %v794
        %v885 = vunpack.c.l.b16 %v795
        %v886 = vunpack.c.h.b16 %v795
        %v887 = vunpack.c.l.b16 %v796
        %v888 = vunpack.c.h.b16 %v796
        %v889 = vunpack.c.l.b16 %v797
        %v890 = vunpack.c.h.b16 %v797
        %v891 = vunpack.c.l.b16 %v798
        %v892 = vunpack.c.h.b16 %v798
        %v893 = vunpack.c.l.b16 %v799
        %v894 = vunpack.c.h.b16 %v799
        %v895 = vunpack.c.l.b16 %v800
        %v896 = vunpack.c.h.b16 %v800
        %v897 = vunpack.c.l.b16 %v801
        %v898 = vunpack.c.h.b16 %v801
        %v899 = vunpack.c.l.b16 %v802
        %v900 = vunpack.c.h.b16 %v802
        %v901 = vunpack.c.l.b16 %v803
        %v902 = vunpack.c.h.b16 %v803
        %v903 = vunpack.c.l.b16 %v804
        %v904 = vunpack.c.h.b16 %v804
        %v905 = vunpack.c.l.b16 %v805
        %v906 = vunpack.c.h.b16 %v805
        %v907 = vunpack.c.l.b16 %v806
        %v908 = vunpack.c.h.b16 %v806
        %v909 = vunpack.c.l.b16 %v807
        %v910 = vunpack.c.h.b16 %v807
        %v911 = vunpack.c.l.b16 %v808
        %v912 = vunpack.c.h.b16 %v808
        %v913 = vunpack.c.l.b16 %v809
        %v914 = vunpack.c.h.b16 %v809
        %v915 = vunpack.c.l.b16 %v810
        %v916 = vunpack.c.h.b16 %v810
        %v917 = vunpack.c.l.b16 %v811
        %v918 = vunpack.c.h.b16 %v811
        %v919 = vunpack.c.l.b16 %v812
        %v920 = vunpack.c.h.b16 %v812
        %v921 = vpack.c.b16 %v859, %v857
        %v922 = vpack.c.b16 %v860, %v858
        %v923 = vpack.c.b16 %v863, %v861
        %v924 = vpack.c.b16 %v864, %v862
        %v925 = vpack.c.b16 %v867, %v865
        %v926 = vpack.c.b16 %v868, %v866
        %v927 = vpack.c.b16 %v871, %v869
        %v928 = vpack.c.b16 %v872, %v870
        %v929 = vpack.c.b16 %v875, %v873
        %v930 = vpack.c.b16 %v876, %v874
        %v931 = vpack.c.b16 %v879, %v877
        %v932 = vpack.c.b16 %v880, %v878
        %v933 = vpack.c.b16 %v883, %v881
        %v934 = vpack.c.b16 %v884, %v882
        %v935 = vpack.c.b16 %v887, %v885
        %v936 = vpack.c.b16 %v888, %v886
        %v937 = vpack.c.b16 %v891, %v889
        %v938 = vpack.c.b16 %v892, %v890
        %v939 = vpack.c.b16 %v895, %v893
        %v940 = vpack.c.b16 %v896, %v894
        %v941 = vpack.c.b16 %v899, %v897
        %v942 = vpack.c.b16 %v900, %v898
        %v943 = vpack.c.b16 %v903, %v901
        %v944 = vpack.c.b16 %v904, %v902
        %v945 = vpack.c.b16 %v907, %v905
        %v946 = vpack.c.b16 %v908, %v906
        %v947 = vpack.c.b16 %v911, %v909
        %v948 = vpack.c.b16 %v912, %v910
        %v949 = vpack.c.b16 %v915, %v913
        %v950 = vpack.c.b16 %v916, %v914
        %v951 = vpack.c.b16 %v919, %v917
        %v952 = vpack.c.b16 %v920, %v918
        %985 = vmatprep.subr.bf16.mxu0 %v922
        %986 = vmatpush1.bf16.msra.mxu0 %v921
        %987 = vmatprep.subr.bf16.mxu0 %v924
        %988 = vmatpush1.bf16.msra.mxu0 %v923
        %989 = vmatprep.subr.bf16.mxu0 %v926
        %990 = vmatpush1.bf16.msra.mxu0 %v925
        %991 = vmatprep.subr.bf16.mxu0 %v928
        %992 = vmatpush1.bf16.msra.mxu0 %v927
        %993 = vmatprep.subr.bf16.mxu0 %v930
        %994 = vmatpush1.bf16.msra.mxu0 %v929
        %995 = vmatprep.subr.bf16.mxu0 %v932
        %996 = vmatpush1.bf16.msra.mxu0 %v931
        %997 = vmatprep.subr.bf16.mxu0 %v934
        %998 = vmatpush1.bf16.msra.mxu0 %v933
        %999 = vmatprep.subr.bf16.mxu0 %v936
        %1000 = vmatpush1.bf16.msra.mxu0 %v935
        %1001 = vmatprep.subr.bf16.mxu0 %v938
        %1002 = vmatpush1.bf16.msra.mxu0 %v937
        %1003 = vmatprep.subr.bf16.mxu0 %v940
        %1004 = vmatpush1.bf16.msra.mxu0 %v939
        %1005 = vmatprep.subr.bf16.mxu0 %v942
        %1006 = vmatpush1.bf16.msra.mxu0 %v941
        %1007 = vmatprep.subr.bf16.mxu0 %v944
        %1008 = vmatpush1.bf16.msra.mxu0 %v943
        %1009 = vmatprep.subr.bf16.mxu0 %v946
        %1010 = vmatpush1.bf16.msra.mxu0 %v945
        %1011 = vmatprep.subr.bf16.mxu0 %v948
        %1012 = vmatpush1.bf16.msra.mxu0 %v947
        %1013 = vmatprep.subr.bf16.mxu0 %v950
        %1014 = vmatpush1.bf16.msra.mxu0 %v949
        %1015 = vmatprep.subr.bf16.mxu0 %v952
        %1016 = vmatpush1.bf16.msra.mxu0 %v951
        %1017 = vmatprep.mubr.bf16.mxu0 %v766
        %1018 = vmatmul.mubr.bf16.gmra.mrb[0].mxu0 %v765
        %v1019 = vpop.f32.mrb[0].mxu0
        %v1020 = vadd.f32 %v818, %v1019
        %v1021 = vpop.f32.mrb[0].mxu0
        %v1022 = vadd.f32 %v822, %v1021
        %v1023 = vpop.f32.mrb[0].mxu0
        %v1024 = vadd.f32 %v818, %v1023
        %v1025 = vpop.f32.mrb[0].mxu0
        %v1026 = vadd.f32 %v822, %v1025
        %1027 = vmatprep.mubr.bf16.mxu0 %v768
        %1028 = vmatmul.mubr.bf16.gmra.mrb[0].mxu0 %v767
        %v1029 = vpop.f32.mrb[0].mxu0
        %v1030 = vadd.f32 %v818, %v1029
        %v1031 = vpop.f32.mrb[0].mxu0
        %v1032 = vadd.f32 %v822, %v1031
        %v1033 = vpop.f32.mrb[0].mxu0
        %v1034 = vadd.f32 %v818, %v1033
        %v1035 = vpop.f32.mrb[0].mxu0
        %v1036 = vadd.f32 %v822, %v1035
        %1037 = vmatprep.mubr.bf16.mxu0 %v770
        %1038 = vmatmul.mubr.bf16.gmra.mrb[0].mxu0 %v769
        %v1039 = vpop.f32.mrb[0].mxu0
        %v1040 = vadd.f32 %v818, %v1039
        %v1041 = vpop.f32.mrb[0].mxu0
        %v1042 = vadd.f32 %v822, %v1041
        %v1043 = vpop.f32.mrb[0].mxu0
        %v1044 = vadd.f32 %v818, %v1043
        %v1045 = vpop.f32.mrb[0].mxu0
        %v1046 = vadd.f32 %v822, %v1045
        %1047 = vmatprep.mubr.bf16.mxu0 %v772
        %1048 = vmatmul.mubr.bf16.gmra.mrb[0].mxu0 %v771
        %v1049 = vpop.f32.mrb[0].mxu0
        %v1050 = vadd.f32 %v818, %v1049
        %v1051 = vpop.f32.mrb[0].mxu0
        %v1052 = vadd.f32 %v822, %v1051
        %v1053 = vpop.f32.mrb[0].mxu0
        %v1054 = vadd.f32 %v818, %v1053
        %v1055 = vpop.f32.mrb[0].mxu0
        %v1056 = vadd.f32 %v822, %v1055
        %1057 = vmatprep.mubr.bf16.mxu0 %v774
        %1058 = vmatmul.mubr.bf16.gmra.mrb[0].mxu0 %v773
        %v1059 = vpop.f32.mrb[0].mxu0
        %v1060 = vadd.f32 %v818, %v1059
        %v1061 = vpop.f32.mrb[0].mxu0
        %v1062 = vadd.f32 %v822, %v1061
        %v1063 = vpop.f32.mrb[0].mxu0
        %v1064 = vadd.f32 %v818, %v1063
        %v1065 = vpop.f32.mrb[0].mxu0
        %v1066 = vadd.f32 %v822, %v1065
        %1067 = vmatprep.mubr.bf16.mxu0 %v776
        %1068 = vmatmul.mubr.bf16.gmra.mrb[0].mxu0 %v775
        %v1069 = vpop.f32.mrb[0].mxu0
        %v1070 = vadd.f32 %v818, %v1069
        %v1071 = vpop.f32.mrb[0].mxu0
        %v1072 = vadd.f32 %v822, %v1071
        %v1073 = vpop.f32.mrb[0].mxu0
        %v1074 = vadd.f32 %v818, %v1073
        %v1075 = vpop.f32.mrb[0].mxu0
        %v1076 = vadd.f32 %v822, %v1075
        %1077 = vmatprep.mubr.bf16.mxu0 %v778
        %1078 = vmatmul.mubr.bf16.gmra.mrb[0].mxu0 %v777
        %v1079 = vpop.f32.mrb[0].mxu0
        %v1080 = vadd.f32 %v818, %v1079
        %v1081 = vpop.f32.mrb[0].mxu0
        %v1082 = vadd.f32 %v822, %v1081
        %v1083 = vpop.f32.mrb[0].mxu0
        %v1084 = vadd.f32 %v818, %v1083
        %v1085 = vpop.f32.mrb[0].mxu0
        %v1086 = vadd.f32 %v822, %v1085
        %1087 = vmatprep.mubr.bf16.mxu0 %v780
        %1088 = vmatmul.mubr.bf16.gmra.mrb[0].mxu0 %v779
        %v1089 = vpop.f32.mrb[0].mxu0
        %v1090 = vadd.f32 %v818, %v1089
        %v1091 = vpop.f32.mrb[0].mxu0
        %v1092 = vadd.f32 %v822, %v1091
        %v1093 = vpop.f32.mrb[0].mxu0
        %v1094 = vadd.f32 %v818, %v1093
        %v1095 = vpop.f32.mrb[0].mxu0
        %v1096 = vadd.f32 %v822, %v1095
        %1097 = vdwg.mxu0
        %v1098 = vtanh.pop %v1020
        %v1099 = vtanh.pop %v1024
        %v1100 = vtanh.pop %v1030
        %v1101 = vtanh.pop %v1034
        %v1102 = vtanh.pop %v1040
        %v1103 = vtanh.pop %v1044
        %v1104 = vtanh.pop %v1050
        %v1105 = vtanh.pop %v1054
        %v1106 = vtanh.pop %v1060
        %v1107 = vtanh.pop %v1064
        %v1108 = vtanh.pop %v1070
        %v1109 = vtanh.pop %v1074
        %v1110 = vtanh.pop %v1080
        %v1111 = vtanh.pop %v1084
        %v1112 = vtanh.pop %v1090
        %v1113 = vtanh.pop %v1094
        %v1114 = vxor.u32 %v1020, 2147483648
        %v1115 = vxor.u32 %v1024, 2147483648
        %v1116 = vxor.u32 %v1030, 2147483648
        %v1117 = vxor.u32 %v1034, 2147483648
        %v1118 = vxor.u32 %v1040, 2147483648
        %v1119 = vxor.u32 %v1044, 2147483648
        %v1120 = vxor.u32 %v1050, 2147483648
        %v1121 = vxor.u32 %v1054, 2147483648
        %v1122 = vxor.u32 %v1060, 2147483648
        %v1123 = vxor.u32 %v1064, 2147483648
        %v1124 = vxor.u32 %v1070, 2147483648
        %v1125 = vxor.u32 %v1074, 2147483648
        %v1126 = vxor.u32 %v1080, 2147483648
        %v1127 = vxor.u32 %v1084, 2147483648
        %v1128 = vxor.u32 %v1090, 2147483648
        %v1129 = vxor.u32 %v1094, 2147483648
        %v1130 = vmul.f32 %v1114, 1.442695
        %v1131 = vpow.pop %v1130
        %v1132 = vmul.f32 %v1115, 1.442695
        %v1133 = vpow.pop %v1132
        %v1134 = vmul.f32 %v1116, 1.442695
        %v1135 = vpow.pop %v1134
        %v1136 = vmul.f32 %v1117, 1.442695
        %v1137 = vpow.pop %v1136
        %v1138 = vmul.f32 %v1118, 1.442695
        %v1139 = vpow.pop %v1138
        %v1140 = vmul.f32 %v1119, 1.442695
        %v1141 = vpow.pop %v1140
        %v1142 = vmul.f32 %v1120, 1.442695
        %v1143 = vpow.pop %v1142
        %v1144 = vmul.f32 %v1121, 1.442695
        %v1145 = vpow.pop %v1144
        %v1146 = vmul.f32 %v1122, 1.442695
        %v1147 = vpow.pop %v1146
        %v1148 = vmul.f32 %v1123, 1.442695
        %v1149 = vpow.pop %v1148
        %v1150 = vmul.f32 %v1124, 1.442695
        %v1151 = vpow.pop %v1150
        %v1152 = vmul.f32 %v1125, 1.442695
        %v1153 = vpow.pop %v1152
        %v1154 = vmul.f32 %v1126, 1.442695
        %v1155 = vpow.pop %v1154
        %v1156 = vmul.f32 %v1127, 1.442695
        %v1157 = vpow.pop %v1156
        %v1158 = vmul.f32 %v1128, 1.442695
        %v1159 = vpow.pop %v1158
        %v1160 = vmul.f32 %v1129, 1.442695
        %v1161 = vpow.pop %v1160
        %v1162 = vadd.f32 %v1131, 1.0
        %v1163 = vadd.f32 %v1133, 1.0
        %v1164 = vadd.f32 %v1135, 1.0
        %v1165 = vadd.f32 %v1137, 1.0
        %v1166 = vadd.f32 %v1139, 1.0
        %v1167 = vadd.f32 %v1141, 1.0
        %v1168 = vadd.f32 %v1143, 1.0
        %v1169 = vadd.f32 %v1145, 1.0
        %v1170 = vadd.f32 %v1147, 1.0
        %v1171 = vadd.f32 %v1149, 1.0
        %v1172 = vadd.f32 %v1151, 1.0
        %v1173 = vadd.f32 %v1153, 1.0
        %v1174 = vadd.f32 %v1155, 1.0
        %v1175 = vadd.f32 %v1157, 1.0
        %v1176 = vadd.f32 %v1159, 1.0
        %v1177 = vadd.f32 %v1161, 1.0
        %v1178 = vrcp.pop %v1162
        %v1179 = vmul.f32 1.0, %v1178
        %v1180 = vrcp.pop %v1163
        %v1181 = vmul.f32 1.0, %v1180
        %v1182 = vrcp.pop %v1164
        %v1183 = vmul.f32 1.0, %v1182
        %v1184 = vrcp.pop %v1165
        %v1185 = vmul.f32 1.0, %v1184
        %v1186 = vrcp.pop %v1166
        %v1187 = vmul.f32 1.0, %v1186
        %v1188 = vrcp.pop %v1167
        %v1189 = vmul.f32 1.0, %v1188
        %v1190 = vrcp.pop %v1168
        %v1191 = vmul.f32 1.0, %v1190
        %v1192 = vrcp.pop %v1169
        %v1193 = vmul.f32 1.0, %v1192
        %v1194 = vrcp.pop %v1170
        %v1195 = vmul.f32 1.0, %v1194
        %v1196 = vrcp.pop %v1171
        %v1197 = vmul.f32 1.0, %v1196
        %v1198 = vrcp.pop %v1172
        %v1199 = vmul.f32 1.0, %v1198
        %v1200 = vrcp.pop %v1173
        %v1201 = vmul.f32 1.0, %v1200
        %v1202 = vrcp.pop %v1174
        %v1203 = vmul.f32 1.0, %v1202
        %v1204 = vrcp.pop %v1175
        %v1205 = vmul.f32 1.0, %v1204
        %v1206 = vrcp.pop %v1176
        %v1207 = vmul.f32 1.0, %v1206
        %v1208 = vrcp.pop %v1177
        %v1209 = vmul.f32 1.0, %v1208
        %1226 = vrot.lane.b32.xlu0 %v1179, 64
        %v1227 = vpop.permute.xlu0 %1226
        %1228 = vrot.lane.b32.xlu0 %v1181, 64
        %v1229 = vpop.permute.xlu0 %1228
        %1230 = vrot.lane.b32.xlu0 %v1183, 64
        %v1231 = vpop.permute.xlu0 %1230
        %1232 = vrot.lane.b32.xlu0 %v1185, 64
        %v1233 = vpop.permute.xlu0 %1232
        %1234 = vrot.lane.b32.xlu0 %v1187, 64
        %v1235 = vpop.permute.xlu0 %1234
        %1236 = vrot.lane.b32.xlu0 %v1189, 64
        %v1237 = vpop.permute.xlu0 %1236
        %1238 = vrot.lane.b32.xlu0 %v1191, 64
        %v1239 = vpop.permute.xlu0 %1238
        %1240 = vrot.lane.b32.xlu0 %v1193, 64
        %v1241 = vpop.permute.xlu0 %1240
        %1242 = vrot.lane.b32.xlu0 %v1195, 64
        %v1243 = vpop.permute.xlu0 %1242
        %1244 = vrot.lane.b32.xlu0 %v1197, 64
        %v1245 = vpop.permute.xlu0 %1244
        %1246 = vrot.lane.b32.xlu0 %v1199, 64
        %v1247 = vpop.permute.xlu0 %1246
        %1248 = vrot.lane.b32.xlu0 %v1201, 64
        %v1249 = vpop.permute.xlu0 %1248
        %1250 = vrot.lane.b32.xlu0 %v1203, 64
        %v1251 = vpop.permute.xlu0 %1250
        %1252 = vrot.lane.b32.xlu0 %v1205, 64
        %v1253 = vpop.permute.xlu0 %1252
        %1254 = vrot.lane.b32.xlu0 %v1207, 64
        %v1255 = vpop.permute.xlu0 %1254
        %1256 = vrot.lane.b32.xlu0 %v1209, 64
        %v1257 = vpop.permute.xlu0 %1256
        %v1274 = vmul.f32 %v1098, %v1227
        %v1275 = vmul.f32 %v1099, %v1229
        %v1276 = vmul.f32 %v1100, %v1231
        %v1277 = vmul.f32 %v1101, %v1233
        %v1278 = vmul.f32 %v1102, %v1235
        %v1279 = vmul.f32 %v1103, %v1237
        %v1280 = vmul.f32 %v1104, %v1239
        %v1281 = vmul.f32 %v1105, %v1241
        %v1282 = vmul.f32 %v1106, %v1243
        %v1283 = vmul.f32 %v1107, %v1245
        %v1284 = vmul.f32 %v1108, %v1247
        %v1285 = vmul.f32 %v1109, %v1249
        %v1286 = vmul.f32 %v1110, %v1251
        %v1287 = vmul.f32 %v1111, %v1253
        %v1288 = vmul.f32 %v1112, %v1255
        %v1289 = vmul.f32 %v1113, %v1257
        %v1290 = vpack.c.bf16 %v1275, %v1274
        %v1291 = vpack.c.bf16 %v1277, %v1276
        %v1292 = vpack.c.bf16 %v1279, %v1278
        %v1293 = vpack.c.bf16 %v1281, %v1280
        %v1294 = vpack.c.bf16 %v1283, %v1282
        %v1295 = vpack.c.bf16 %v1285, %v1284
        %v1296 = vpack.c.bf16 %v1287, %v1286
        %v1297 = vpack.c.bf16 %v1289, %v1288
        %v1298 = vld [vmem:[#allocation7] sm:$0xf]
        %v1299 = vld [vmem:[#allocation7 + $0x4] sm:$0xf]
        %v1300 = vld [vmem:[#allocation7 + $0x8] sm:$0xf]
        %v1301 = vld [vmem:[#allocation7 + $0xc] sm:$0xf]
        %v1302 = vld [vmem:[#allocation7 + $0x10] sm:$0xf]
        %v1303 = vld [vmem:[#allocation7 + $0x14] sm:$0xf]
        %v1304 = vld [vmem:[#allocation7 + $0x18] sm:$0xf]
        %v1305 = vld [vmem:[#allocation7 + $0x1c] sm:$0xf]
        %v1306 = vld [vmem:[%s4] sm:$0x1]
        %v1308 = vlaneseq
        %v1309 = vshrl.u32 %v1308, 7
        %v1310 = vsub.s32 0, %v1309
        %v1311 = vrot.slane %v1306, %v1310
        %v1321 = vunpack.c.l.b16 %v1298
        %v1322 = vunpack.c.l.b16 %v1299
        %v1323 = vunpack.c.l.b16 %v1300
        %v1324 = vunpack.c.l.b16 %v1301
        %v1325 = vunpack.c.l.b16 %v1302
        %v1326 = vunpack.c.l.b16 %v1303
        %v1327 = vunpack.c.l.b16 %v1304
        %v1328 = vunpack.c.l.b16 %v1305
        %v1329 = vpack.c.b16 %v1322, %v1321
        %v1330 = vpack.c.b16 %v1324, %v1323
        %v1331 = vpack.c.b16 %v1326, %v1325
        %v1332 = vpack.c.b16 %v1328, %v1327
        %vm1337 = vcmask 523264
        %v1339 = vsel %vm1337, %v1290, 0
        %v1342 = vsel %vm1337, %v1291, 0
        %v1345 = vsel %vm1337, %v1292, 0
        %v1348 = vsel %vm1337, %v1293, 0
        %v1351 = vsel %vm1337, %v1294, 0
        %v1354 = vsel %vm1337, %v1295, 0
        %v1357 = vsel %vm1337, %v1296, 0
        %v1360 = vsel %vm1337, %v1297, 0
        %1362 = vmatprep.subr.bf16.mxu0 0
        %1363 = vmatpush1.bf16.msra.mxu0 %v1329
        %1364 = vmatprep.subr.bf16.mxu0 0
        %1365 = vmatpush1.bf16.msra.mxu0 %v1330
        %1366 = vmatprep.subr.bf16.mxu0 0
        %1367 = vmatpush1.bf16.msra.mxu0 %v1331
        %1368 = vmatprep.subr.bf16.mxu0 0
        %1369 = vmatpush1.bf16.msra.mxu0 %v1332
        %1370 = vmatprep.subr.bf16.mxu0 0
        %1371 = vmatpush1.bf16.msra.mxu0 0
        %1372 = vmatprep.subr.bf16.mxu0 0
        %1373 = vmatpush1.bf16.msra.mxu0 0
        %1374 = vmatprep.subr.bf16.mxu0 0
        %1375 = vmatpush1.bf16.msra.mxu0 0
        %1376 = vmatprep.subr.bf16.mxu0 0
        %1377 = vmatpush1.bf16.msra.mxu0 0
        %1378 = vmatprep.subr.bf16.mxu0 0
        %1379 = vmatpush1.bf16.msra.mxu0 0
        %1380 = vmatprep.subr.bf16.mxu0 0
        %1381 = vmatpush1.bf16.msra.mxu0 0
        %1382 = vmatprep.subr.bf16.mxu0 0
        %1383 = vmatpush1.bf16.msra.mxu0 0
        %1384 = vmatprep.subr.bf16.mxu0 0
        %1385 = vmatpush1.bf16.msra.mxu0 0
        %1386 = vmatprep.subr.bf16.mxu0 0
        %1387 = vmatpush1.bf16.msra.mxu0 0
        %1388 = vmatprep.subr.bf16.mxu0 0
        %1389 = vmatpush1.bf16.msra.mxu0 0
        %1390 = vmatprep.subr.bf16.mxu0 0
        %1391 = vmatpush1.bf16.msra.mxu0 0
        %1392 = vmatprep.subr.bf16.mxu0 0
        %1393 = vmatpush1.bf16.msra.mxu0 0
        %1394 = vmatprep.mubr.bf16.mxu0 0
        %1395 = vmatmul.mubr.bf16.gmra.mrb[0].mxu0 %v1339
        %v1396 = vpop.f32.mrb[0].mxu0
        %v1397 = vadd.f32 %v1311, %v1396
        %v1398 = vpop.f32.mrb[0].mxu0
        %v1399 = vpop.f32.mrb[0].mxu0
        %v1400 = vadd.f32 %v1311, %v1399
        %v1401 = vpop.f32.mrb[0].mxu0
        %1402 = vmatprep.mubr.bf16.mxu0 0
        %1403 = vmatmul.mubr.bf16.gmra.mrb[0].mxu0 %v1342
        %v1404 = vpop.f32.mrb[0].mxu0
        %v1405 = vadd.f32 %v1311, %v1404
        %v1406 = vpop.f32.mrb[0].mxu0
        %v1407 = vpop.f32.mrb[0].mxu0
        %v1408 = vadd.f32 %v1311, %v1407
        %v1409 = vpop.f32.mrb[0].mxu0
        %1410 = vmatprep.mubr.bf16.mxu0 0
        %1411 = vmatmul.mubr.bf16.gmra.mrb[0].mxu0 %v1345
        %v1412 = vpop.f32.mrb[0].mxu0
        %v1413 = vadd.f32 %v1311, %v1412
        %v1414 = vpop.f32.mrb[0].mxu0
        %v1415 = vpop.f32.mrb[0].mxu0
        %v1416 = vadd.f32 %v1311, %v1415
        %v1417 = vpop.f32.mrb[0].mxu0
        %1418 = vmatprep.mubr.bf16.mxu0 0
        %1419 = vmatmul.mubr.bf16.gmra.mrb[0].mxu0 %v1348
        %v1420 = vpop.f32.mrb[0].mxu0
        %v1421 = vadd.f32 %v1311, %v1420
        %v1422 = vpop.f32.mrb[0].mxu0
        %v1423 = vpop.f32.mrb[0].mxu0
        %v1424 = vadd.f32 %v1311, %v1423
        %v1425 = vpop.f32.mrb[0].mxu0
        %1426 = vmatprep.mubr.bf16.mxu0 0
        %1427 = vmatmul.mubr.bf16.gmra.mrb[0].mxu0 %v1351
        %v1428 = vpop.f32.mrb[0].mxu0
        %v1429 = vadd.f32 %v1311, %v1428
        %v1430 = vpop.f32.mrb[0].mxu0
        %v1431 = vpop.f32.mrb[0].mxu0
        %v1432 = vadd.f32 %v1311, %v1431
        %v1433 = vpop.f32.mrb[0].mxu0
        %1434 = vmatprep.mubr.bf16.mxu0 0
        %1435 = vmatmul.mubr.bf16.gmra.mrb[0].mxu0 %v1354
        %v1436 = vpop.f32.mrb[0].mxu0
        %v1437 = vadd.f32 %v1311, %v1436
        %v1438 = vpop.f32.mrb[0].mxu0
        %v1439 = vpop.f32.mrb[0].mxu0
        %v1440 = vadd.f32 %v1311, %v1439
        %v1441 = vpop.f32.mrb[0].mxu0
        %1442 = vmatprep.mubr.bf16.mxu0 0
        %1443 = vmatmul.mubr.bf16.gmra.mrb[0].mxu0 %v1357
        %v1444 = vpop.f32.mrb[0].mxu0
        %v1445 = vadd.f32 %v1311, %v1444
        %v1446 = vpop.f32.mrb[0].mxu0
        %v1447 = vpop.f32.mrb[0].mxu0
        %v1448 = vadd.f32 %v1311, %v1447
        %v1449 = vpop.f32.mrb[0].mxu0
        %1450 = vmatprep.mubr.bf16.mxu0 0
        %1451 = vmatmul.mubr.bf16.gmra.mrb[0].mxu0 %v1360
        %v1452 = vpop.f32.mrb[0].mxu0
        %v1453 = vadd.f32 %v1311, %v1452
        %v1454 = vpop.f32.mrb[0].mxu0
        %v1455 = vpop.f32.mrb[0].mxu0
        %v1456 = vadd.f32 %v1311, %v1455
        %v1457 = vpop.f32.mrb[0].mxu0
        %1458 = vdwg.mxu0
        %v1459 = vpack.c.bf16 %v1400, %v1397
        %v1460 = vpack.c.bf16 %v1408, %v1405
        %v1461 = vpack.c.bf16 %v1416, %v1413
        %v1462 = vpack.c.bf16 %v1424, %v1421
        %v1463 = vpack.c.bf16 %v1432, %v1429
        %v1464 = vpack.c.bf16 %v1440, %v1437
        %v1465 = vpack.c.bf16 %v1448, %v1445
        %v1466 = vpack.c.bf16 %v1456, %v1453
        %v1467 = vld [vmem:[#allocation8] sm:$0xff]
        %v1468 = vld [vmem:[#allocation8 + $0x8] sm:$0xf]
        %v1469 = vld [vmem:[#allocation8 + $0xc] sm:$0xff]
        %v1470 = vld [vmem:[#allocation8 + $0x14] sm:$0xf]
        %v1471 = vld [vmem:[#allocation8 + $0x18] sm:$0xff]
        %v1472 = vld [vmem:[#allocation8 + $0x20] sm:$0xf]
        %v1473 = vld [vmem:[#allocation8 + $0x24] sm:$0xff]
        %v1474 = vld [vmem:[#allocation8 + $0x2c] sm:$0xf]
        %v1475 = vld [vmem:[#allocation8 + $0x30] sm:$0xff]
        %v1476 = vld [vmem:[#allocation8 + $0x38] sm:$0xf]
        %v1477 = vld [vmem:[#allocation8 + $0x3c] sm:$0xff]
        %v1478 = vld [vmem:[#allocation8 + $0x44] sm:$0xf]
        %v1479 = vld [vmem:[#allocation8 + $0x48] sm:$0xff]
        %v1480 = vld [vmem:[#allocation8 + $0x50] sm:$0xf]
        %v1481 = vld [vmem:[#allocation8 + $0x54] sm:$0xff]
        %v1482 = vld [vmem:[#allocation8 + $0x5c] sm:$0xf]
        %v1499 = vunpack.c.l.b16 %v1467
        %v1500 = vunpack.c.h.b16 %v1467
        %v1501 = vunpack.c.l.b16 %v1468
        %v1502 = vunpack.c.l.b16 %v1469
        %v1503 = vunpack.c.h.b16 %v1469
        %v1504 = vunpack.c.l.b16 %v1470
        %v1505 = vunpack.c.l.b16 %v1471
        %v1506 = vunpack.c.h.b16 %v1471
        %v1507 = vunpack.c.l.b16 %v1472
        %v1508 = vunpack.c.l.b16 %v1473
        %v1509 = vunpack.c.h.b16 %v1473
        %v1510 = vunpack.c.l.b16 %v1474
        %v1511 = vunpack.c.l.b16 %v1475
        %v1512 = vunpack.c.h.b16 %v1475
        %v1513 = vunpack.c.l.b16 %v1476
        %v1514 = vunpack.c.l.b16 %v1477
        %v1515 = vunpack.c.h.b16 %v1477
        %v1516 = vunpack.c.l.b16 %v1478
        %v1517 = vunpack.c.l.b16 %v1479
        %v1518 = vunpack.c.h.b16 %v1479
        %v1519 = vunpack.c.l.b16 %v1480
        %v1520 = vunpack.c.l.b16 %v1481
        %v1521 = vunpack.c.h.b16 %v1481
        %v1522 = vunpack.c.l.b16 %v1482
        %v1523 = vpack.c.b16 %v1502, %v1499
        %v1524 = vpack.c.b16 %v1503, %v1500
        %v1525 = vpack.c.b16 %v1504, %v1501
        %v1526 = vpack.c.b16 %v1508, %v1505
        %v1527 = vpack.c.b16 %v1509, %v1506
        %v1528 = vpack.c.b16 %v1510, %v1507
        %v1529 = vpack.c.b16 %v1514, %v1511
        %v1530 = vpack.c.b16 %v1515, %v1512
        %v1531 = vpack.c.b16 %v1516, %v1513
        %v1532 = vpack.c.b16 %v1520, %v1517
        %v1533 = vpack.c.b16 %v1521, %v1518
        %v1534 = vpack.c.b16 %v1522, %v1519
        %v1548 = vsel %vm1337, %v1459, 0
        %v1551 = vsel %vm1337, %v1460, 0
        %v1554 = vsel %vm1337, %v1461, 0
        %v1557 = vsel %vm1337, %v1462, 0
        %v1560 = vsel %vm1337, %v1463, 0
        %v1563 = vsel %vm1337, %v1464, 0
        %v1566 = vsel %vm1337, %v1465, 0
        %v1569 = vsel %vm1337, %v1466, 0
        %1571 = vmatprep.subr.bf16.mxu0 %v1524
        %1572 = vmatpush1.bf16.msra.mxu0 %v1523
        %1573 = vmatprep.subr.bf16.mxu0 %v1527
        %1574 = vmatpush1.bf16.msra.mxu0 %v1526
        %1575 = vmatprep.subr.bf16.mxu0 %v1530
        %1576 = vmatpush1.bf16.msra.mxu0 %v1529
        %1577 = vmatprep.subr.bf16.mxu0 %v1533
        %1578 = vmatpush1.bf16.msra.mxu0 %v1532
        %1579 = vmatprep.subr.bf16.mxu0 0
        %1580 = vmatpush1.bf16.msra.mxu0 0
        %1581 = vmatprep.subr.bf16.mxu0 0
        %1582 = vmatpush1.bf16.msra.mxu0 0
        %1583 = vmatprep.subr.bf16.mxu0 0
        %1584 = vmatpush1.bf16.msra.mxu0 0
        %1585 = vmatprep.subr.bf16.mxu0 0
        %1586 = vmatpush1.bf16.msra.mxu0 0
        %1587 = vmatprep.subr.bf16.mxu0 0
        %1588 = vmatpush1.bf16.msra.mxu0 0
        %1589 = vmatprep.subr.bf16.mxu0 0
        %1590 = vmatpush1.bf16.msra.mxu0 0
        %1591 = vmatprep.subr.bf16.mxu0 0
        %1592 = vmatpush1.bf16.msra.mxu0 0
        %1593 = vmatprep.subr.bf16.mxu0 0
        %1594 = vmatpush1.bf16.msra.mxu0 0
        %1595 = vmatprep.subr.bf16.mxu0 0
        %1596 = vmatpush1.bf16.msra.mxu0 0
        %1597 = vmatprep.subr.bf16.mxu0 0
        %1598 = vmatpush1.bf16.msra.mxu0 0
        %1599 = vmatprep.subr.bf16.mxu0 0
        %1600 = vmatpush1.bf16.msra.mxu0 0
        %1601 = vmatprep.subr.bf16.mxu0 0
        %1602 = vmatpush1.bf16.msra.mxu0 0
        %1603 = vmatprep.mubr.bf16.mxu0 0
        %1604 = vmatmul.mubr.bf16.gmra.mrb[0].mxu0 %v1548
        %v1605 = vpop.f32.mrb[0].mxu0
        %v1606 = vadd.f32 0.0, %v1605
        %v1607 = vpop.f32.mrb[0].mxu0
        %v1608 = vadd.f32 0.0, %v1607
        %v1609 = vpop.f32.mrb[0].mxu0
        %v1610 = vadd.f32 0.0, %v1609
        %v1611 = vpop.f32.mrb[0].mxu0
        %v1612 = vadd.f32 0.0, %v1611
        %1613 = vmatprep.mubr.bf16.mxu0 0
        %1614 = vmatmul.mubr.bf16.gmra.mrb[0].mxu0 %v1551
        %v1615 = vpop.f32.mrb[0].mxu0
        %v1616 = vadd.f32 0.0, %v1615
        %v1617 = vpop.f32.mrb[0].mxu0
        %v1618 = vadd.f32 0.0, %v1617
        %v1619 = vpop.f32.mrb[0].mxu0
        %v1620 = vadd.f32 0.0, %v1619
        %v1621 = vpop.f32.mrb[0].mxu0
        %v1622 = vadd.f32 0.0, %v1621
        %1623 = vmatprep.mubr.bf16.mxu0 0
        %1624 = vmatmul.mubr.bf16.gmra.mrb[0].mxu0 %v1554
        %v1625 = vpop.f32.mrb[0].mxu0
        %v1626 = vadd.f32 0.0, %v1625
        %v1627 = vpop.f32.mrb[0].mxu0
        %v1628 = vadd.f32 0.0, %v1627
        %v1629 = vpop.f32.mrb[0].mxu0
        %v1630 = vadd.f32 0.0, %v1629
        %v1631 = vpop.f32.mrb[0].mxu0
        %v1632 = vadd.f32 0.0, %v1631
        %1633 = vmatprep.mubr.bf16.mxu0 0
        %1634 = vmatmul.mubr.bf16.gmra.mrb[0].mxu0 %v1557
        %v1635 = vpop.f32.mrb[0].mxu0
        %v1636 = vadd.f32 0.0, %v1635
        %v1637 = vpop.f32.mrb[0].mxu0
        %v1638 = vadd.f32 0.0, %v1637
        %v1639 = vpop.f32.mrb[0].mxu0
        %v1640 = vadd.f32 0.0, %v1639
        %v1641 = vpop.f32.mrb[0].mxu0
        %v1642 = vadd.f32 0.0, %v1641
        %1643 = vmatprep.mubr.bf16.mxu0 0
        %1644 = vmatmul.mubr.bf16.gmra.mrb[0].mxu0 %v1560
        %v1645 = vpop.f32.mrb[0].mxu0
        %v1646 = vadd.f32 0.0, %v1645
        %v1647 = vpop.f32.mrb[0].mxu0
        %v1648 = vadd.f32 0.0, %v1647
        %v1649 = vpop.f32.mrb[0].mxu0
        %v1650 = vadd.f32 0.0, %v1649
        %v1651 = vpop.f32.mrb[0].mxu0
        %v1652 = vadd.f32 0.0, %v1651
        %1653 = vmatprep.mubr.bf16.mxu0 0
        %1654 = vmatmul.mubr.bf16.gmra.mrb[0].mxu0 %v1563
        %v1655 = vpop.f32.mrb[0].mxu0
        %v1656 = vadd.f32 0.0, %v1655
        %v1657 = vpop.f32.mrb[0].mxu0
        %v1658 = vadd.f32 0.0, %v1657
        %v1659 = vpop.f32.mrb[0].mxu0
        %v1660 = vadd.f32 0.0, %v1659
        %v1661 = vpop.f32.mrb[0].mxu0
        %v1662 = vadd.f32 0.0, %v1661
        %1663 = vmatprep.mubr.bf16.mxu0 0
        %1664 = vmatmul.mubr.bf16.gmra.mrb[0].mxu0 %v1566
        %v1665 = vpop.f32.mrb[0].mxu0
        %v1666 = vadd.f32 0.0, %v1665
        %v1667 = vpop.f32.mrb[0].mxu0
        %v1668 = vadd.f32 0.0, %v1667
        %v1669 = vpop.f32.mrb[0].mxu0
        %v1670 = vadd.f32 0.0, %v1669
        %v1671 = vpop.f32.mrb[0].mxu0
        %v1672 = vadd.f32 0.0, %v1671
        %1673 = vmatprep.mubr.bf16.mxu0 0
        %1674 = vmatmul.mubr.bf16.gmra.mrb[0].mxu0 %v1569
        %v1675 = vpop.f32.mrb[0].mxu0
        %v1676 = vadd.f32 0.0, %v1675
        %v1677 = vpop.f32.mrb[0].mxu0
        %v1678 = vadd.f32 0.0, %v1677
        %v1679 = vpop.f32.mrb[0].mxu0
        %v1680 = vadd.f32 0.0, %v1679
        %v1681 = vpop.f32.mrb[0].mxu0
        %v1682 = vadd.f32 0.0, %v1681
        %1683 = vdwg.mxu0
        %1684 = vmatprep.subr.bf16.mxu0 0
        %1685 = vmatpush1.bf16.msra.mxu0 %v1525
        %1686 = vmatprep.subr.bf16.mxu0 0
        %1687 = vmatpush1.bf16.msra.mxu0 %v1528
        %1688 = vmatprep.subr.bf16.mxu0 0
        %1689 = vmatpush1.bf16.msra.mxu0 %v1531
        %1690 = vmatprep.subr.bf16.mxu0 0
        %1691 = vmatpush1.bf16.msra.mxu0 %v1534
        %1692 = vmatprep.subr.bf16.mxu0 0
        %1693 = vmatpush1.bf16.msra.mxu0 0
        %1694 = vmatprep.subr.bf16.mxu0 0
        %1695 = vmatpush1.bf16.msra.mxu0 0
        %1696 = vmatprep.subr.bf16.mxu0 0
        %1697 = vmatpush1.bf16.msra.mxu0 0
        %1698 = vmatprep.subr.bf16.mxu0 0
        %1699 = vmatpush1.bf16.msra.mxu0 0
        %1700 = vmatprep.subr.bf16.mxu0 0
        %1701 = vmatpush1.bf16.msra.mxu0 0
        %1702 = vmatprep.subr.bf16.mxu0 0
        %1703 = vmatpush1.bf16.msra.mxu0 0
        %1704 = vmatprep.subr.bf16.mxu0 0
        %1705 = vmatpush1.bf16.msra.mxu0 0
        %1706 = vmatprep.subr.bf16.mxu0 0
        %1707 = vmatpush1.bf16.msra.mxu0 0
        %1708 = vmatprep.subr.bf16.mxu0 0
        %1709 = vmatpush1.bf16.msra.mxu0 0
        %1710 = vmatprep.subr.bf16.mxu0 0
        %1711 = vmatpush1.bf16.msra.mxu0 0
        %1712 = vmatprep.subr.bf16.mxu0 0
        %1713 = vmatpush1.bf16.msra.mxu0 0
        %1714 = vmatprep.subr.bf16.mxu0 0
        %1715 = vmatpush1.bf16.msra.mxu0 0
        %1716 = vmatprep.mubr.bf16.mxu0 0
        %1717 = vmatmul.mubr.bf16.gmra.mrb[0].mxu0 %v1548
        %v1718 = vpop.f32.mrb[0].mxu0
        %v1719 = vadd.f32 0.0, %v1718
        %v1720 = vpop.f32.mrb[0].mxu0
        %v1721 = vpop.f32.mrb[0].mxu0
        %v1722 = vadd.f32 0.0, %v1721
        %v1723 = vpop.f32.mrb[0].mxu0
        %1724 = vmatprep.mubr.bf16.mxu0 0
        %1725 = vmatmul.mubr.bf16.gmra.mrb[0].mxu0 %v1551
        %v1726 = vpop.f32.mrb[0].mxu0
        %v1727 = vadd.f32 0.0, %v1726
        %v1728 = vpop.f32.mrb[0].mxu0
        %v1729 = vpop.f32.mrb[0].mxu0
        %v1730 = vadd.f32 0.0, %v1729
        %v1731 = vpop.f32.mrb[0].mxu0
        %1732 = vmatprep.mubr.bf16.mxu0 0
        %1733 = vmatmul.mubr.bf16.gmra.mrb[0].mxu0 %v1554
        %v1734 = vpop.f32.mrb[0].mxu0
        %v1735 = vadd.f32 0.0, %v1734
        %v1736 = vpop.f32.mrb[0].mxu0
        %v1737 = vpop.f32.mrb[0].mxu0
        %v1738 = vadd.f32 0.0, %v1737
        %v1739 = vpop.f32.mrb[0].mxu0
        %1740 = vmatprep.mubr.bf16.mxu0 0
        %1741 = vmatmul.mubr.bf16.gmra.mrb[0].mxu0 %v1557
        %v1742 = vpop.f32.mrb[0].mxu0
        %v1743 = vadd.f32 0.0, %v1742
        %v1744 = vpop.f32.mrb[0].mxu0
        %v1745 = vpop.f32.mrb[0].mxu0
        %v1746 = vadd.f32 0.0, %v1745
        %v1747 = vpop.f32.mrb[0].mxu0
        %1748 = vmatprep.mubr.bf16.mxu0 0
        %1749 = vmatmul.mubr.bf16.gmra.mrb[0].mxu0 %v1560
        %v1750 = vpop.f32.mrb[0].mxu0
        %v1751 = vadd.f32 0.0, %v1750
        %v1752 = vpop.f32.mrb[0].mxu0
        %v1753 = vpop.f32.mrb[0].mxu0
        %v1754 = vadd.f32 0.0, %v1753
        %v1755 = vpop.f32.mrb[0].mxu0
        %1756 = vmatprep.mubr.bf16.mxu0 0
        %1757 = vmatmul.mubr.bf16.gmra.mrb[0].mxu0 %v1563
        %v1758 = vpop.f32.mrb[0].mxu0
        %v1759 = vadd.f32 0.0, %v1758
        %v1760 = vpop.f32.mrb[0].mxu0
        %v1761 = vpop.f32.mrb[0].mxu0
        %v1762 = vadd.f32 0.0, %v1761
        %v1763 = vpop.f32.mrb[0].mxu0
        %1764 = vmatprep.mubr.bf16.mxu0 0
        %1765 = vmatmul.mubr.bf16.gmra.mrb[0].mxu0 %v1566
        %v1766 = vpop.f32.mrb[0].mxu0
        %v1767 = vadd.f32 0.0, %v1766
        %v1768 = vpop.f32.mrb[0].mxu0
        %v1769 = vpop.f32.mrb[0].mxu0
        %v1770 = vadd.f32 0.0, %v1769
        %v1771 = vpop.f32.mrb[0].mxu0
        %1772 = vmatprep.mubr.bf16.mxu0 0
        %1773 = vmatmul.mubr.bf16.gmra.mrb[0].mxu0 %v1569
        %v1774 = vpop.f32.mrb[0].mxu0
        %v1775 = vadd.f32 0.0, %v1774
        %v1776 = vpop.f32.mrb[0].mxu0
        %v1777 = vpop.f32.mrb[0].mxu0
        %v1778 = vadd.f32 0.0, %v1777
        %v1779 = vpop.f32.mrb[0].mxu0
        %1780 = vdwg.mxu0
        %v1781 = vadd.f32 %v1022, %v1606
        %v1782 = vadd.f32 %v1026, %v1610
        %v1783 = vadd.f32 %v1032, %v1616
        %v1784 = vadd.f32 %v1036, %v1620
        %v1785 = vadd.f32 %v1042, %v1626
        %v1786 = vadd.f32 %v1046, %v1630
        %v1787 = vadd.f32 %v1052, %v1636
        %v1788 = vadd.f32 %v1056, %v1640
        %v1789 = vadd.f32 %v1062, %v1646
        %v1790 = vadd.f32 %v1066, %v1650
        %v1791 = vadd.f32 %v1072, %v1656
        %v1792 = vadd.f32 %v1076, %v1660
        %v1793 = vadd.f32 %v1082, %v1666
        %v1794 = vadd.f32 %v1086, %v1670
        %v1795 = vadd.f32 %v1092, %v1676
        %v1796 = vadd.f32 %v1096, %v1680
        %v1797 = vld [vmem:[%s6] sm:$0x1]
        %v1799 = vlaneseq
        %v1800 = vshrl.u32 %v1799, 7
        %v1801 = vsub.s32 0, %v1800
        %v1802 = vrot.slane %v1797, %v1801
        %v1804 = vadd.f32 %v1608, %v1802
        %v1805 = vadd.f32 %v1612, %v1802
        %v1806 = vadd.f32 %v1618, %v1802
        %v1807 = vadd.f32 %v1622, %v1802
        %v1808 = vadd.f32 %v1628, %v1802
        %v1809 = vadd.f32 %v1632, %v1802
        %v1810 = vadd.f32 %v1638, %v1802
        %v1811 = vadd.f32 %v1642, %v1802
        %v1812 = vadd.f32 %v1648, %v1802
        %v1813 = vadd.f32 %v1652, %v1802
        %v1814 = vadd.f32 %v1658, %v1802
        %v1815 = vadd.f32 %v1662, %v1802
        %v1816 = vadd.f32 %v1668, %v1802
        %v1817 = vadd.f32 %v1672, %v1802
        %v1818 = vadd.f32 %v1678, %v1802
        %v1819 = vadd.f32 %v1682, %v1802
        %v1820 = vtanh.pop %v1781
        %v1821 = vtanh.pop %v1782
        %v1822 = vtanh.pop %v1783
        %v1823 = vtanh.pop %v1784
        %v1824 = vtanh.pop %v1785
        %v1825 = vtanh.pop %v1786
        %v1826 = vtanh.pop %v1787
        %v1827 = vtanh.pop %v1788
        %v1828 = vtanh.pop %v1789
        %v1829 = vtanh.pop %v1790
        %v1830 = vtanh.pop %v1791
        %v1831 = vtanh.pop %v1792
        %v1832 = vtanh.pop %v1793
        %v1833 = vtanh.pop %v1794
        %v1834 = vtanh.pop %v1795
        %v1835 = vtanh.pop %v1796
        %v1836 = vxor.u32 %v1781, 2147483648
        %v1837 = vxor.u32 %v1782, 2147483648
        %v1838 = vxor.u32 %v1783, 2147483648
        %v1839 = vxor.u32 %v1784, 2147483648
        %v1840 = vxor.u32 %v1785, 2147483648
        %v1841 = vxor.u32 %v1786, 2147483648
        %v1842 = vxor.u32 %v1787, 2147483648
        %v1843 = vxor.u32 %v1788, 2147483648
        %v1844 = vxor.u32 %v1789, 2147483648
        %v1845 = vxor.u32 %v1790, 2147483648
        %v1846 = vxor.u32 %v1791, 2147483648
        %v1847 = vxor.u32 %v1792, 2147483648
        %v1848 = vxor.u32 %v1793, 2147483648
        %v1849 = vxor.u32 %v1794, 2147483648
        %v1850 = vxor.u32 %v1795, 2147483648
        %v1851 = vxor.u32 %v1796, 2147483648
        %v1852 = vmul.f32 %v1836, 1.442695
        %v1853 = vpow.pop %v1852
        %v1854 = vmul.f32 %v1837, 1.442695
        %v1855 = vpow.pop %v1854
        %v1856 = vmul.f32 %v1838, 1.442695
        %v1857 = vpow.pop %v1856
        %v1858 = vmul.f32 %v1839, 1.442695
        %v1859 = vpow.pop %v1858
        %v1860 = vmul.f32 %v1840, 1.442695
        %v1861 = vpow.pop %v1860
        %v1862 = vmul.f32 %v1841, 1.442695
        %v1863 = vpow.pop %v1862
        %v1864 = vmul.f32 %v1842, 1.442695
        %v1865 = vpow.pop %v1864
        %v1866 = vmul.f32 %v1843, 1.442695
        %v1867 = vpow.pop %v1866
        %v1868 = vmul.f32 %v1844, 1.442695
        %v1869 = vpow.pop %v1868
        %v1870 = vmul.f32 %v1845, 1.442695
        %v1871 = vpow.pop %v1870
        %v1872 = vmul.f32 %v1846, 1.442695
        %v1873 = vpow.pop %v1872
        %v1874 = vmul.f32 %v1847, 1.442695
        %v1875 = vpow.pop %v1874
        %v1876 = vmul.f32 %v1848, 1.442695
        %v1877 = vpow.pop %v1876
        %v1878 = vmul.f32 %v1849, 1.442695
        %v1879 = vpow.pop %v1878
        %v1880 = vmul.f32 %v1850, 1.442695
        %v1881 = vpow.pop %v1880
        %v1882 = vmul.f32 %v1851, 1.442695
        %v1883 = vpow.pop %v1882
        %v1884 = vadd.f32 %v1853, 1.0
        %v1885 = vadd.f32 %v1855, 1.0
        %v1886 = vadd.f32 %v1857, 1.0
        %v1887 = vadd.f32 %v1859, 1.0
        %v1888 = vadd.f32 %v1861, 1.0
        %v1889 = vadd.f32 %v1863, 1.0
        %v1890 = vadd.f32 %v1865, 1.0
        %v1891 = vadd.f32 %v1867, 1.0
        %v1892 = vadd.f32 %v1869, 1.0
        %v1893 = vadd.f32 %v1871, 1.0
        %v1894 = vadd.f32 %v1873, 1.0
        %v1895 = vadd.f32 %v1875, 1.0
        %v1896 = vadd.f32 %v1877, 1.0
        %v1897 = vadd.f32 %v1879, 1.0
        %v1898 = vadd.f32 %v1881, 1.0
        %v1899 = vadd.f32 %v1883, 1.0
        %v1900 = vrcp.pop %v1884
        %v1901 = vmul.f32 1.0, %v1900
        %v1902 = vrcp.pop %v1885
        %v1903 = vmul.f32 1.0, %v1902
        %v1904 = vrcp.pop %v1886
        %v1905 = vmul.f32 1.0, %v1904
        %v1906 = vrcp.pop %v1887
        %v1907 = vmul.f32 1.0, %v1906
        %v1908 = vrcp.pop %v1888
        %v1909 = vmul.f32 1.0, %v1908
        %v1910 = vrcp.pop %v1889
        %v1911 = vmul.f32 1.0, %v1910
        %v1912 = vrcp.pop %v1890
        %v1913 = vmul.f32 1.0, %v1912
        %v1914 = vrcp.pop %v1891
        %v1915 = vmul.f32 1.0, %v1914
        %v1916 = vrcp.pop %v1892
        %v1917 = vmul.f32 1.0, %v1916
        %v1918 = vrcp.pop %v1893
        %v1919 = vmul.f32 1.0, %v1918
        %v1920 = vrcp.pop %v1894
        %v1921 = vmul.f32 1.0, %v1920
        %v1922 = vrcp.pop %v1895
        %v1923 = vmul.f32 1.0, %v1922
        %v1924 = vrcp.pop %v1896
        %v1925 = vmul.f32 1.0, %v1924
        %v1926 = vrcp.pop %v1897
        %v1927 = vmul.f32 1.0, %v1926
        %v1928 = vrcp.pop %v1898
        %v1929 = vmul.f32 1.0, %v1928
        %v1930 = vrcp.pop %v1899
        %v1931 = vmul.f32 1.0, %v1930
        %1948 = vrot.lane.b32.xlu0 %v1901, 64
        %v1949 = vpop.permute.xlu0 %1948
        %1950 = vrot.lane.b32.xlu0 %v1903, 64
        %v1951 = vpop.permute.xlu0 %1950
        %1952 = vrot.lane.b32.xlu0 %v1905, 64
        %v1953 = vpop.permute.xlu0 %1952
        %1954 = vrot.lane.b32.xlu0 %v1907, 64
        %v1955 = vpop.permute.xlu0 %1954
        %1956 = vrot.lane.b32.xlu0 %v1909, 64
        %v1957 = vpop.permute.xlu0 %1956
        %1958 = vrot.lane.b32.xlu0 %v1911, 64
        %v1959 = vpop.permute.xlu0 %1958
        %1960 = vrot.lane.b32.xlu0 %v1913, 64
        %v1961 = vpop.permute.xlu0 %1960
        %1962 = vrot.lane.b32.xlu0 %v1915, 64
        %v1963 = vpop.permute.xlu0 %1962
        %1964 = vrot.lane.b32.xlu0 %v1917, 64
        %v1965 = vpop.permute.xlu0 %1964
        %1966 = vrot.lane.b32.xlu0 %v1919, 64
        %v1967 = vpop.permute.xlu0 %1966
        %1968 = vrot.lane.b32.xlu0 %v1921, 64
        %v1969 = vpop.permute.xlu0 %1968
        %1970 = vrot.lane.b32.xlu0 %v1923, 64
        %v1971 = vpop.permute.xlu0 %1970
        %1972 = vrot.lane.b32.xlu0 %v1925, 64
        %v1973 = vpop.permute.xlu0 %1972
        %1974 = vrot.lane.b32.xlu0 %v1927, 64
        %v1975 = vpop.permute.xlu0 %1974
        %1976 = vrot.lane.b32.xlu0 %v1929, 64
        %v1977 = vpop.permute.xlu0 %1976
        %1978 = vrot.lane.b32.xlu0 %v1931, 64
        %v1979 = vpop.permute.xlu0 %1978
        %v1996 = vmul.f32 %v1820, %v1949
        %v1997 = vmul.f32 %v1821, %v1951
        %v1998 = vmul.f32 %v1822, %v1953
        %v1999 = vmul.f32 %v1823, %v1955
        %v2000 = vmul.f32 %v1824, %v1957
        %v2001 = vmul.f32 %v1825, %v1959
        %v2002 = vmul.f32 %v1826, %v1961
        %v2003 = vmul.f32 %v1827, %v1963
        %v2004 = vmul.f32 %v1828, %v1965
        %v2005 = vmul.f32 %v1829, %v1967
        %v2006 = vmul.f32 %v1830, %v1969
        %v2007 = vmul.f32 %v1831, %v1971
        %v2008 = vmul.f32 %v1832, %v1973
        %v2009 = vmul.f32 %v1833, %v1975
        %v2010 = vmul.f32 %v1834, %v1977
        %v2011 = vmul.f32 %v1835, %v1979
        %v2012 = vtanh.pop %v1804
        %v2013 = vtanh.pop %v1805
        %v2014 = vtanh.pop %v1806
        %v2015 = vtanh.pop %v1807
        %v2016 = vtanh.pop %v1808
        %v2017 = vtanh.pop %v1809
        %v2018 = vtanh.pop %v1810
        %v2019 = vtanh.pop %v1811
        %v2020 = vtanh.pop %v1812
        %v2021 = vtanh.pop %v1813
        %v2022 = vtanh.pop %v1814
        %v2023 = vtanh.pop %v1815
        %v2024 = vtanh.pop %v1816
        %v2025 = vtanh.pop %v1817
        %v2026 = vtanh.pop %v1818
        %v2027 = vtanh.pop %v1819
        %v2028 = vxor.u32 %v1804, 2147483648
        %v2029 = vxor.u32 %v1805, 2147483648
        %v2030 = vxor.u32 %v1806, 2147483648
        %v2031 = vxor.u32 %v1807, 2147483648
        %v2032 = vxor.u32 %v1808, 2147483648
        %v2033 = vxor.u32 %v1809, 2147483648
        %v2034 = vxor.u32 %v1810, 2147483648
        %v2035 = vxor.u32 %v1811, 2147483648
        %v2036 = vxor.u32 %v1812, 2147483648
        %v2037 = vxor.u32 %v1813, 2147483648
        %v2038 = vxor.u32 %v1814, 2147483648
        %v2039 = vxor.u32 %v1815, 2147483648
        %v2040 = vxor.u32 %v1816, 2147483648
        %v2041 = vxor.u32 %v1817, 2147483648
        %v2042 = vxor.u32 %v1818, 2147483648
        %v2043 = vxor.u32 %v1819, 2147483648
        %v2044 = vmul.f32 %v2028, 1.442695
        %v2045 = vpow.pop %v2044
        %v2046 = vmul.f32 %v2029, 1.442695
        %v2047 = vpow.pop %v2046
        %v2048 = vmul.f32 %v2030, 1.442695
        %v2049 = vpow.pop %v2048
        %v2050 = vmul.f32 %v2031, 1.442695
        %v2051 = vpow.pop %v2050
        %v2052 = vmul.f32 %v2032, 1.442695
        %v2053 = vpow.pop %v2052
        %v2054 = vmul.f32 %v2033, 1.442695
        %v2055 = vpow.pop %v2054
        %v2056 = vmul.f32 %v2034, 1.442695
        %v2057 = vpow.pop %v2056
        %v2058 = vmul.f32 %v2035, 1.442695
        %v2059 = vpow.pop %v2058
        %v2060 = vmul.f32 %v2036, 1.442695
        %v2061 = vpow.pop %v2060
        %v2062 = vmul.f32 %v2037, 1.442695
        %v2063 = vpow.pop %v2062
        %v2064 = vmul.f32 %v2038, 1.442695
        %v2065 = vpow.pop %v2064
        %v2066 = vmul.f32 %v2039, 1.442695
        %v2067 = vpow.pop %v2066
        %v2068 = vmul.f32 %v2040, 1.442695
        %v2069 = vpow.pop %v2068
        %v2070 = vmul.f32 %v2041, 1.442695
        %v2071 = vpow.pop %v2070
        %v2072 = vmul.f32 %v2042, 1.442695
        %v2073 = vpow.pop %v2072
        %v2074 = vmul.f32 %v2043, 1.442695
        %v2075 = vpow.pop %v2074
        %v2076 = vadd.f32 %v2045, 1.0
        %v2077 = vadd.f32 %v2047, 1.0
        %v2078 = vadd.f32 %v2049, 1.0
        %v2079 = vadd.f32 %v2051, 1.0
        %v2080 = vadd.f32 %v2053, 1.0
        %v2081 = vadd.f32 %v2055, 1.0
        %v2082 = vadd.f32 %v2057, 1.0
        %v2083 = vadd.f32 %v2059, 1.0
        %v2084 = vadd.f32 %v2061, 1.0
        %v2085 = vadd.f32 %v2063, 1.0
        %v2086 = vadd.f32 %v2065, 1.0
        %v2087 = vadd.f32 %v2067, 1.0
        %v2088 = vadd.f32 %v2069, 1.0
        %v2089 = vadd.f32 %v2071, 1.0
        %v2090 = vadd.f32 %v2073, 1.0
        %v2091 = vadd.f32 %v2075, 1.0
        %v2092 = vrcp.pop %v2076
        %v2093 = vmul.f32 1.0, %v2092
        %v2094 = vrcp.pop %v2077
        %v2095 = vmul.f32 1.0, %v2094
        %v2096 = vrcp.pop %v2078
        %v2097 = vmul.f32 1.0, %v2096
        %v2098 = vrcp.pop %v2079
        %v2099 = vmul.f32 1.0, %v2098
        %v2100 = vrcp.pop %v2080
        %v2101 = vmul.f32 1.0, %v2100
        %v2102 = vrcp.pop %v2081
        %v2103 = vmul.f32 1.0, %v2102
        %v2104 = vrcp.pop %v2082
        %v2105 = vmul.f32 1.0, %v2104
        %v2106 = vrcp.pop %v2083
        %v2107 = vmul.f32 1.0, %v2106
        %v2108 = vrcp.pop %v2084
        %v2109 = vmul.f32 1.0, %v2108
        %v2110 = vrcp.pop %v2085
        %v2111 = vmul.f32 1.0, %v2110
        %v2112 = vrcp.pop %v2086
        %v2113 = vmul.f32 1.0, %v2112
        %v2114 = vrcp.pop %v2087
        %v2115 = vmul.f32 1.0, %v2114
        %v2116 = vrcp.pop %v2088
        %v2117 = vmul.f32 1.0, %v2116
        %v2118 = vrcp.pop %v2089
        %v2119 = vmul.f32 1.0, %v2118
        %v2120 = vrcp.pop %v2090
        %v2121 = vmul.f32 1.0, %v2120
        %v2122 = vrcp.pop %v2091
        %v2123 = vmul.f32 1.0, %v2122
        %2140 = vrot.lane.b32.xlu0 %v2093, 64
        %v2141 = vpop.permute.xlu0 %2140
        %2142 = vrot.lane.b32.xlu0 %v2095, 64
        %v2143 = vpop.permute.xlu0 %2142
        %2144 = vrot.lane.b32.xlu0 %v2097, 64
        %v2145 = vpop.permute.xlu0 %2144
        %2146 = vrot.lane.b32.xlu0 %v2099, 64
        %v2147 = vpop.permute.xlu0 %2146
        %2148 = vrot.lane.b32.xlu0 %v2101, 64
        %v2149 = vpop.permute.xlu0 %2148
        %2150 = vrot.lane.b32.xlu0 %v2103, 64
        %v2151 = vpop.permute.xlu0 %2150
        %2152 = vrot.lane.b32.xlu0 %v2105, 64
        %v2153 = vpop.permute.xlu0 %2152
        %2154 = vrot.lane.b32.xlu0 %v2107, 64
        %v2155 = vpop.permute.xlu0 %2154
        %2156 = vrot.lane.b32.xlu0 %v2109, 64
        %v2157 = vpop.permute.xlu0 %2156
        %2158 = vrot.lane.b32.xlu0 %v2111, 64
        %v2159 = vpop.permute.xlu0 %2158
        %2160 = vrot.lane.b32.xlu0 %v2113, 64
        %v2161 = vpop.permute.xlu0 %2160
        %2162 = vrot.lane.b32.xlu0 %v2115, 64
        %v2163 = vpop.permute.xlu0 %2162
        %2164 = vrot.lane.b32.xlu0 %v2117, 64
        %v2165 = vpop.permute.xlu0 %2164
        %2166 = vrot.lane.b32.xlu0 %v2119, 64
        %v2167 = vpop.permute.xlu0 %2166
        %2168 = vrot.lane.b32.xlu0 %v2121, 64
        %v2169 = vpop.permute.xlu0 %2168
        %2170 = vrot.lane.b32.xlu0 %v2123, 64
        %v2171 = vpop.permute.xlu0 %2170
        %v2188 = vmul.f32 %v2012, %v2141
        %v2189 = vmul.f32 %v2013, %v2143
        %v2190 = vmul.f32 %v2014, %v2145
        %v2191 = vmul.f32 %v2015, %v2147
        %v2192 = vmul.f32 %v2016, %v2149
        %v2193 = vmul.f32 %v2017, %v2151
        %v2194 = vmul.f32 %v2018, %v2153
        %v2195 = vmul.f32 %v2019, %v2155
        %v2196 = vmul.f32 %v2020, %v2157
        %v2197 = vmul.f32 %v2021, %v2159
        %v2198 = vmul.f32 %v2022, %v2161
        %v2199 = vmul.f32 %v2023, %v2163
        %v2200 = vmul.f32 %v2024, %v2165
        %v2201 = vmul.f32 %v2025, %v2167
        %v2202 = vmul.f32 %v2026, %v2169
        %v2203 = vmul.f32 %v2027, %v2171
        %2220 = vrot.lane.b32.xlu0 %v2188, 64
        %v2221 = vpop.permute.xlu0 %2220
        %2222 = vrot.lane.b32.xlu0 %v2189, 64
        %v2223 = vpop.permute.xlu0 %2222
        %2224 = vrot.lane.b32.xlu0 %v2190, 64
        %v2225 = vpop.permute.xlu0 %2224
        %2226 = vrot.lane.b32.xlu0 %v2191, 64
        %v2227 = vpop.permute.xlu0 %2226
        %2228 = vrot.lane.b32.xlu0 %v2192, 64
        %v2229 = vpop.permute.xlu0 %2228
        %2230 = vrot.lane.b32.xlu0 %v2193, 64
        %v2231 = vpop.permute.xlu0 %2230
        %2232 = vrot.lane.b32.xlu0 %v2194, 64
        %v2233 = vpop.permute.xlu0 %2232
        %2234 = vrot.lane.b32.xlu0 %v2195, 64
        %v2235 = vpop.permute.xlu0 %2234
        %2236 = vrot.lane.b32.xlu0 %v2196, 64
        %v2237 = vpop.permute.xlu0 %2236
        %2238 = vrot.lane.b32.xlu0 %v2197, 64
        %v2239 = vpop.permute.xlu0 %2238
        %2240 = vrot.lane.b32.xlu0 %v2198, 64
        %v2241 = vpop.permute.xlu0 %2240
        %2242 = vrot.lane.b32.xlu0 %v2199, 64
        %v2243 = vpop.permute.xlu0 %2242
        %2244 = vrot.lane.b32.xlu0 %v2200, 64
        %v2245 = vpop.permute.xlu0 %2244
        %2246 = vrot.lane.b32.xlu0 %v2201, 64
        %v2247 = vpop.permute.xlu0 %2246
        %2248 = vrot.lane.b32.xlu0 %v2202, 64
        %v2249 = vpop.permute.xlu0 %2248
        %2250 = vrot.lane.b32.xlu0 %v2203, 64
        %v2251 = vpop.permute.xlu0 %2250
        %v2268 = vsel %vm1337, %v1996, %v2221
        %v2269 = vsel %vm1337, %v1997, %v2223
        %v2270 = vsel %vm1337, %v1998, %v2225
        %v2271 = vsel %vm1337, %v1999, %v2227
        %v2272 = vsel %vm1337, %v2000, %v2229
        %v2273 = vsel %vm1337, %v2001, %v2231
        %v2274 = vsel %vm1337, %v2002, %v2233
        %v2275 = vsel %vm1337, %v2003, %v2235
        %v2276 = vsel %vm1337, %v2004, %v2237
        %v2277 = vsel %vm1337, %v2005, %v2239
        %v2278 = vsel %vm1337, %v2006, %v2241
        %v2279 = vsel %vm1337, %v2007, %v2243
        %v2280 = vsel %vm1337, %v2008, %v2245
        %v2281 = vsel %vm1337, %v2009, %v2247
        %v2282 = vsel %vm1337, %v2010, %v2249
        %v2283 = vsel %vm1337, %v2011, %v2251
        %v2284 = vpack.c.bf16 %v2269, %v2268
        %v2285 = vpack.c.bf16 %v2271, %v2270
        %v2286 = vpack.c.bf16 %v2273, %v2272
        %v2287 = vpack.c.bf16 %v2275, %v2274
        %v2288 = vpack.c.bf16 %v2277, %v2276
        %v2289 = vpack.c.bf16 %v2279, %v2278
        %v2290 = vpack.c.bf16 %v2281, %v2280
        %v2291 = vpack.c.bf16 %v2283, %v2282
        %v2292 = vld [vmem:[#allocation10] sm:$0xf]
        %v2293 = vld [vmem:[#allocation10 + $0x4] sm:$0xf]
        %v2294 = vld [vmem:[#allocation10 + $0x8] sm:$0xf]
        %v2295 = vld [vmem:[#allocation10 + $0xc] sm:$0xf]
        %v2296 = vld [vmem:[#allocation10 + $0x10] sm:$0xf]
        %v2297 = vld [vmem:[#allocation10 + $0x14] sm:$0xf]
        %v2298 = vld [vmem:[#allocation10 + $0x18] sm:$0xf]
        %v2299 = vld [vmem:[#allocation10 + $0x1c] sm:$0xf]
        %v2300 = vld [vmem:[#allocation10 + $0x20] sm:$0xf]
        %v2301 = vld [vmem:[#allocation10 + $0x24] sm:$0xf]
        %v2302 = vld [vmem:[#allocation10 + $0x28] sm:$0xf]
        %v2303 = vld [vmem:[#allocation10 + $0x2c] sm:$0xf]
        %v2304 = vld [vmem:[#allocation10 + $0x30] sm:$0xf]
        %v2305 = vld [vmem:[#allocation10 + $0x34] sm:$0xf]
        %v2306 = vld [vmem:[#allocation10 + $0x38] sm:$0xf]
        %v2307 = vld [vmem:[#allocation10 + $0x3c] sm:$0xf]
        %v2308 = vld [vmem:[%s8] sm:$0x1]
        %v2310 = vlaneseq
        %v2311 = vshrl.u32 %v2310, 7
        %v2312 = vsub.s32 0, %v2311
        %v2313 = vrot.slane %v2308, %v2312
        %v2331 = vunpack.c.l.b16 %v2292
        %v2332 = vunpack.c.l.b16 %v2293
        %v2333 = vunpack.c.l.b16 %v2294
        %v2334 = vunpack.c.l.b16 %v2295
        %v2335 = vunpack.c.l.b16 %v2296
        %v2336 = vunpack.c.l.b16 %v2297
        %v2337 = vunpack.c.l.b16 %v2298
        %v2338 = vunpack.c.l.b16 %v2299
        %v2339 = vunpack.c.l.b16 %v2300
        %v2340 = vunpack.c.l.b16 %v2301
        %v2341 = vunpack.c.l.b16 %v2302
        %v2342 = vunpack.c.l.b16 %v2303
        %v2343 = vunpack.c.l.b16 %v2304
        %v2344 = vunpack.c.l.b16 %v2305
        %v2345 = vunpack.c.l.b16 %v2306
        %v2346 = vunpack.c.l.b16 %v2307
        %v2347 = vpack.c.b16 %v2332, %v2331
        %v2348 = vpack.c.b16 %v2334, %v2333
        %v2349 = vpack.c.b16 %v2336, %v2335
        %v2350 = vpack.c.b16 %v2338, %v2337
        %v2351 = vpack.c.b16 %v2340, %v2339
        %v2352 = vpack.c.b16 %v2342, %v2341
        %v2353 = vpack.c.b16 %v2344, %v2343
        %v2354 = vpack.c.b16 %v2346, %v2345
        %2363 = vmatprep.subr.bf16.mxu0 0
        %2364 = vmatpush1.bf16.msra.mxu0 %v2347
        %2365 = vmatprep.subr.bf16.mxu0 0
        %2366 = vmatpush1.bf16.msra.mxu0 %v2348
        %2367 = vmatprep.subr.bf16.mxu0 0
        %2368 = vmatpush1.bf16.msra.mxu0 %v2349
        %2369 = vmatprep.subr.bf16.mxu0 0
        %2370 = vmatpush1.bf16.msra.mxu0 %v2350
        %2371 = vmatprep.subr.bf16.mxu0 0
        %2372 = vmatpush1.bf16.msra.mxu0 %v2351
        %2373 = vmatprep.subr.bf16.mxu0 0
        %2374 = vmatpush1.bf16.msra.mxu0 %v2352
        %2375 = vmatprep.subr.bf16.mxu0 0
        %2376 = vmatpush1.bf16.msra.mxu0 %v2353
        %2377 = vmatprep.subr.bf16.mxu0 0
        %2378 = vmatpush1.bf16.msra.mxu0 %v2354
        %2379 = vmatprep.subr.bf16.mxu0 0
        %2380 = vmatpush1.bf16.msra.mxu0 0
        %2381 = vmatprep.subr.bf16.mxu0 0
        %2382 = vmatpush1.bf16.msra.mxu0 0
        %2383 = vmatprep.subr.bf16.mxu0 0
        %2384 = vmatpush1.bf16.msra.mxu0 0
        %2385 = vmatprep.subr.bf16.mxu0 0
        %2386 = vmatpush1.bf16.msra.mxu0 0
        %2387 = vmatprep.subr.bf16.mxu0 0
        %2388 = vmatpush1.bf16.msra.mxu0 0
        %2389 = vmatprep.subr.bf16.mxu0 0
        %2390 = vmatpush1.bf16.msra.mxu0 0
        %2391 = vmatprep.subr.bf16.mxu0 0
        %2392 = vmatpush1.bf16.msra.mxu0 0
        %2393 = vmatprep.subr.bf16.mxu0 0
        %2394 = vmatpush1.bf16.msra.mxu0 0
        %2395 = vmatprep.mubr.bf16.mxu0 0
        %2396 = vmatmul.mubr.bf16.gmra.mrb[0].mxu0 %v2284
        %v2397 = vpop.f32.mrb[0].mxu0
        %v2398 = vadd.f32 %v2313, %v2397
        %v2399 = vpop.f32.mrb[0].mxu0
        %v2400 = vpop.f32.mrb[0].mxu0
        %v2401 = vadd.f32 %v2313, %v2400
        %v2402 = vpop.f32.mrb[0].mxu0
        %2403 = vmatprep.mubr.bf16.mxu0 0
        %2404 = vmatmul.mubr.bf16.gmra.mrb[0].mxu0 %v2285
        %v2405 = vpop.f32.mrb[0].mxu0
        %v2406 = vadd.f32 %v2313, %v2405
        %v2407 = vpop.f32.mrb[0].mxu0
        %v2408 = vpop.f32.mrb[0].mxu0
        %v2409 = vadd.f32 %v2313, %v2408
        %v2410 = vpop.f32.mrb[0].mxu0
        %2411 = vmatprep.mubr.bf16.mxu0 0
        %2412 = vmatmul.mubr.bf16.gmra.mrb[0].mxu0 %v2286
        %v2413 = vpop.f32.mrb[0].mxu0
        %v2414 = vadd.f32 %v2313, %v2413
        %v2415 = vpop.f32.mrb[0].mxu0
        %v2416 = vpop.f32.mrb[0].mxu0
        %v2417 = vadd.f32 %v2313, %v2416
        %v2418 = vpop.f32.mrb[0].mxu0
        %2419 = vmatprep.mubr.bf16.mxu0 0
        %2420 = vmatmul.mubr.bf16.gmra.mrb[0].mxu0 %v2287
        %v2421 = vpop.f32.mrb[0].mxu0
        %v2422 = vadd.f32 %v2313, %v2421
        %v2423 = vpop.f32.mrb[0].mxu0
        %v2424 = vpop.f32.mrb[0].mxu0
        %v2425 = vadd.f32 %v2313, %v2424
        %v2426 = vpop.f32.mrb[0].mxu0
        %2427 = vmatprep.mubr.bf16.mxu0 0
        %2428 = vmatmul.mubr.bf16.gmra.mrb[0].mxu0 %v2288
        %v2429 = vpop.f32.mrb[0].mxu0
        %v2430 = vadd.f32 %v2313, %v2429
        %v2431 = vpop.f32.mrb[0].mxu0
        %v2432 = vpop.f32.mrb[0].mxu0
        %v2433 = vadd.f32 %v2313, %v2432
        %v2434 = vpop.f32.mrb[0].mxu0
        %2435 = vmatprep.mubr.bf16.mxu0 0
        %2436 = vmatmul.mubr.bf16.gmra.mrb[0].mxu0 %v2289
        %v2437 = vpop.f32.mrb[0].mxu0
        %v2438 = vadd.f32 %v2313, %v2437
        %v2439 = vpop.f32.mrb[0].mxu0
        %v2440 = vpop.f32.mrb[0].mxu0
        %v2441 = vadd.f32 %v2313, %v2440
        %v2442 = vpop.f32.mrb[0].mxu0
        %2443 = vmatprep.mubr.bf16.mxu0 0
        %2444 = vmatmul.mubr.bf16.gmra.mrb[0].mxu0 %v2290
        %v2445 = vpop.f32.mrb[0].mxu0
        %v2446 = vadd.f32 %v2313, %v2445
        %v2447 = vpop.f32.mrb[0].mxu0
        %v2448 = vpop.f32.mrb[0].mxu0
        %v2449 = vadd.f32 %v2313, %v2448
        %v2450 = vpop.f32.mrb[0].mxu0
        %2451 = vmatprep.mubr.bf16.mxu0 0
        %2452 = vmatmul.mubr.bf16.gmra.mrb[0].mxu0 %v2291
        %v2453 = vpop.f32.mrb[0].mxu0
        %v2454 = vadd.f32 %v2313, %v2453
        %v2455 = vpop.f32.mrb[0].mxu0
        %v2456 = vpop.f32.mrb[0].mxu0
        %v2457 = vadd.f32 %v2313, %v2456
        %v2458 = vpop.f32.mrb[0].mxu0
        %2459 = vdwg.mxu0
        %v2460 = vpack.c.bf16 %v2401, %v2398
        %v2461 = vpack.c.bf16 %v2409, %v2406
        %v2462 = vpack.c.bf16 %v2417, %v2414
        %v2463 = vpack.c.bf16 %v2425, %v2422
        %v2464 = vpack.c.bf16 %v2433, %v2430
        %v2465 = vpack.c.bf16 %v2441, %v2438
        %v2466 = vpack.c.bf16 %v2449, %v2446
        %v2467 = vpack.c.bf16 %v2457, %v2454
        %v2468 = vld [vmem:[#allocation11] sm:$0xf]
        %v2469 = vld [vmem:[#allocation11 + $0x4] sm:$0xf]
        %v2470 = vld [vmem:[#allocation11 + $0x8] sm:$0xf]
        %v2471 = vld [vmem:[#allocation11 + $0xc] sm:$0xf]
        %v2472 = vld [vmem:[#allocation11 + $0x10] sm:$0xf]
        %v2473 = vld [vmem:[#allocation11 + $0x14] sm:$0xf]
        %v2474 = vld [vmem:[#allocation11 + $0x18] sm:$0xf]
        %v2475 = vld [vmem:[#allocation11 + $0x1c] sm:$0xf]
        %v2476 = vld [vmem:[#allocation11 + $0x20] sm:$0xf]
        %v2477 = vld [vmem:[#allocation11 + $0x24] sm:$0xf]
        %v2478 = vld [vmem:[#allocation11 + $0x28] sm:$0xf]
        %v2479 = vld [vmem:[#allocation11 + $0x2c] sm:$0xf]
        %v2480 = vld [vmem:[#allocation11 + $0x30] sm:$0xf]
        %v2481 = vld [vmem:[#allocation11 + $0x34] sm:$0xf]
        %v2482 = vld [vmem:[#allocation11 + $0x38] sm:$0xf]
        %v2483 = vld [vmem:[#allocation11 + $0x3c] sm:$0xf]
        %v2484 = vld [vmem:[%s10] sm:$0x1]
        %v2486 = vlaneseq
        %v2487 = vshrl.u32 %v2486, 7
        %v2488 = vsub.s32 0, %v2487
        %v2489 = vrot.slane %v2484, %v2488
        %v2507 = vunpack.c.l.b16 %v2468
        %v2508 = vunpack.c.l.b16 %v2469
        %v2509 = vunpack.c.l.b16 %v2470
        %v2510 = vunpack.c.l.b16 %v2471
        %v2511 = vunpack.c.l.b16 %v2472
        %v2512 = vunpack.c.l.b16 %v2473
        %v2513 = vunpack.c.l.b16 %v2474
        %v2514 = vunpack.c.l.b16 %v2475
        %v2515 = vunpack.c.l.b16 %v2476
        %v2516 = vunpack.c.l.b16 %v2477
        %v2517 = vunpack.c.l.b16 %v2478
        %v2518 = vunpack.c.l.b16 %v2479
        %v2519 = vunpack.c.l.b16 %v2480
        %v2520 = vunpack.c.l.b16 %v2481
        %v2521 = vunpack.c.l.b16 %v2482
        %v2522 = vunpack.c.l.b16 %v2483
        %v2523 = vpack.c.b16 %v2508, %v2507
        %v2524 = vpack.c.b16 %v2510, %v2509
        %v2525 = vpack.c.b16 %v2512, %v2511
        %v2526 = vpack.c.b16 %v2514, %v2513
        %v2527 = vpack.c.b16 %v2516, %v2515
        %v2528 = vpack.c.b16 %v2518, %v2517
        %v2529 = vpack.c.b16 %v2520, %v2519
        %v2530 = vpack.c.b16 %v2522, %v2521
        %2539 = vmatprep.subr.bf16.mxu0 0
        %2540 = vmatpush1.bf16.msra.mxu0 %v2523
        %2541 = vmatprep.subr.bf16.mxu0 0
        %2542 = vmatpush1.bf16.msra.mxu0 %v2524
        %2543 = vmatprep.subr.bf16.mxu0 0
        %2544 = vmatpush1.bf16.msra.mxu0 %v2525
        %2545 = vmatprep.subr.bf16.mxu0 0
        %2546 = vmatpush1.bf16.msra.mxu0 %v2526
        %2547 = vmatprep.subr.bf16.mxu0 0
        %2548 = vmatpush1.bf16.msra.mxu0 %v2527
        %2549 = vmatprep.subr.bf16.mxu0 0
        %2550 = vmatpush1.bf16.msra.mxu0 %v2528
        %2551 = vmatprep.subr.bf16.mxu0 0
        %2552 = vmatpush1.bf16.msra.mxu0 %v2529
        %2553 = vmatprep.subr.bf16.mxu0 0
        %2554 = vmatpush1.bf16.msra.mxu0 %v2530
        %2555 = vmatprep.subr.bf16.mxu0 0
        %2556 = vmatpush1.bf16.msra.mxu0 0
        %2557 = vmatprep.subr.bf16.mxu0 0
        %2558 = vmatpush1.bf16.msra.mxu0 0
        %2559 = vmatprep.subr.bf16.mxu0 0
        %2560 = vmatpush1.bf16.msra.mxu0 0
        %2561 = vmatprep.subr.bf16.mxu0 0
        %2562 = vmatpush1.bf16.msra.mxu0 0
        %2563 = vmatprep.subr.bf16.mxu0 0
        %2564 = vmatpush1.bf16.msra.mxu0 0
        %2565 = vmatprep.subr.bf16.mxu0 0
        %2566 = vmatpush1.bf16.msra.mxu0 0
        %2567 = vmatprep.subr.bf16.mxu0 0
        %2568 = vmatpush1.bf16.msra.mxu0 0
        %2569 = vmatprep.subr.bf16.mxu0 0
        %2570 = vmatpush1.bf16.msra.mxu0 0
        %2571 = vmatprep.mubr.bf16.mxu0 0
        %2572 = vmatmul.mubr.bf16.gmra.mrb[0].mxu0 %v2460
        %v2573 = vpop.f32.mrb[0].mxu0
        %v2574 = vadd.f32 %v2489, %v2573
        %v2575 = vpop.f32.mrb[0].mxu0
        %v2576 = vpop.f32.mrb[0].mxu0
        %v2577 = vadd.f32 %v2489, %v2576
        %v2578 = vpop.f32.mrb[0].mxu0
        %2579 = vmatprep.mubr.bf16.mxu0 0
        %2580 = vmatmul.mubr.bf16.gmra.mrb[0].mxu0 %v2461
        %v2581 = vpop.f32.mrb[0].mxu0
        %v2582 = vadd.f32 %v2489, %v2581
        %v2583 = vpop.f32.mrb[0].mxu0
        %v2584 = vpop.f32.mrb[0].mxu0
        %v2585 = vadd.f32 %v2489, %v2584
        %v2586 = vpop.f32.mrb[0].mxu0
        %2587 = vmatprep.mubr.bf16.mxu0 0
        %2588 = vmatmul.mubr.bf16.gmra.mrb[0].mxu0 %v2462
        %v2589 = vpop.f32.mrb[0].mxu0
        %v2590 = vadd.f32 %v2489, %v2589
        %v2591 = vpop.f32.mrb[0].mxu0
        %v2592 = vpop.f32.mrb[0].mxu0
        %v2593 = vadd.f32 %v2489, %v2592
        %v2594 = vpop.f32.mrb[0].mxu0
        %2595 = vmatprep.mubr.bf16.mxu0 0
        %2596 = vmatmul.mubr.bf16.gmra.mrb[0].mxu0 %v2463
        %v2597 = vpop.f32.mrb[0].mxu0
        %v2598 = vadd.f32 %v2489, %v2597
        %v2599 = vpop.f32.mrb[0].mxu0
        %v2600 = vpop.f32.mrb[0].mxu0
        %v2601 = vadd.f32 %v2489, %v2600
        %v2602 = vpop.f32.mrb[0].mxu0
        %2603 = vmatprep.mubr.bf16.mxu0 0
        %2604 = vmatmul.mubr.bf16.gmra.mrb[0].mxu0 %v2464
        %v2605 = vpop.f32.mrb[0].mxu0
        %v2606 = vadd.f32 %v2489, %v2605
        %v2607 = vpop.f32.mrb[0].mxu0
        %v2608 = vpop.f32.mrb[0].mxu0
        %v2609 = vadd.f32 %v2489, %v2608
        %v2610 = vpop.f32.mrb[0].mxu0
        %2611 = vmatprep.mubr.bf16.mxu0 0
        %2612 = vmatmul.mubr.bf16.gmra.mrb[0].mxu0 %v2465
        %v2613 = vpop.f32.mrb[0].mxu0
        %v2614 = vadd.f32 %v2489, %v2613
        %v2615 = vpop.f32.mrb[0].mxu0
        %v2616 = vpop.f32.mrb[0].mxu0
        %v2617 = vadd.f32 %v2489, %v2616
        %v2618 = vpop.f32.mrb[0].mxu0
        %2619 = vmatprep.mubr.bf16.mxu0 0
        %2620 = vmatmul.mubr.bf16.gmra.mrb[0].mxu0 %v2466
        %v2621 = vpop.f32.mrb[0].mxu0
        %v2622 = vadd.f32 %v2489, %v2621
        %v2623 = vpop.f32.mrb[0].mxu0
        %v2624 = vpop.f32.mrb[0].mxu0
        %v2625 = vadd.f32 %v2489, %v2624
        %v2626 = vpop.f32.mrb[0].mxu0
        %2627 = vmatprep.mubr.bf16.mxu0 0
        %2628 = vmatmul.mubr.bf16.gmra.mrb[0].mxu0 %v2467
        %v2629 = vpop.f32.mrb[0].mxu0
        %v2630 = vadd.f32 %v2489, %v2629
        %v2631 = vpop.f32.mrb[0].mxu0
        %v2632 = vpop.f32.mrb[0].mxu0
        %v2633 = vadd.f32 %v2489, %v2632
        %v2634 = vpop.f32.mrb[0].mxu0
        %2635 = vdwg.mxu0
        %v2636 = vadd.f32 %v2574, %v1719
        %v2637 = vadd.f32 %v2577, %v1722
        %v2638 = vadd.f32 %v2582, %v1727
        %v2639 = vadd.f32 %v2585, %v1730
        %v2640 = vadd.f32 %v2590, %v1735
        %v2641 = vadd.f32 %v2593, %v1738
        %v2642 = vadd.f32 %v2598, %v1743
        %v2643 = vadd.f32 %v2601, %v1746
        %v2644 = vadd.f32 %v2606, %v1751
        %v2645 = vadd.f32 %v2609, %v1754
        %v2646 = vadd.f32 %v2614, %v1759
        %v2647 = vadd.f32 %v2617, %v1762
        %v2648 = vadd.f32 %v2622, %v1767
        %v2649 = vadd.f32 %v2625, %v1770
        %v2650 = vadd.f32 %v2630, %v1775
        %v2651 = vadd.f32 %v2633, %v1778
        %v2652 = vtanh.pop %v2636
        %v2653 = vtanh.pop %v2637
        %v2654 = vtanh.pop %v2638
        %v2655 = vtanh.pop %v2639
        %v2656 = vtanh.pop %v2640
        %v2657 = vtanh.pop %v2641
        %v2658 = vtanh.pop %v2642
        %v2659 = vtanh.pop %v2643
        %v2660 = vtanh.pop %v2644
        %v2661 = vtanh.pop %v2645
        %v2662 = vtanh.pop %v2646
        %v2663 = vtanh.pop %v2647
        %v2664 = vtanh.pop %v2648
        %v2665 = vtanh.pop %v2649
        %v2666 = vtanh.pop %v2650
        %v2667 = vtanh.pop %v2651
        %v2668 = vxor.u32 %v2636, 2147483648
        %v2669 = vxor.u32 %v2637, 2147483648
        %v2670 = vxor.u32 %v2638, 2147483648
        %v2671 = vxor.u32 %v2639, 2147483648
        %v2672 = vxor.u32 %v2640, 2147483648
        %v2673 = vxor.u32 %v2641, 2147483648
        %v2674 = vxor.u32 %v2642, 2147483648
        %v2675 = vxor.u32 %v2643, 2147483648
        %v2676 = vxor.u32 %v2644, 2147483648
        %v2677 = vxor.u32 %v2645, 2147483648
        %v2678 = vxor.u32 %v2646, 2147483648
        %v2679 = vxor.u32 %v2647, 2147483648
        %v2680 = vxor.u32 %v2648, 2147483648
        %v2681 = vxor.u32 %v2649, 2147483648
        %v2682 = vxor.u32 %v2650, 2147483648
        %v2683 = vxor.u32 %v2651, 2147483648
        %v2684 = vmul.f32 %v2668, 1.442695
        %v2685 = vpow.pop %v2684
        %v2686 = vmul.f32 %v2669, 1.442695
        %v2687 = vpow.pop %v2686
        %v2688 = vmul.f32 %v2670, 1.442695
        %v2689 = vpow.pop %v2688
        %v2690 = vmul.f32 %v2671, 1.442695
        %v2691 = vpow.pop %v2690
        %v2692 = vmul.f32 %v2672, 1.442695
        %v2693 = vpow.pop %v2692
        %v2694 = vmul.f32 %v2673, 1.442695
        %v2695 = vpow.pop %v2694
        %v2696 = vmul.f32 %v2674, 1.442695
        %v2697 = vpow.pop %v2696
        %v2698 = vmul.f32 %v2675, 1.442695
        %v2699 = vpow.pop %v2698
        %v2700 = vmul.f32 %v2676, 1.442695
        %v2701 = vpow.pop %v2700
        %v2702 = vmul.f32 %v2677, 1.442695
        %v2703 = vpow.pop %v2702
        %v2704 = vmul.f32 %v2678, 1.442695
        %v2705 = vpow.pop %v2704
        %v2706 = vmul.f32 %v2679, 1.442695
        %v2707 = vpow.pop %v2706
        %v2708 = vmul.f32 %v2680, 1.442695
        %v2709 = vpow.pop %v2708
        %v2710 = vmul.f32 %v2681, 1.442695
        %v2711 = vpow.pop %v2710
        %v2712 = vmul.f32 %v2682, 1.442695
        %v2713 = vpow.pop %v2712
        %v2714 = vmul.f32 %v2683, 1.442695
        %v2715 = vpow.pop %v2714
        %v2716 = vadd.f32 %v2685, 1.0
        %v2717 = vadd.f32 %v2687, 1.0
        %v2718 = vadd.f32 %v2689, 1.0
        %v2719 = vadd.f32 %v2691, 1.0
        %v2720 = vadd.f32 %v2693, 1.0
        %v2721 = vadd.f32 %v2695, 1.0
        %v2722 = vadd.f32 %v2697, 1.0
        %v2723 = vadd.f32 %v2699, 1.0
        %v2724 = vadd.f32 %v2701, 1.0
        %v2725 = vadd.f32 %v2703, 1.0
        %v2726 = vadd.f32 %v2705, 1.0
        %v2727 = vadd.f32 %v2707, 1.0
        %v2728 = vadd.f32 %v2709, 1.0
        %v2729 = vadd.f32 %v2711, 1.0
        %v2730 = vadd.f32 %v2713, 1.0
        %v2731 = vadd.f32 %v2715, 1.0
        %v2732 = vrcp.pop %v2716
        %v2733 = vmul.f32 1.0, %v2732
        %v2734 = vrcp.pop %v2717
        %v2735 = vmul.f32 1.0, %v2734
        %v2736 = vrcp.pop %v2718
        %v2737 = vmul.f32 1.0, %v2736
        %v2738 = vrcp.pop %v2719
        %v2739 = vmul.f32 1.0, %v2738
        %v2740 = vrcp.pop %v2720
        %v2741 = vmul.f32 1.0, %v2740
        %v2742 = vrcp.pop %v2721
        %v2743 = vmul.f32 1.0, %v2742
        %v2744 = vrcp.pop %v2722
        %v2745 = vmul.f32 1.0, %v2744
        %v2746 = vrcp.pop %v2723
        %v2747 = vmul.f32 1.0, %v2746
        %v2748 = vrcp.pop %v2724
        %v2749 = vmul.f32 1.0, %v2748
        %v2750 = vrcp.pop %v2725
        %v2751 = vmul.f32 1.0, %v2750
        %v2752 = vrcp.pop %v2726
        %v2753 = vmul.f32 1.0, %v2752
        %v2754 = vrcp.pop %v2727
        %v2755 = vmul.f32 1.0, %v2754
        %v2756 = vrcp.pop %v2728
        %v2757 = vmul.f32 1.0, %v2756
        %v2758 = vrcp.pop %v2729
        %v2759 = vmul.f32 1.0, %v2758
        %v2760 = vrcp.pop %v2730
        %v2761 = vmul.f32 1.0, %v2760
        %v2762 = vrcp.pop %v2731
        %v2763 = vmul.f32 1.0, %v2762
        %2780 = vrot.lane.b32.xlu0 %v2733, 64
        %v2781 = vpop.permute.xlu0 %2780
        %2782 = vrot.lane.b32.xlu0 %v2735, 64
        %v2783 = vpop.permute.xlu0 %2782
        %2784 = vrot.lane.b32.xlu0 %v2737, 64
        %v2785 = vpop.permute.xlu0 %2784
        %2786 = vrot.lane.b32.xlu0 %v2739, 64
        %v2787 = vpop.permute.xlu0 %2786
        %2788 = vrot.lane.b32.xlu0 %v2741, 64
        %v2789 = vpop.permute.xlu0 %2788
        %2790 = vrot.lane.b32.xlu0 %v2743, 64
        %v2791 = vpop.permute.xlu0 %2790
        %2792 = vrot.lane.b32.xlu0 %v2745, 64
        %v2793 = vpop.permute.xlu0 %2792
        %2794 = vrot.lane.b32.xlu0 %v2747, 64
        %v2795 = vpop.permute.xlu0 %2794
        %2796 = vrot.lane.b32.xlu0 %v2749, 64
        %v2797 = vpop.permute.xlu0 %2796
        %2798 = vrot.lane.b32.xlu0 %v2751, 64
        %v2799 = vpop.permute.xlu0 %2798
        %2800 = vrot.lane.b32.xlu0 %v2753, 64
        %v2801 = vpop.permute.xlu0 %2800
        %2802 = vrot.lane.b32.xlu0 %v2755, 64
        %v2803 = vpop.permute.xlu0 %2802
        %2804 = vrot.lane.b32.xlu0 %v2757, 64
        %v2805 = vpop.permute.xlu0 %2804
        %2806 = vrot.lane.b32.xlu0 %v2759, 64
        %v2807 = vpop.permute.xlu0 %2806
        %2808 = vrot.lane.b32.xlu0 %v2761, 64
        %v2809 = vpop.permute.xlu0 %2808
        %2810 = vrot.lane.b32.xlu0 %v2763, 64
        %v2811 = vpop.permute.xlu0 %2810
        %v2828 = vmul.f32 %v2652, %v2781
        %v2829 = vmul.f32 %v2653, %v2783
        %v2830 = vmul.f32 %v2654, %v2785
        %v2831 = vmul.f32 %v2655, %v2787
        %v2832 = vmul.f32 %v2656, %v2789
        %v2833 = vmul.f32 %v2657, %v2791
        %v2834 = vmul.f32 %v2658, %v2793
        %v2835 = vmul.f32 %v2659, %v2795
        %v2836 = vmul.f32 %v2660, %v2797
        %v2837 = vmul.f32 %v2661, %v2799
        %v2838 = vmul.f32 %v2662, %v2801
        %v2839 = vmul.f32 %v2663, %v2803
        %v2840 = vmul.f32 %v2664, %v2805
        %v2841 = vmul.f32 %v2665, %v2807
        %v2842 = vmul.f32 %v2666, %v2809
        %v2843 = vmul.f32 %v2667, %v2811
        %v2844 = vpack.c.bf16 %v2829, %v2828
        %v2845 = vpack.c.bf16 %v2831, %v2830
        %v2846 = vpack.c.bf16 %v2833, %v2832
        %v2847 = vpack.c.bf16 %v2835, %v2834
        %v2848 = vpack.c.bf16 %v2837, %v2836
        %v2849 = vpack.c.bf16 %v2839, %v2838
        %v2850 = vpack.c.bf16 %v2841, %v2840
        %v2851 = vpack.c.bf16 %v2843, %v2842
        %v2852 = vld [vmem:[#allocation13] sm:$0xff]
        %v2853 = vld [vmem:[#allocation13 + $0x8] sm:$0xff]
        %v2854 = vld [vmem:[#allocation13 + $0x10] sm:$0xff]
        %v2855 = vld [vmem:[#allocation13 + $0x18] sm:$0xff]
        %v2856 = vld [vmem:[#allocation13 + $0x20] sm:$0xff]
        %v2857 = vld [vmem:[#allocation13 + $0x28] sm:$0xff]
        %v2858 = vld [vmem:[#allocation13 + $0x30] sm:$0xff]
        %v2859 = vld [vmem:[#allocation13 + $0x38] sm:$0xff]
        %v2860 = vld [vmem:[%s12] sm:$0x3]
        %v2862 = vlaneseq
        %v2863 = vshrl.u32 %v2862, 7
        %v2864 = vsub.s32 0, %v2863
        %v2865 = vrot.slane %v2860, %v2864
        %v2866 = vlaneseq
        %v2867 = vshrl.u32 %v2866, 7
        %v2868 = vsub.s32 1, %v2867
        %v2869 = vrot.slane %v2860, %v2868
        %v2880 = vunpack.c.l.b16 %v2852
        %v2881 = vunpack.c.h.b16 %v2852
        %v2882 = vunpack.c.l.b16 %v2853
        %v2883 = vunpack.c.h.b16 %v2853
        %v2884 = vunpack.c.l.b16 %v2854
        %v2885 = vunpack.c.h.b16 %v2854
        %v2886 = vunpack.c.l.b16 %v2855
        %v2887 = vunpack.c.h.b16 %v2855
        %v2888 = vunpack.c.l.b16 %v2856
        %v2889 = vunpack.c.h.b16 %v2856
        %v2890 = vunpack.c.l.b16 %v2857
        %v2891 = vunpack.c.h.b16 %v2857
        %v2892 = vunpack.c.l.b16 %v2858
        %v2893 = vunpack.c.h.b16 %v2858
        %v2894 = vunpack.c.l.b16 %v2859
        %v2895 = vunpack.c.h.b16 %v2859
        %v2896 = vpack.c.b16 %v2882, %v2880
        %v2897 = vpack.c.b16 %v2883, %v2881
        %v2898 = vpack.c.b16 %v2886, %v2884
        %v2899 = vpack.c.b16 %v2887, %v2885
        %v2900 = vpack.c.b16 %v2890, %v2888
        %v2901 = vpack.c.b16 %v2891, %v2889
        %v2902 = vpack.c.b16 %v2894, %v2892
        %v2903 = vpack.c.b16 %v2895, %v2893
        %v2913 = vsel %vm1337, %v2844, 0
        %v2916 = vsel %vm1337, %v2845, 0
        %v2919 = vsel %vm1337, %v2846, 0
        %v2922 = vsel %vm1337, %v2847, 0
        %v2925 = vsel %vm1337, %v2848, 0
        %v2928 = vsel %vm1337, %v2849, 0
        %v2931 = vsel %vm1337, %v2850, 0
        %v2934 = vsel %vm1337, %v2851, 0
        %2936 = vmatprep.subr.bf16.mxu0 %v2897
        %2937 = vmatpush1.bf16.msra.mxu0 %v2896
        %2938 = vmatprep.subr.bf16.mxu0 %v2899
        %2939 = vmatpush1.bf16.msra.mxu0 %v2898
        %2940 = vmatprep.subr.bf16.mxu0 %v2901
        %2941 = vmatpush1.bf16.msra.mxu0 %v2900
        %2942 = vmatprep.subr.bf16.mxu0 %v2903
        %2943 = vmatpush1.bf16.msra.mxu0 %v2902
        %2944 = vmatprep.subr.bf16.mxu0 0
        %2945 = vmatpush1.bf16.msra.mxu0 0
        %2946 = vmatprep.subr.bf16.mxu0 0
        %2947 = vmatpush1.bf16.msra.mxu0 0
        %2948 = vmatprep.subr.bf16.mxu0 0
        %2949 = vmatpush1.bf16.msra.mxu0 0
        %2950 = vmatprep.subr.bf16.mxu0 0
        %2951 = vmatpush1.bf16.msra.mxu0 0
        %2952 = vmatprep.subr.bf16.mxu0 0
        %2953 = vmatpush1.bf16.msra.mxu0 0
        %2954 = vmatprep.subr.bf16.mxu0 0
        %2955 = vmatpush1.bf16.msra.mxu0 0
        %2956 = vmatprep.subr.bf16.mxu0 0
        %2957 = vmatpush1.bf16.msra.mxu0 0
        %2958 = vmatprep.subr.bf16.mxu0 0
        %2959 = vmatpush1.bf16.msra.mxu0 0
        %2960 = vmatprep.subr.bf16.mxu0 0
        %2961 = vmatpush1.bf16.msra.mxu0 0
        %2962 = vmatprep.subr.bf16.mxu0 0
        %2963 = vmatpush1.bf16.msra.mxu0 0
        %2964 = vmatprep.subr.bf16.mxu0 0
        %2965 = vmatpush1.bf16.msra.mxu0 0
        %2966 = vmatprep.subr.bf16.mxu0 0
        %2967 = vmatpush1.bf16.msra.mxu0 0
        %2968 = vmatprep.mubr.bf16.mxu0 0
        %2969 = vmatmul.mubr.bf16.gmra.mrb[0].mxu0 %v2913
        %v2970 = vpop.f32.mrb[0].mxu0
        %v2971 = vadd.f32 %v2865, %v2970
        %v2972 = vpop.f32.mrb[0].mxu0
        %v2973 = vadd.f32 %v2869, %v2972
        %v2974 = vpop.f32.mrb[0].mxu0
        %v2975 = vadd.f32 %v2865, %v2974
        %v2976 = vpop.f32.mrb[0].mxu0
        %v2977 = vadd.f32 %v2869, %v2976
        %2978 = vmatprep.mubr.bf16.mxu0 0
        %2979 = vmatmul.mubr.bf16.gmra.mrb[0].mxu0 %v2916
        %v2980 = vpop.f32.mrb[0].mxu0
        %v2981 = vadd.f32 %v2865, %v2980
        %v2982 = vpop.f32.mrb[0].mxu0
        %v2983 = vadd.f32 %v2869, %v2982
        %v2984 = vpop.f32.mrb[0].mxu0
        %v2985 = vadd.f32 %v2865, %v2984
        %v2986 = vpop.f32.mrb[0].mxu0
        %v2987 = vadd.f32 %v2869, %v2986
        %2988 = vmatprep.mubr.bf16.mxu0 0
        %2989 = vmatmul.mubr.bf16.gmra.mrb[0].mxu0 %v2919
        %v2990 = vpop.f32.mrb[0].mxu0
        %v2991 = vadd.f32 %v2865, %v2990
        %v2992 = vpop.f32.mrb[0].mxu0
        %v2993 = vadd.f32 %v2869, %v2992
        %v2994 = vpop.f32.mrb[0].mxu0
        %v2995 = vadd.f32 %v2865, %v2994
        %v2996 = vpop.f32.mrb[0].mxu0
        %v2997 = vadd.f32 %v2869, %v2996
        %2998 = vmatprep.mubr.bf16.mxu0 0
        %2999 = vmatmul.mubr.bf16.gmra.mrb[0].mxu0 %v2922
        %v3000 = vpop.f32.mrb[0].mxu0
        %v3001 = vadd.f32 %v2865, %v3000
        %v3002 = vpop.f32.mrb[0].mxu0
        %v3003 = vadd.f32 %v2869, %v3002
        %v3004 = vpop.f32.mrb[0].mxu0
        %v3005 = vadd.f32 %v2865, %v3004
        %v3006 = vpop.f32.mrb[0].mxu0
        %v3007 = vadd.f32 %v2869, %v3006
        %3008 = vmatprep.mubr.bf16.mxu0 0
        %3009 = vmatmul.mubr.bf16.gmra.mrb[0].mxu0 %v2925
        %v3010 = vpop.f32.mrb[0].mxu0
        %v3011 = vadd.f32 %v2865, %v3010
        %v3012 = vpop.f32.mrb[0].mxu0
        %v3013 = vadd.f32 %v2869, %v3012
        %v3014 = vpop.f32.mrb[0].mxu0
        %v3015 = vadd.f32 %v2865, %v3014
        %v3016 = vpop.f32.mrb[0].mxu0
        %v3017 = vadd.f32 %v2869, %v3016
        %3018 = vmatprep.mubr.bf16.mxu0 0
        %3019 = vmatmul.mubr.bf16.gmra.mrb[0].mxu0 %v2928
        %v3020 = vpop.f32.mrb[0].mxu0
        %v3021 = vadd.f32 %v2865, %v3020
        %v3022 = vpop.f32.mrb[0].mxu0
        %v3023 = vadd.f32 %v2869, %v3022
        %v3024 = vpop.f32.mrb[0].mxu0
        %v3025 = vadd.f32 %v2865, %v3024
        %v3026 = vpop.f32.mrb[0].mxu0
        %v3027 = vadd.f32 %v2869, %v3026
        %3028 = vmatprep.mubr.bf16.mxu0 0
        %3029 = vmatmul.mubr.bf16.gmra.mrb[0].mxu0 %v2931
        %v3030 = vpop.f32.mrb[0].mxu0
        %v3031 = vadd.f32 %v2865, %v3030
        %v3032 = vpop.f32.mrb[0].mxu0
        %v3033 = vadd.f32 %v2869, %v3032
        %v3034 = vpop.f32.mrb[0].mxu0
        %v3035 = vadd.f32 %v2865, %v3034
        %v3036 = vpop.f32.mrb[0].mxu0
        %v3037 = vadd.f32 %v2869, %v3036
        %3038 = vmatprep.mubr.bf16.mxu0 0
        %3039 = vmatmul.mubr.bf16.gmra.mrb[0].mxu0 %v2934
        %v3040 = vpop.f32.mrb[0].mxu0
        %v3041 = vadd.f32 %v2865, %v3040
        %v3042 = vpop.f32.mrb[0].mxu0
        %v3043 = vadd.f32 %v2869, %v3042
        %v3044 = vpop.f32.mrb[0].mxu0
        %v3045 = vadd.f32 %v2865, %v3044
        %v3046 = vpop.f32.mrb[0].mxu0
        %v3047 = vadd.f32 %v2869, %v3046
        %3048 = vdwg.mxu0
        %3049 = vst [vmem:[%s577] sm:$0xff] %v2971
        %3050 = vst [vmem:[%s577 + $0x8] sm:$0xff] %v2973
        %3051 = vst [vmem:[%s577 + $0x10] sm:$0xff] %v2975
        %3052 = vst [vmem:[%s577 + $0x18] sm:$0xff] %v2977
        %3053 = vst [vmem:[%s577 + $0x20] sm:$0xff] %v2981
        %3054 = vst [vmem:[%s577 + $0x28] sm:$0xff] %v2983
        %3055 = vst [vmem:[%s577 + $0x30] sm:$0xff] %v2985
        %3056 = vst [vmem:[%s577 + $0x38] sm:$0xff] %v2987
        %3057 = vst [vmem:[%s577 + $0x40] sm:$0xff] %v2991
        %3058 = vst [vmem:[%s577 + $0x48] sm:$0xff] %v2993
        %3059 = vst [vmem:[%s577 + $0x50] sm:$0xff] %v2995
        %3060 = vst [vmem:[%s577 + $0x58] sm:$0xff] %v2997
        %3061 = vst [vmem:[%s577 + $0x60] sm:$0xff] %v3001
        %3062 = vst [vmem:[%s577 + $0x68] sm:$0xff] %v3003
        %3063 = vst [vmem:[%s577 + $0x70] sm:$0xff] %v3005
        %3064 = vst [vmem:[%s577 + $0x78] sm:$0xff] %v3007
        %3065 = vst [vmem:[%s577 + $0x80] sm:$0xff] %v3011
        %3066 = vst [vmem:[%s577 + $0x88] sm:$0xff] %v3013
        %3067 = vst [vmem:[%s577 + $0x90] sm:$0xff] %v3015
        %3068 = vst [vmem:[%s577 + $0x98] sm:$0xff] %v3017
        %3069 = vst [vmem:[%s577 + $0xa0] sm:$0xff] %v3021
        %3070 = vst [vmem:[%s577 + $0xa8] sm:$0xff] %v3023
        %3071 = vst [vmem:[%s577 + $0xb0] sm:$0xff] %v3025
        %3072 = vst [vmem:[%s577 + $0xb8] sm:$0xff] %v3027
        %3073 = vst [vmem:[%s577 + $0xc0] sm:$0xff] %v3031
        %3074 = vst [vmem:[%s577 + $0xc8] sm:$0xff] %v3033
        %3075 = vst [vmem:[%s577 + $0xd0] sm:$0xff] %v3035
        %3076 = vst [vmem:[%s577 + $0xd8] sm:$0xff] %v3037
        %3077 = vst [vmem:[%s577 + $0xe0] sm:$0xff] %v3041
        %3078 = vst [vmem:[%s577 + $0xe8] sm:$0xff] %v3043
        %3079 = vst [vmem:[%s577 + $0xf0] sm:$0xff] %v3045
        %3080 = vst [vmem:[%s577 + $0xf8] sm:$0xff] %v3047
        %v3081 = vlaneseq
        %v3082 = vand.u32 %v3081, 127
        %vm3083 = vcmp.lt.s32.totalorder %v3082, 32
        %v3084 = vmax.f32 %v1397, -12.0
        %v3085 = vmax.f32 %v1400, -12.0
        %v3086 = vmax.f32 %v1405, -12.0
        %v3087 = vmax.f32 %v1408, -12.0
        %v3088 = vmax.f32 %v1413, -12.0
        %v3089 = vmax.f32 %v1416, -12.0
        %v3090 = vmax.f32 %v1421, -12.0
        %v3091 = vmax.f32 %v1424, -12.0
        %v3092 = vmax.f32 %v1429, -12.0
        %v3093 = vmax.f32 %v1432, -12.0
        %v3094 = vmax.f32 %v1437, -12.0
        %v3095 = vmax.f32 %v1440, -12.0
        %v3096 = vmax.f32 %v1445, -12.0
        %v3097 = vmax.f32 %v1448, -12.0
        %v3098 = vmax.f32 %v1453, -12.0
        %v3099 = vmax.f32 %v1456, -12.0
        %v3100 = vmin.f32 %v3084, 4.0
        %v3101 = vmin.f32 %v3085, 4.0
        %v3102 = vmin.f32 %v3086, 4.0
        %v3103 = vmin.f32 %v3087, 4.0
        %v3104 = vmin.f32 %v3088, 4.0
        %v3105 = vmin.f32 %v3089, 4.0
        %v3106 = vmin.f32 %v3090, 4.0
        %v3107 = vmin.f32 %v3091, 4.0
        %v3108 = vmin.f32 %v3092, 4.0
        %v3109 = vmin.f32 %v3093, 4.0
        %v3110 = vmin.f32 %v3094, 4.0
        %v3111 = vmin.f32 %v3095, 4.0
        %v3112 = vmin.f32 %v3096, 4.0
        %v3113 = vmin.f32 %v3097, 4.0
        %v3114 = vmin.f32 %v3098, 4.0
        %v3115 = vmin.f32 %v3099, 4.0
        %v3116 = vsel %vm3083, %v1397, %v3100
        %v3117 = vsel %vm3083, %v1400, %v3101
        %v3118 = vsel %vm3083, %v1405, %v3102
        %v3119 = vsel %vm3083, %v1408, %v3103
        %v3120 = vsel %vm3083, %v1413, %v3104
        %v3121 = vsel %vm3083, %v1416, %v3105
        %v3122 = vsel %vm3083, %v1421, %v3106
        %v3123 = vsel %vm3083, %v1424, %v3107
        %v3124 = vsel %vm3083, %v1429, %v3108
        %v3125 = vsel %vm3083, %v1432, %v3109
        %v3126 = vsel %vm3083, %v1437, %v3110
        %v3127 = vsel %vm3083, %v1440, %v3111
        %v3128 = vsel %vm3083, %v1445, %v3112
        %v3129 = vsel %vm3083, %v1448, %v3113
        %v3130 = vsel %vm3083, %v1453, %v3114
        %v3131 = vsel %vm3083, %v1456, %v3115
        %vm3132 = vcmp.ge.s32.totalorder %v3082, 32
        %vm3133 = vcmp.lt.s32.totalorder %v3082, 64
        %vm3134 = vmand %vm3132, %vm3133
        %vm3135 = vcmp.ge.s32.totalorder %v3082, 96
        %vm3136 = vmor %vm3134, %vm3135
        %v3137 = vmax.f32 %v2398, -12.0
        %v3138 = vmax.f32 %v2401, -12.0
        %v3139 = vmax.f32 %v2406, -12.0
        %v3140 = vmax.f32 %v2409, -12.0
        %v3141 = vmax.f32 %v2414, -12.0
        %v3142 = vmax.f32 %v2417, -12.0
        %v3143 = vmax.f32 %v2422, -12.0
        %v3144 = vmax.f32 %v2425, -12.0
        %v3145 = vmax.f32 %v2430, -12.0
        %v3146 = vmax.f32 %v2433, -12.0
        %v3147 = vmax.f32 %v2438, -12.0
        %v3148 = vmax.f32 %v2441, -12.0
        %v3149 = vmax.f32 %v2446, -12.0
        %v3150 = vmax.f32 %v2449, -12.0
        %v3151 = vmax.f32 %v2454, -12.0
        %v3152 = vmax.f32 %v2457, -12.0
        %v3153 = vmin.f32 %v3137, 4.0
        %v3154 = vmin.f32 %v3138, 4.0
        %v3155 = vmin.f32 %v3139, 4.0
        %v3156 = vmin.f32 %v3140, 4.0
        %v3157 = vmin.f32 %v3141, 4.0
        %v3158 = vmin.f32 %v3142, 4.0
        %v3159 = vmin.f32 %v3143, 4.0
        %v3160 = vmin.f32 %v3144, 4.0
        %v3161 = vmin.f32 %v3145, 4.0
        %v3162 = vmin.f32 %v3146, 4.0
        %v3163 = vmin.f32 %v3147, 4.0
        %v3164 = vmin.f32 %v3148, 4.0
        %v3165 = vmin.f32 %v3149, 4.0
        %v3166 = vmin.f32 %v3150, 4.0
        %v3167 = vmin.f32 %v3151, 4.0
        %v3168 = vmin.f32 %v3152, 4.0
        %v3169 = vsel %vm3136, %v3153, %v2398
        %v3170 = vsel %vm3136, %v3154, %v2401
        %v3171 = vsel %vm3136, %v3155, %v2406
        %v3172 = vsel %vm3136, %v3156, %v2409
        %v3173 = vsel %vm3136, %v3157, %v2414
        %v3174 = vsel %vm3136, %v3158, %v2417
        %v3175 = vsel %vm3136, %v3159, %v2422
        %v3176 = vsel %vm3136, %v3160, %v2425
        %v3177 = vsel %vm3136, %v3161, %v2430
        %v3178 = vsel %vm3136, %v3162, %v2433
        %v3179 = vsel %vm3136, %v3163, %v2438
        %v3180 = vsel %vm3136, %v3164, %v2441
        %v3181 = vsel %vm3136, %v3165, %v2446
        %v3182 = vsel %vm3136, %v3166, %v2449
        %v3183 = vsel %vm3136, %v3167, %v2454
        %v3184 = vsel %vm3136, %v3168, %v2457
        %3201 = vrot.lane.b32.xlu0 %v3169, 64
        %v3202 = vpop.permute.xlu0 %3201
        %3203 = vrot.lane.b32.xlu0 %v3170, 64
        %v3204 = vpop.permute.xlu0 %3203
        %3205 = vrot.lane.b32.xlu0 %v3171, 64
        %v3206 = vpop.permute.xlu0 %3205
        %3207 = vrot.lane.b32.xlu0 %v3172, 64
        %v3208 = vpop.permute.xlu0 %3207
        %3209 = vrot.lane.b32.xlu0 %v3173, 64
        %v3210 = vpop.permute.xlu0 %3209
        %3211 = vrot.lane.b32.xlu0 %v3174, 64
        %v3212 = vpop.permute.xlu0 %3211
        %3213 = vrot.lane.b32.xlu0 %v3175, 64
        %v3214 = vpop.permute.xlu0 %3213
        %3215 = vrot.lane.b32.xlu0 %v3176, 64
        %v3216 = vpop.permute.xlu0 %3215
        %3217 = vrot.lane.b32.xlu0 %v3177, 64
        %v3218 = vpop.permute.xlu0 %3217
        %3219 = vrot.lane.b32.xlu0 %v3178, 64
        %v3220 = vpop.permute.xlu0 %3219
        %3221 = vrot.lane.b32.xlu0 %v3179, 64
        %v3222 = vpop.permute.xlu0 %3221
        %3223 = vrot.lane.b32.xlu0 %v3180, 64
        %v3224 = vpop.permute.xlu0 %3223
        %3225 = vrot.lane.b32.xlu0 %v3181, 64
        %v3226 = vpop.permute.xlu0 %3225
        %3227 = vrot.lane.b32.xlu0 %v3182, 64
        %v3228 = vpop.permute.xlu0 %3227
        %3229 = vrot.lane.b32.xlu0 %v3183, 64
        %v3230 = vpop.permute.xlu0 %3229
        %3231 = vrot.lane.b32.xlu0 %v3184, 64
        %v3232 = vpop.permute.xlu0 %3231
        %v3249 = vsel %vm1337, %v3116, %v3202
        %v3250 = vsel %vm1337, %v3117, %v3204
        %v3251 = vsel %vm1337, %v3118, %v3206
        %v3252 = vsel %vm1337, %v3119, %v3208
        %v3253 = vsel %vm1337, %v3120, %v3210
        %v3254 = vsel %vm1337, %v3121, %v3212
        %v3255 = vsel %vm1337, %v3122, %v3214
        %v3256 = vsel %vm1337, %v3123, %v3216
        %v3257 = vsel %vm1337, %v3124, %v3218
        %v3258 = vsel %vm1337, %v3125, %v3220
        %v3259 = vsel %vm1337, %v3126, %v3222
        %v3260 = vsel %vm1337, %v3127, %v3224
        %v3261 = vsel %vm1337, %v3128, %v3226
        %v3262 = vsel %vm1337, %v3129, %v3228
        %v3263 = vsel %vm1337, %v3130, %v3230
        %v3264 = vsel %vm1337, %v3131, %v3232
        %v3265 = vsel %vm1337, %v3202, 0.0
        %v3266 = vsel %vm1337, %v3204, 0.0
        %v3267 = vsel %vm1337, %v3206, 0.0
        %v3268 = vsel %vm1337, %v3208, 0.0
        %v3269 = vsel %vm1337, %v3210, 0.0
        %v3270 = vsel %vm1337, %v3212, 0.0
        %v3271 = vsel %vm1337, %v3214, 0.0
        %v3272 = vsel %vm1337, %v3216, 0.0
        %v3273 = vsel %vm1337, %v3218, 0.0
        %v3274 = vsel %vm1337, %v3220, 0.0
        %v3275 = vsel %vm1337, %v3222, 0.0
        %v3276 = vsel %vm1337, %v3224, 0.0
        %v3277 = vsel %vm1337, %v3226, 0.0
        %v3278 = vsel %vm1337, %v3228, 0.0
        %v3279 = vsel %vm1337, %v3230, 0.0
        %v3280 = vsel %vm1337, %v3232, 0.0
        %3281 = vst [vmem:[%s584] sm:$0xff] %v3249
        %3282 = vst [vmem:[%s584 + $0x8] sm:$0xff] %v3265
        %3283 = vst [vmem:[%s584 + $0x10] sm:$0xff] %v3250
        %3284 = vst [vmem:[%s584 + $0x18] sm:$0xff] %v3266
        %3285 = vst [vmem:[%s584 + $0x20] sm:$0xff] %v3251
        %3286 = vst [vmem:[%s584 + $0x28] sm:$0xff] %v3267
        %3287 = vst [vmem:[%s584 + $0x30] sm:$0xff] %v3252
        %3288 = vst [vmem:[%s584 + $0x38] sm:$0xff] %v3268
        %3289 = vst [vmem:[%s584 + $0x40] sm:$0xff] %v3253
        %3290 = vst [vmem:[%s584 + $0x48] sm:$0xff] %v3269
        %3291 = vst [vmem:[%s584 + $0x50] sm:$0xff] %v3254
        %3292 = vst [vmem:[%s584 + $0x58] sm:$0xff] %v3270
        %3293 = vst [vmem:[%s584 + $0x60] sm:$0xff] %v3255
        %3294 = vst [vmem:[%s584 + $0x68] sm:$0xff] %v3271
        %3295 = vst [vmem:[%s584 + $0x70] sm:$0xff] %v3256
        %3296 = vst [vmem:[%s584 + $0x78] sm:$0xff] %v3272
        %3297 = vst [vmem:[%s584 + $0x80] sm:$0xff] %v3257
        %3298 = vst [vmem:[%s584 + $0x88] sm:$0xff] %v3273
        %3299 = vst [vmem:[%s584 + $0x90] sm:$0xff] %v3258
        %3300 = vst [vmem:[%s584 + $0x98] sm:$0xff] %v3274
        %3301 = vst [vmem:[%s584 + $0xa0] sm:$0xff] %v3259
        %3302 = vst [vmem:[%s584 + $0xa8] sm:$0xff] %v3275
        %3303 = vst [vmem:[%s584 + $0xb0] sm:$0xff] %v3260
        %3304 = vst [vmem:[%s584 + $0xb8] sm:$0xff] %v3276
        %3305 = vst [vmem:[%s584 + $0xc0] sm:$0xff] %v3261
        %3306 = vst [vmem:[%s584 + $0xc8] sm:$0xff] %v3277
        %3307 = vst [vmem:[%s584 + $0xd0] sm:$0xff] %v3262
        %3308 = vst [vmem:[%s584 + $0xd8] sm:$0xff] %v3278
        %3309 = vst [vmem:[%s584 + $0xe0] sm:$0xff] %v3263
        %3310 = vst [vmem:[%s584 + $0xe8] sm:$0xff] %v3279
        %3311 = vst [vmem:[%s584 + $0xf0] sm:$0xff] %v3264
        %3312 = vst [vmem:[%s584 + $0xf8] sm:$0xff] %v3280
        %s3313 = sand.u32 %s324, 1
        %s3314 = scalar_lea.sflag [#allocation4], %s3313
        %s3315 = sand.u32 %s324, 1
        %s3316 = smul.addr %s3315, 256
        %s3317 = scalar_lea.vmem [#allocation14], %s3316
        %s3318 = sand.u32 %s350, 1
        %s3319 = scalar_lea.sflag [#allocation16], %s3318
        %s3320 = sand.u32 %s350, 1
        %s3321 = smul.addr %s3320, 256
        %s3322 = scalar_lea.vmem [#allocation15], %s3321
        // Predicated region
        $region101: #{tpu_custom_call.1} parent=71 // pred_check
          %p3323 = pneg %p334
        $region102: #{tpu_custom_call.1} parent=71 // pred_check_branch
          %3325 = sbr.rel (%p3323) target = $region104
        $region103: #{tpu_custom_call.1} parent=71 // pred_region
          %s3326 = smul.u32 16, %s38
          %s3328 = ssub.s32 4096, 4096
          %3329 = vsyncadd %s3314, %s3328
          %s3330 = smul.addr %s3326, 2
          %s3331 = smul.addr %s3330, 128
          %s3332 = scalar_lea.hbm %s13, %s3331
          %s3333 = sshll.u32 %s3317, 4
          %s3334 = int_to_ptr.vmem [resolvable:$true] %s3333
          %3339 = dma.vmem_to_hbm [thread:$0]  %s3334, 4096, %s3332, %s3314, 256, 256, 16
        $region104: #{tpu_custom_call.1} parent=71 // pred_fallthru
          _
        // Predicated region
        $region105: #{tpu_custom_call.1} parent=71 // pred_check
          %p3340 = pneg %p360
        $region106: #{tpu_custom_call.1} parent=71 // pred_check_branch
          %3342 = sbr.rel (%p3340) target = $region108
        $region107: #{tpu_custom_call.1} parent=71 // pred_region
          %s3343 = smul.u32 16, %s38
          %s3345 = ssub.s32 4096, 4096
          %3346 = vsyncadd %s3319, %s3345
          %s3347 = smul.addr %s3343, 2
          %s3348 = smul.addr %s3347, 128
          %s3349 = scalar_lea.hbm %s14, %s3348
          %s3350 = sshll.u32 %s3322, 4
          %s3351 = int_to_ptr.vmem [resolvable:$true] %s3350
          %3356 = dma.vmem_to_hbm [thread:$0]  %s3351, 4096, %s3349, %s3319, 256, 256, 16
        $region108: #{tpu_custom_call.1} parent=71 // pred_fallthru
          _
      $region72: #{tpu_custom_call.1} parent=5 // pred_fallthru
        _
      %p3357 = scmp.le.s32.totalorder 2, %s33
      // Predicated region
      $region109: #{tpu_custom_call.1} parent=5 // pred_check
        %p3358 = pneg %p3357
      $region110: #{tpu_custom_call.1} parent=5 // pred_check_branch
        %3360 = sbr.rel (%p3358) target = $region112
      $region111: #{tpu_custom_call.1} parent=5 // pred_region
        %s3361 = ssub.s32 %s33, 2
        // Predicated region
        $region113: #{tpu_custom_call.1} parent=111 // pred_check
          %p3362 = pneg %p340
        $region114: #{tpu_custom_call.1} parent=111 // pred_check_branch
          %3364 = sbr.rel (%p3362) target = $region116
        $region115: #{tpu_custom_call.1} parent=111 // pred_region
          %s3365 = sand.u32 %s325, 1
          %s3366 = scalar_lea.sflag [#allocation4], %s3365
          %s3367 = sand.u32 %s325, 1
          %s3368 = smul.addr %s3367, 256
          %s3369 = scalar_lea.vmem [#allocation14], %s3368
          %3370 = dma.done %s3366, 4096
        $region116: #{tpu_custom_call.1} parent=111 // pred_fallthru
          _
        // Predicated region
        $region117: #{tpu_custom_call.1} parent=111 // pred_check
          %p3371 = pneg %p366
        $region118: #{tpu_custom_call.1} parent=111 // pred_check_branch
          %3373 = sbr.rel (%p3371) target = $region120
        $region119: #{tpu_custom_call.1} parent=111 // pred_region
          %s3374 = sand.u32 %s351, 1
          %s3375 = scalar_lea.sflag [#allocation16], %s3374
          %s3376 = sand.u32 %s351, 1
          %s3377 = smul.addr %s3376, 256
          %s3378 = scalar_lea.vmem [#allocation15], %s3377
          %3379 = dma.done %s3375, 4096
        $region120: #{tpu_custom_call.1} parent=111 // pred_fallthru
          _
      $region112: #{tpu_custom_call.1} parent=5 // pred_fallthru
        _
    $region6: #{tpu_custom_call.1} parent=1 // loop_footer
      %s37 = sadd.s32 1, %s33
    $region7: #{tpu_custom_call.1} parent=1 // loop_footer_branch
      %32 = sbr.rel target = $region3
    $region8: #{tpu_custom_call.1} parent=1 // loop_exit
      _
    %3380 = vsyncpa [#allocation3], 1
    %s3381 = scalar_lea.sflag [#allocation3], 1
    %3382 = vsyncpa %s3381, 1
    %3383 = vsyncpa [#allocation6], 1
    %3384 = vsyncpa [#allocation9], 1
    %3385 = vsyncpa [#allocation12], 1
    %3386 = vsyncpa [#allocation4], 1
    %s3387 = scalar_lea.sflag [#allocation4], 1
    %3388 = vsyncpa %s3387, 1
    %3389 = vsyncpa [#allocation16], 1
    %s3390 = scalar_lea.sflag [#allocation16], 1
    %3391 = vsyncpa %s3390, 1

</llo_original>
